<compile_context>
chip_gen: v5e
topology: v5e:2x2
jax: 0.10.0
libtpu: 0.0.40
codegen_flags: <defaults>
</compile_context>

<pallas_src>
import functools

import jax
import jax.numpy as jnp
import numpy as np
from jax import lax
from jax.experimental import pallas as pl
from jax.experimental.pallas import tpu as pltpu


def lstm_attention_kernel(
    g0_ref,         # (Tc*Bp, 4Hp) f32  -- streamed chunk of x@W_ih0 + b0, time-major
    w_hh0_ref,      # (Hp, 4Hp)    bf16
    w1_ref,         # (2Hp, 4Hp)   bf16  = vstack(W_ih1^T, W_hh1^T), gate-padded
    b1_ref,         # (1, 4Hp)     f32   = b_ih1 + b_hh1
    init_w_ref,     # (1, Hp)      f32
    bmask_ref,      # (Bp, 1)      f32   1.0 for real batch rows, 0.0 for pad
    fc1_w_ref,      # (Hp, Fp)     bf16
    fc1_b_ref,      # (1, Fp)      f32
    bn_scale_ref,   # (1, Fp)      f32   gamma * rsqrt(var + eps)
    bn_shift_ref,   # (1, Fp)      f32   beta - mean * scale
    fc2_w_ref,      # (Fp, Cp)     bf16
    fc2_b_ref,      # (1, Cp)      f32
    out_ref,        # (Bp, Cp)     f32
    state_ref,      # VMEM (4, Bp, Hp) f32 : h0, c0, h1, c1 (across chunks)
    att_ref,        # VMEM (Bp, Hp)    f32 : attention accumulator
    *,
    t_chunk,        # static: timesteps per chunk
    t_valid,        # static: total valid T if time axis was padded, else None
):
    c_idx = pl.program_id(0)
    n_chunks = pl.num_programs(0)
    Bp, Hp = att_ref.shape
    bf16 = jnp.bfloat16

    @pl.when(c_idx == 0)
    def _():
        state_ref[...] = jnp.zeros_like(state_ref)
        att_ref[...] = jnp.zeros_like(att_ref)

    # Hoisted loop invariants (JAX does not CSE broadcast_in_dim).
    w_hh0 = w_hh0_ref[...]
    w1 = w1_ref[...]
    b1 = jnp.broadcast_to(b1_ref[...], (Bp, 4 * Hp))
    init_w_b = jnp.broadcast_to(init_w_ref[...], (Bp, Hp))
    neg_mask = (1.0 - bmask_ref[...]) * (-1e30)          # (Bp, 1)

    def gates(g):
        # gate blocks are lane-aligned (Hp is a multiple of 128)
        i = jax.nn.sigmoid(g[:, 0 * Hp:1 * Hp])
        f = jax.nn.sigmoid(g[:, 1 * Hp:2 * Hp])
        gg = jnp.tanh(g[:, 2 * Hp:3 * Hp])
        o = jax.nn.sigmoid(g[:, 3 * Hp:4 * Hp])
        return i, f, gg, o

    def step(t, carry):
        h0b, c0, h1b, c1, att = carry
        row = pl.multiple_of(t * Bp, Bp)
        # ---- layer 0: input projection already done in the wrapper ----
        g0_t = g0_ref[pl.ds(row, Bp), :] + jnp.dot(
            h0b, w_hh0, preferred_element_type=jnp.float32)
        i0, f0, gg0, o0 = gates(g0_t)
        c0 = f0 * c0 + i0 * gg0
        h0 = o0 * jnp.tanh(c0)
        h0b = h0.astype(bf16)
        # TODO(synk): inter-layer LSTM dropout is training-time; identity here.
        # ---- layer 1: both recurrent matmuls fused into one MXU issue ----
        h01 = jnp.concatenate([h0b, h1b], axis=1)                    # (Bp, 2Hp)
        g1_t = jnp.dot(h01, w1, preferred_element_type=jnp.float32) + b1
        i1, f1, gg1, o1 = gates(g1_t)
        c1 = f1 * c1 + i1 * gg1
        h1 = o1 * jnp.tanh(c1)
        h1b = h1.astype(bf16)
        # ---- fused attention: F.softmax(M, dim=0) is a per-timestep softmax
        # over the batch dim, so it only needs this step's h1. Padded batch
        # rows are pushed to -1e30 so they get zero weight.
        lo = jnp.tanh(h1)                                            # (Bp, Hp)
        m_t = jnp.sum(lo * init_w_b, axis=1, keepdims=True) + neg_mask
        m_max = jnp.max(m_t, axis=0, keepdims=True)
        e = jnp.exp(m_t - m_max)
        denom = jnp.sum(e, axis=0, keepdims=True)
        alpha = e * pl.reciprocal(denom, approx=True)                # (Bp, 1)
        contrib = alpha * lo
        if t_valid is not None:
            # time axis was padded to a multiple of t_chunk: mask padded steps
            valid = ((c_idx * t_chunk + t) < t_valid).astype(jnp.float32)
            contrib = contrib * valid
        att = att + contrib
        return h0b, c0, h1b, c1, att

    carry0 = (state_ref[0].astype(bf16), state_ref[1],
              state_ref[2].astype(bf16), state_ref[3], att_ref[...])
    h0b, c0, h1b, c1, att = lax.fori_loop(0, t_chunk, step, carry0, unroll=4)
    # bf16 h is what the next chunk's matmuls consume anyway -> no precision loss
    state_ref[0] = h0b.astype(jnp.float32)
    state_ref[1] = c0
    state_ref[2] = h1b.astype(jnp.float32)
    state_ref[3] = c1
    att_ref[...] = att

    # ---- head: fc1 + folded BatchNorm(eval) + ReLU + fc2, last chunk only ----
    @pl.when(c_idx == n_chunks - 1)
    def _():
        att_f = att_ref[...]
        y1 = (jnp.dot(att_f.astype(bf16), fc1_w_ref[...],
                      preferred_element_type=jnp.float32) + fc1_b_ref[...])
        y1 = y1 * bn_scale_ref[...] + bn_shift_ref[...]
        y1 = jnp.maximum(y1, 0.0)
        # TODO(synk): nn.Dropout(0.5) is training-time; identity in eval mode.
        y2 = (jnp.dot(y1.astype(bf16), fc2_w_ref[...],
                      preferred_element_type=jnp.float32) + fc2_b_ref[...])
        out_ref[...] = y2.astype(out_ref.dtype)


def _round_up(n, m):
    return ((n + m - 1) // m) * m


@functools.partial(jax.jit, static_argnames=("t_chunk",))
def lstm_attention_forward(x, params, t_chunk=32):
    B, T, Din = x.shape
    H = params["w_hh0"].shape[1]
    F = params["fc1_w"].shape[0]
    C = params["fc2_w"].shape[0]

    Bp = _round_up(max(B, 8), 8)
    Hp = _round_up(H, 128)
    Dp = _round_up(Din, 128)
    Fp = _round_up(F, 128)
    Cp = _round_up(C, 128)

    # Chunking: pad T up to a multiple of Tc (padded steps masked in-kernel)
    # instead of degrading to tiny divisors for awkward sequence lengths.
    Tc = max(1, min(t_chunk, T))
    n_chunks = -(-T // Tc)
    Tp = n_chunks * Tc

    f32, bf16 = jnp.float32, jnp.bfloat16

    def prep_lstm(w_ih, w_hh, b_ih, b_hh, din, dp):
        # pad each (i,f,g,o) gate block to Hp so in-kernel slices at k*Hp are
        # lane-aligned; pre-transpose so matmuls are `act @ W`.
        w_ih4 = jnp.pad(w_ih.astype(f32).reshape(4, H, din),
                        ((0, 0), (0, Hp - H), (0, dp - din)))
        w_hh4 = jnp.pad(w_hh.astype(f32).reshape(4, H, H),
                        ((0, 0), (0, Hp - H), (0, Hp - H)))
        b4 = jnp.pad((b_ih + b_hh).astype(f32).reshape(4, H),
                     ((0, 0), (0, Hp - H)))
        return (w_ih4.reshape(4 * Hp, dp).T.astype(bf16),
                w_hh4.reshape(4 * Hp, Hp).T.astype(bf16),
                b4.reshape(1, 4 * Hp))

    w_ih0, w_hh0, b0 = prep_lstm(params["w_ih0"], params["w_hh0"],
                                 params["b_ih0"], params["b_hh0"], Din, Dp)
    w_ih1, w_hh1, b1 = prep_lstm(params["w_ih1"], params["w_hh1"],
                                 params["b_ih1"], params["b_hh1"], H, Hp)
    # fused layer-1 weight: [h0 | h1] @ vstack(W_ih1^T, W_hh1^T)
    w1 = jnp.concatenate([w_ih1, w_hh1], axis=0)                 # (2Hp, 4Hp) bf16

    # x: (B, T, Din) -> time-major, pad batch/feature/time, flatten (Tp*Bp, Dp)
    x_tm = jnp.transpose(x, (1, 0, 2)).astype(f32)
    x_tm = jnp.pad(x_tm, ((0, Tp - T), (0, Bp - B), (0, Dp - Din)))
    x_flat = x_tm.reshape(Tp * Bp, Dp).astype(bf16)

    # Layer-0 input projection hoisted out of the kernel: one big full-
    # throughput matmul over all timesteps; the serial kernel only streams it.
    g0_flat = (jnp.dot(x_flat, w_ih0, preferred_element_type=f32) + b0)

    init_w = jnp.pad(params["init_w"].astype(f32), ((0, 0), (0, Hp - H)))
    bmask = (jnp.arange(Bp) < B).astype(f32).reshape(Bp, 1)

    fc1_w = jnp.pad(params["fc1_w"].T.astype(f32),
                    ((0, Hp - H), (0, Fp - F))).astype(bf16)
    fc1_b = jnp.pad(params["fc1_b"].astype(f32), (0, Fp - F)).reshape(1, Fp)
    bn_scale = params["bn_gamma"] * lax.rsqrt(params["bn_var"] + 1e-5)
    bn_shift = params["bn_beta"] - params["bn_mean"] * bn_scale
    bn_scale = jnp.pad(bn_scale.astype(f32), (0, Fp - F)).reshape(1, Fp)
    bn_shift = jnp.pad(bn_shift.astype(f32), (0, Fp - F)).reshape(1, Fp)
    fc2_w = jnp.pad(params["fc2_w"].T.astype(f32),
                    ((0, Fp - F), (0, Cp - C))).astype(bf16)
    fc2_b = jnp.pad(params["fc2_b"].astype(f32), (0, Cp - C)).reshape(1, Cp)

    args = (g0_flat, w_hh0, w1, b1, init_w, bmask,
            fc1_w, fc1_b, bn_scale, bn_shift, fc2_w, fc2_b)

    def full(a):
        nd = a.ndim
        return pl.BlockSpec(a.shape, lambda c, _nd=nd: (0,) * _nd)

    in_specs = [pl.BlockSpec((Tc * Bp, 4 * Hp), lambda c: (c, 0))]
    in_specs += [full(a) for a in args[1:]]

    kern = functools.partial(lstm_attention_kernel, t_chunk=Tc,
                             t_valid=(T if Tp != T else None))

    out = pl.pallas_call(
        kern,
        out_shape=jax.ShapeDtypeStruct((Bp, Cp), f32),
        grid=(n_chunks,),
        in_specs=in_specs,
        out_specs=pl.BlockSpec((Bp, Cp), lambda c: (0, 0)),
        scratch_shapes=[
            pltpu.VMEM((4, Bp, Hp), f32),    # h0, c0, h1, c1 across chunks
            pltpu.VMEM((Bp, Hp), f32),       # attention accumulator
        ],
        compiler_params=pltpu.CompilerParams(
            dimension_semantics=("arbitrary",),
            vmem_limit_bytes=64 * 1024 * 1024),
    )(*args)
    return out[:B, :C]


def init_params(key, input_size, cls_num, hidden_size, fc_size):
    H = hidden_size
    ks = jax.random.split(key, 12)
    s_lstm = 1.0 / float(np.sqrt(H))
    s_fc1 = 1.0 / float(np.sqrt(H))
    s_fc2 = 1.0 / float(np.sqrt(fc_size))

    def u(k, shape, scale):
        return jax.random.uniform(k, shape, jnp.float32, -scale, scale)

    return dict(
        w_ih0=u(ks[0], (4 * H, input_size), s_lstm),
        w_hh0=u(ks[1], (4 * H, H), s_lstm),
        b_ih0=u(ks[2], (4 * H,), s_lstm),
        b_hh0=u(ks[3], (4 * H,), s_lstm),
        w_ih1=u(ks[4], (4 * H, H), s_lstm),
        w_hh1=u(ks[5], (4 * H, H), s_lstm),
        b_ih1=u(ks[6], (4 * H,), s_lstm),
        b_hh1=u(ks[7], (4 * H,), s_lstm),
        init_w=jnp.zeros((1, H), jnp.float32),          # module inits to zeros
        fc1_w=u(ks[8], (fc_size, H), s_fc1),
        fc1_b=u(ks[9], (fc_size,), s_fc1),
        bn_gamma=jnp.ones((fc_size,), jnp.float32),
        bn_beta=jnp.zeros((fc_size,), jnp.float32),
        bn_mean=jnp.zeros((fc_size,), jnp.float32),
        bn_var=jnp.ones((fc_size,), jnp.float32),
        fc2_w=u(ks[10], (cls_num, fc_size), s_fc2),
        fc2_b=u(ks[11], (cls_num,), s_fc2),
    )


def reference_forward(x, params):
    """Pure-JAX f32 reference mirroring the PyTorch forward (eval mode)."""
    B, T, _ = x.shape
    H = params["w_hh0"].shape[1]

    def cell(x_t, h, c, w_ih, w_hh, b_ih, b_hh):
        gates = x_t @ w_ih.T + b_ih + h @ w_hh.T + b_hh
        i, f, g, o = jnp.split(gates, 4, axis=-1)
        c = jax.nn.sigmoid(f) * c + jax.nn.sigmoid(i) * jnp.tanh(g)
        h = jax.nn.sigmoid(o) * jnp.tanh(c)
        return h, c

    h0 = jnp.zeros((B, H)); c0 = jnp.zeros((B, H))
    h1 = jnp.zeros((B, H)); c1 = jnp.zeros((B, H))
    outs = []
    for t in range(T):
        h0, c0 = cell(x[:, t], h0, c0, params["w_ih0"], params["w_hh0"],
                      params["b_ih0"], params["b_hh0"])
        h1, c1 = cell(h0, h1, c1, params["w_ih1"], params["w_hh1"],
                      params["b_ih1"], params["b_hh1"])
        outs.append(h1)
    lstm_out = jnp.stack(outs, axis=1)                          # (B, T, H)
    lo = jnp.tanh(lstm_out)
    M = jnp.einsum("h,bth->bt", params["init_w"][0], lo)[:, None, :]  # (B,1,T)
    alpha = jax.nn.softmax(M, axis=0)                           # softmax over batch
    att = jnp.einsum("bot,bth->boh", alpha, lo)[:, 0, :]        # (B, H)
    y1 = att @ params["fc1_w"].T + params["fc1_b"]
    y1 = ((y1 - params["bn_mean"]) / jnp.sqrt(params["bn_var"] + 1e-5)
          * params["bn_gamma"] + params["bn_beta"])
    y1 = jnp.maximum(y1, 0.0)
    return y1 @ params["fc2_w"].T + params["fc2_b"]


if __name__ == "__main__":
    B, T, Din, H, F, C = 2, 8, 16, 32, 64, 5
    key = jax.random.PRNGKey(0)
    kx, kp, kw, kb = jax.random.split(key, 4)
    x = jax.random.normal(kx, (B, T, Din), jnp.float32)
    params = init_params(kp, Din, C, H, F)

    # The module initializes init_w to zeros (uniform attention) -- use a
    # random init_w and non-trivial BatchNorm running stats so the attention
    # and BN paths are actually exercised by the check.
    params["init_w"] = 0.1 * jax.random.normal(kw, (1, H), jnp.float32)
    kb1, kb2, kb3, kb4 = jax.random.split(kb, 4)
    params["bn_gamma"] = 1.0 + 0.1 * jax.random.normal(kb1, (F,), jnp.float32)
    params["bn_beta"] = 0.1 * jax.random.normal(kb2, (F,), jnp.float32)
    params["bn_mean"] = 0.1 * jax.random.normal(kb3, (F,), jnp.float32)
    params["bn_var"] = 0.5 + jax.random.uniform(kb4, (F,), jnp.float32)

    ref = reference_forward(x, params)

    # t_chunk=4 -> grid=(2,), exact chunking: exercises chunk streaming +
    # carried state.
    out = lstm_attention_forward(x, params, t_chunk=4)
    jax.block_until_ready(out)
    assert out.shape == (B, C)
    np.testing.assert_allclose(np.asarray(out), np.asarray(ref),
                               rtol=3e-2, atol=3e-2)

    # t_chunk=5 -> T=8 padded to 10: exercises the padded-timestep masking path.
    out2 = lstm_attention_forward(x, params, t_chunk=5)
    jax.block_until_ready(out2)
    np.testing.assert_allclose(np.asarray(out2), np.asarray(ref),
                               rtol=3e-2, atol=3e-2)

    print("KERNEL_OK")
</pallas_src>

<mosaic_0001>
module attributes {stable_mosaic.version = 11 : i64} {
  func.func @lstm_attention_kernel(%arg0: i32, %arg1: memref<32x512xf32, #tpu.memory_space<vmem>>, %arg2: memref<128x512xbf16, #tpu.memory_space<vmem>>, %arg3: memref<256x512xbf16, #tpu.memory_space<vmem>>, %arg4: memref<1x512xf32, #tpu.memory_space<vmem>>, %arg5: memref<1x128xf32, #tpu.memory_space<vmem>>, %arg6: memref<8x1xf32, #tpu.memory_space<vmem>>, %arg7: memref<128x128xbf16, #tpu.memory_space<vmem>>, %arg8: memref<1x128xf32, #tpu.memory_space<vmem>>, %arg9: memref<1x128xf32, #tpu.memory_space<vmem>>, %arg10: memref<1x128xf32, #tpu.memory_space<vmem>>, %arg11: memref<128x128xbf16, #tpu.memory_space<vmem>>, %arg12: memref<1x128xf32, #tpu.memory_space<vmem>>, %arg13: memref<8x128xf32, #tpu.memory_space<vmem>>, %arg14: memref<4x8x128xf32, #tpu.memory_space<vmem>>, %arg15: memref<8x128xf32, #tpu.memory_space<vmem>>) attributes {dimension_semantics = [#tpu.dimension_semantics<arbitrary>], iteration_bounds = array<i64: 2>, scalar_prefetch = 0 : i64, scratch_operands = 2 : i64, tpu.core_type = #tpu.core_type<tc>, window_params = [{transform_indices = @transform_0, window_bounds = array<i64: 32, 512>}, {pipeline_mode = #tpu.pipeline_mode<synchronous>, transform_indices = @transform_1, window_bounds = array<i64: 128, 512>}, {pipeline_mode = #tpu.pipeline_mode<synchronous>, transform_indices = @transform_2, window_bounds = array<i64: 256, 512>}, {pipeline_mode = #tpu.pipeline_mode<synchronous>, transform_indices = @transform_3, window_bounds = array<i64: 1, 512>}, {pipeline_mode = #tpu.pipeline_mode<synchronous>, transform_indices = @transform_4, window_bounds = array<i64: 1, 128>}, {pipeline_mode = #tpu.pipeline_mode<synchronous>, transform_indices = @transform_5, window_bounds = array<i64: 8, 1>}, {pipeline_mode = #tpu.pipeline_mode<synchronous>, transform_indices = @transform_6, window_bounds = array<i64: 128, 128>}, {pipeline_mode = #tpu.pipeline_mode<synchronous>, transform_indices = @transform_7, window_bounds = array<i64: 1, 128>}, {pipeline_mode = #tpu.pipeline_mode<synchronous>, transform_indices = @transform_8, window_bounds = array<i64: 1, 128>}, {pipeline_mode = #tpu.pipeline_mode<synchronous>, transform_indices = @transform_9, window_bounds = array<i64: 1, 128>}, {pipeline_mode = #tpu.pipeline_mode<synchronous>, transform_indices = @transform_10, window_bounds = array<i64: 128, 128>}, {pipeline_mode = #tpu.pipeline_mode<synchronous>, transform_indices = @transform_11, window_bounds = array<i64: 1, 128>}, {pipeline_mode = #tpu.pipeline_mode<synchronous>, transform_indices = @transform_12, window_bounds = array<i64: 8, 128>}]} {
    %c0_i32 = arith.constant 0 : i32
    %0 = arith.cmpi eq, %arg0, %c0_i32 : i32
    %1 = arith.extui %0 : i1 to i32
    %c0_i32_0 = arith.constant 0 : i32
    %2 = arith.cmpi ne, %1, %c0_i32_0 : i32
    scf.if %2 {
      %cst_90 = arith.constant 0.000000e+00 : f32
      %361 = vector.broadcast %cst_90 : f32 to vector<4x8x128xf32>
      %c0_91 = arith.constant 0 : index
      %c0_92 = arith.constant 0 : index
      %c0_93 = arith.constant 0 : index
      %362 = vector.load %arg14[%c0_91, %c0_92, %c0_93] : memref<4x8x128xf32, #tpu.memory_space<vmem>>, vector<4x8x128xf32>
      tpu.vector_store %arg14[%c0_91, %c0_92, %c0_93], %361 {strides = array<i32>} : memref<4x8x128xf32, #tpu.memory_space<vmem>>, vector<4x8x128xf32>,
      %cst_94 = arith.constant 0.000000e+00 : f32
      %363 = vector.broadcast %cst_94 : f32 to vector<8x128xf32>
      %c0_95 = arith.constant 0 : index
      %c0_96 = arith.constant 0 : index
      %364 = vector.load %arg15[%c0_95, %c0_96] : memref<8x128xf32, #tpu.memory_space<vmem>>, vector<8x128xf32>
      tpu.vector_store %arg15[%c0_95, %c0_96], %363 {strides = array<i32>} : memref<8x128xf32, #tpu.memory_space<vmem>>, vector<8x128xf32>,
    } else {
    }
    %c0 = arith.constant 0 : index
    %c0_1 = arith.constant 0 : index
    %3 = vector.load %arg2[%c0, %c0_1] : memref<128x512xbf16, #tpu.memory_space<vmem>>, vector<128x512xbf16>
    %c0_2 = arith.constant 0 : index
    %c0_3 = arith.constant 0 : index
    %4 = vector.load %arg3[%c0_2, %c0_3] : memref<256x512xbf16, #tpu.memory_space<vmem>>, vector<256x512xbf16>
    %c0_4 = arith.constant 0 : index
    %c0_5 = arith.constant 0 : index
    %5 = vector.load %arg4[%c0_4, %c0_5] : memref<1x512xf32, #tpu.memory_space<vmem>>, vector<1x512xf32>
    %6 = vector.shape_cast %5 : vector<1x512xf32> to vector<1x512xf32>
    %7 = vector.broadcast %6 : vector<1x512xf32> to vector<8x512xf32>
    %c0_6 = arith.constant 0 : index
    %c0_7 = arith.constant 0 : index
    %8 = vector.load %arg5[%c0_6, %c0_7] : memref<1x128xf32, #tpu.memory_space<vmem>>, vector<1x128xf32>
    %9 = vector.shape_cast %8 : vector<1x128xf32> to vector<1x128xf32>
    %10 = vector.broadcast %9 : vector<1x128xf32> to vector<8x128xf32>
    %c0_8 = arith.constant 0 : index
    %c0_9 = arith.constant 0 : index
    %11 = vector.load %arg6[%c0_8, %c0_9] : memref<8x1xf32, #tpu.memory_space<vmem>>, vector<8x1xf32>
    %cst = arith.constant 1.000000e+00 : f32
    %12 = vector.broadcast %cst : f32 to vector<8x1xf32>
    %13 = arith.subf %12, %11 : vector<8x1xf32>
    %cst_10 = arith.constant -1.000000e+30 : f32
    %14 = vector.broadcast %cst_10 : f32 to vector<8x1xf32>
    %15 = arith.mulf %13, %14 : vector<8x1xf32>
    %c0_11 = arith.constant 0 : index
    %c0_12 = arith.constant 0 : index
    %c0_13 = arith.constant 0 : index
    %16 = vector.load %arg14[%c0_11, %c0_12, %c0_13] : memref<4x8x128xf32, #tpu.memory_space<vmem>>, vector<1x8x128xf32>
    %17 = vector.shape_cast %16 : vector<1x8x128xf32> to vector<8x128xf32>
    %18 = arith.truncf %17 : vector<8x128xf32> to vector<8x128xbf16>
    %c1 = arith.constant 1 : index
    %c0_14 = arith.constant 0 : index
    %c0_15 = arith.constant 0 : index
    %19 = vector.load %arg14[%c1, %c0_14, %c0_15] : memref<4x8x128xf32, #tpu.memory_space<vmem>>, vector<1x8x128xf32>
    %20 = vector.shape_cast %19 : vector<1x8x128xf32> to vector<8x128xf32>
    %c2 = arith.constant 2 : index
    %c0_16 = arith.constant 0 : index
    %c0_17 = arith.constant 0 : index
    %21 = vector.load %arg14[%c2, %c0_16, %c0_17] : memref<4x8x128xf32, #tpu.memory_space<vmem>>, vector<1x8x128xf32>
    %22 = vector.shape_cast %21 : vector<1x8x128xf32> to vector<8x128xf32>
    %23 = arith.truncf %22 : vector<8x128xf32> to vector<8x128xbf16>
    %c3 = arith.constant 3 : index
    %c0_18 = arith.constant 0 : index
    %c0_19 = arith.constant 0 : index
    %24 = vector.load %arg14[%c3, %c0_18, %c0_19] : memref<4x8x128xf32, #tpu.memory_space<vmem>>, vector<1x8x128xf32>
    %25 = vector.shape_cast %24 : vector<1x8x128xf32> to vector<8x128xf32>
    %c0_20 = arith.constant 0 : index
    %c0_21 = arith.constant 0 : index
    %26 = vector.load %arg15[%c0_20, %c0_21] : memref<8x128xf32, #tpu.memory_space<vmem>>, vector<8x128xf32>
    %c0_i32_22 = arith.constant 0 : i32
    %c8_i32 = arith.constant 8 : i32
    %27 = arith.muli %c0_i32_22, %c8_i32 : i32
    %28 = tpu.assume_multiple %27, 8 : i32
    %29 = arith.index_cast %28 : i32 to index
    %c0_23 = arith.constant 0 : index
    %30 = vector.load %arg1[%29, %c0_23] : memref<32x512xf32, #tpu.memory_space<vmem>>, vector<8x512xf32>
    %cst_24 = arith.constant dense<0.000000e+00> : vector<8x512xf32>
    %31 = tpu.matmul %18, %3, %cst_24 {dimension_numbers = #tpu.dot_dimension_numbers<[1], [0], [0], [1], [0, 0, 1, 1], [], []>} : vector<8x128xbf16>, vector<128x512xbf16>, vector<8x512xf32> -> vector<8x512xf32>
    %32 = arith.addf %30, %31 : vector<8x512xf32>
    %33 = vector.extract_strided_slice %32 {offsets = [0, 0], sizes = [8, 128], strides = [1, 1]} : vector<8x512xf32> to vector<8x128xf32>
    %34 = arith.negf %33 : vector<8x128xf32>
    %35 = math.exp %34 : vector<8x128xf32>
    %cst_25 = arith.constant 1.000000e+00 : f32
    %36 = vector.broadcast %cst_25 : f32 to vector<8x128xf32>
    %37 = arith.addf %36, %35 : vector<8x128xf32>
    %38 = arith.divf %36, %37 : vector<8x128xf32>
    %39 = vector.extract_strided_slice %32 {offsets = [0, 128], sizes = [8, 128], strides = [1, 1]} : vector<8x512xf32> to vector<8x128xf32>
    %40 = arith.negf %39 : vector<8x128xf32>
    %41 = math.exp %40 : vector<8x128xf32>
    %cst_26 = arith.constant 1.000000e+00 : f32
    %42 = vector.broadcast %cst_26 : f32 to vector<8x128xf32>
    %43 = arith.addf %42, %41 : vector<8x128xf32>
    %44 = arith.divf %42, %43 : vector<8x128xf32>
    %45 = vector.extract_strided_slice %32 {offsets = [0, 256], sizes = [8, 128], strides = [1, 1]} : vector<8x512xf32> to vector<8x128xf32>
    %46 = math.tanh %45 : vector<8x128xf32>
    %47 = vector.extract_strided_slice %32 {offsets = [0, 384], sizes = [8, 128], strides = [1, 1]} : vector<8x512xf32> to vector<8x128xf32>
    %48 = arith.negf %47 : vector<8x128xf32>
    %49 = math.exp %48 : vector<8x128xf32>
    %cst_27 = arith.constant 1.000000e+00 : f32
    %50 = vector.broadcast %cst_27 : f32 to vector<8x128xf32>
    %51 = arith.addf %50, %49 : vector<8x128xf32>
    %52 = arith.divf %50, %51 : vector<8x128xf32>
    %53 = arith.mulf %44, %20 : vector<8x128xf32>
    %54 = arith.mulf %38, %46 : vector<8x128xf32>
    %55 = arith.addf %53, %54 : vector<8x128xf32>
    %56 = math.tanh %55 : vector<8x128xf32>
    %57 = arith.mulf %52, %56 : vector<8x128xf32>
    %58 = arith.truncf %57 : vector<8x128xf32> to vector<8x128xbf16>
    %59 = tpu.concatenate %58, %23 in 1 : vector<8x128xbf16>, vector<8x128xbf16> -> vector<8x256xbf16>
    %cst_28 = arith.constant dense<0.000000e+00> : vector<8x512xf32>
    %60 = tpu.matmul %59, %4, %cst_28 {dimension_numbers = #tpu.dot_dimension_numbers<[1], [0], [0], [1], [0, 0, 1, 1], [], []>} : vector<8x256xbf16>, vector<256x512xbf16>, vector<8x512xf32> -> vector<8x512xf32>
    %61 = arith.addf %60, %7 : vector<8x512xf32>
    %62 = vector.extract_strided_slice %61 {offsets = [0, 0], sizes = [8, 128], strides = [1, 1]} : vector<8x512xf32> to vector<8x128xf32>
    %63 = arith.negf %62 : vector<8x128xf32>
    %64 = math.exp %63 : vector<8x128xf32>
    %cst_29 = arith.constant 1.000000e+00 : f32
    %65 = vector.broadcast %cst_29 : f32 to vector<8x128xf32>
    %66 = arith.addf %65, %64 : vector<8x128xf32>
    %67 = arith.divf %65, %66 : vector<8x128xf32>
    %68 = vector.extract_strided_slice %61 {offsets = [0, 128], sizes = [8, 128], strides = [1, 1]} : vector<8x512xf32> to vector<8x128xf32>
    %69 = arith.negf %68 : vector<8x128xf32>
    %70 = math.exp %69 : vector<8x128xf32>
    %cst_30 = arith.constant 1.000000e+00 : f32
    %71 = vector.broadcast %cst_30 : f32 to vector<8x128xf32>
    %72 = arith.addf %71, %70 : vector<8x128xf32>
    %73 = arith.divf %71, %72 : vector<8x128xf32>
    %74 = vector.extract_strided_slice %61 {offsets = [0, 256], sizes = [8, 128], strides = [1, 1]} : vector<8x512xf32> to vector<8x128xf32>
    %75 = math.tanh %74 : vector<8x128xf32>
    %76 = vector.extract_strided_slice %61 {offsets = [0, 384], sizes = [8, 128], strides = [1, 1]} : vector<8x512xf32> to vector<8x128xf32>
    %77 = arith.negf %76 : vector<8x128xf32>
    %78 = math.exp %77 : vector<8x128xf32>
    %cst_31 = arith.constant 1.000000e+00 : f32
    %79 = vector.broadcast %cst_31 : f32 to vector<8x128xf32>
    %80 = arith.addf %79, %78 : vector<8x128xf32>
    %81 = arith.divf %79, %80 : vector<8x128xf32>
    %82 = arith.mulf %73, %25 : vector<8x128xf32>
    %83 = arith.mulf %67, %75 : vector<8x128xf32>
    %84 = arith.addf %82, %83 : vector<8x128xf32>
    %85 = math.tanh %84 : vector<8x128xf32>
    %86 = arith.mulf %81, %85 : vector<8x128xf32>
    %87 = arith.truncf %86 : vector<8x128xf32> to vector<8x128xbf16>
    %88 = math.tanh %86 : vector<8x128xf32>
    %89 = arith.mulf %88, %10 : vector<8x128xf32>
    %cst_32 = arith.constant dense<0.000000e+00> : vector<8xf32>
    %90 = vector.multi_reduction <add>, %89, %cst_32 [1] : vector<8x128xf32> to vector<8xf32>
    %91 = vector.shape_cast %90 : vector<8xf32> to vector<8x1xf32>
    %92 = arith.addf %91, %15 : vector<8x1xf32>
    %cst_33 = arith.constant dense<0xFF800000> : vector<1xf32>
    %93 = vector.multi_reduction <maximumf>, %92, %cst_33 [0] : vector<8x1xf32> to vector<1xf32>
    %94 = vector.shape_cast %93 : vector<1xf32> to vector<1x1xf32>
    %95 = vector.broadcast %94 : vector<1x1xf32> to vector<8x1xf32>
    %96 = arith.subf %92, %95 : vector<8x1xf32>
    %97 = math.exp %96 : vector<8x1xf32>
    %cst_34 = arith.constant dense<0.000000e+00> : vector<1xf32>
    %98 = vector.multi_reduction <add>, %97, %cst_34 [0] : vector<8x1xf32> to vector<1xf32>
    %99 = vector.shape_cast %98 : vector<1xf32> to vector<1x1xf32>
    %100 = tpu.reciprocal %99 {approx = true} : vector<1x1xf32> -> vector<1x1xf32>
    %101 = vector.broadcast %100 : vector<1x1xf32> to vector<8x1xf32>
    %102 = arith.mulf %97, %101 : vector<8x1xf32>
    %103 = vector.broadcast %102 : vector<8x1xf32> to vector<8x128xf32>
    %104 = arith.mulf %103, %88 : vector<8x128xf32>
    %105 = arith.addf %26, %104 : vector<8x128xf32>
    %c1_i32 = arith.constant 1 : i32
    %c8_i32_35 = arith.constant 8 : i32
    %106 = arith.muli %c1_i32, %c8_i32_35 : i32
    %107 = tpu.assume_multiple %106, 8 : i32
    %108 = arith.index_cast %107 : i32 to index
    %c0_36 = arith.constant 0 : index
    %109 = vector.load %arg1[%108, %c0_36] : memref<32x512xf32, #tpu.memory_space<vmem>>, vector<8x512xf32>
    %cst_37 = arith.constant dense<0.000000e+00> : vector<8x512xf32>
    %110 = tpu.matmul %58, %3, %cst_37 {dimension_numbers = #tpu.dot_dimension_numbers<[1], [0], [0], [1], [0, 0, 1, 1], [], []>} : vector<8x128xbf16>, vector<128x512xbf16>, vector<8x512xf32> -> vector<8x512xf32>
    %111 = arith.addf %109, %110 : vector<8x512xf32>
    %112 = vector.extract_strided_slice %111 {offsets = [0, 0], sizes = [8, 128], strides = [1, 1]} : vector<8x512xf32> to vector<8x128xf32>
    %113 = arith.negf %112 : vector<8x128xf32>
    %114 = math.exp %113 : vector<8x128xf32>
    %cst_38 = arith.constant 1.000000e+00 : f32
    %115 = vector.broadcast %cst_38 : f32 to vector<8x128xf32>
    %116 = arith.addf %115, %114 : vector<8x128xf32>
    %117 = arith.divf %115, %116 : vector<8x128xf32>
    %118 = vector.extract_strided_slice %111 {offsets = [0, 128], sizes = [8, 128], strides = [1, 1]} : vector<8x512xf32> to vector<8x128xf32>
    %119 = arith.negf %118 : vector<8x128xf32>
    %120 = math.exp %119 : vector<8x128xf32>
    %cst_39 = arith.constant 1.000000e+00 : f32
    %121 = vector.broadcast %cst_39 : f32 to vector<8x128xf32>
    %122 = arith.addf %121, %120 : vector<8x128xf32>
    %123 = arith.divf %121, %122 : vector<8x128xf32>
    %124 = vector.extract_strided_slice %111 {offsets = [0, 256], sizes = [8, 128], strides = [1, 1]} : vector<8x512xf32> to vector<8x128xf32>
    %125 = math.tanh %124 : vector<8x128xf32>
    %126 = vector.extract_strided_slice %111 {offsets = [0, 384], sizes = [8, 128], strides = [1, 1]} : vector<8x512xf32> to vector<8x128xf32>
    %127 = arith.negf %126 : vector<8x128xf32>
    %128 = math.exp %127 : vector<8x128xf32>
    %cst_40 = arith.constant 1.000000e+00 : f32
    %129 = vector.broadcast %cst_40 : f32 to vector<8x128xf32>
    %130 = arith.addf %129, %128 : vector<8x128xf32>
    %131 = arith.divf %129, %130 : vector<8x128xf32>
    %132 = arith.mulf %123, %55 : vector<8x128xf32>
    %133 = arith.mulf %117, %125 : vector<8x128xf32>
    %134 = arith.addf %132, %133 : vector<8x128xf32>
    %135 = math.tanh %134 : vector<8x128xf32>
    %136 = arith.mulf %131, %135 : vector<8x128xf32>
    %137 = arith.truncf %136 : vector<8x128xf32> to vector<8x128xbf16>
    %138 = tpu.concatenate %137, %87 in 1 : vector<8x128xbf16>, vector<8x128xbf16> -> vector<8x256xbf16>
    %cst_41 = arith.constant dense<0.000000e+00> : vector<8x512xf32>
    %139 = tpu.matmul %138, %4, %cst_41 {dimension_numbers = #tpu.dot_dimension_numbers<[1], [0], [0], [1], [0, 0, 1, 1], [], []>} : vector<8x256xbf16>, vector<256x512xbf16>, vector<8x512xf32> -> vector<8x512xf32>
    %140 = arith.addf %139, %7 : vector<8x512xf32>
    %141 = vector.extract_strided_slice %140 {offsets = [0, 0], sizes = [8, 128], strides = [1, 1]} : vector<8x512xf32> to vector<8x128xf32>
    %142 = arith.negf %141 : vector<8x128xf32>
    %143 = math.exp %142 : vector<8x128xf32>
    %cst_42 = arith.constant 1.000000e+00 : f32
    %144 = vector.broadcast %cst_42 : f32 to vector<8x128xf32>
    %145 = arith.addf %144, %143 : vector<8x128xf32>
    %146 = arith.divf %144, %145 : vector<8x128xf32>
    %147 = vector.extract_strided_slice %140 {offsets = [0, 128], sizes = [8, 128], strides = [1, 1]} : vector<8x512xf32> to vector<8x128xf32>
    %148 = arith.negf %147 : vector<8x128xf32>
    %149 = math.exp %148 : vector<8x128xf32>
    %cst_43 = arith.constant 1.000000e+00 : f32
    %150 = vector.broadcast %cst_43 : f32 to vector<8x128xf32>
    %151 = arith.addf %150, %149 : vector<8x128xf32>
    %152 = arith.divf %150, %151 : vector<8x128xf32>
    %153 = vector.extract_strided_slice %140 {offsets = [0, 256], sizes = [8, 128], strides = [1, 1]} : vector<8x512xf32> to vector<8x128xf32>
    %154 = math.tanh %153 : vector<8x128xf32>
    %155 = vector.extract_strided_slice %140 {offsets = [0, 384], sizes = [8, 128], strides = [1, 1]} : vector<8x512xf32> to vector<8x128xf32>
    %156 = arith.negf %155 : vector<8x128xf32>
    %157 = math.exp %156 : vector<8x128xf32>
    %cst_44 = arith.constant 1.000000e+00 : f32
    %158 = vector.broadcast %cst_44 : f32 to vector<8x128xf32>
    %159 = arith.addf %158, %157 : vector<8x128xf32>
    %160 = arith.divf %158, %159 : vector<8x128xf32>
    %161 = arith.mulf %152, %84 : vector<8x128xf32>
    %162 = arith.mulf %146, %154 : vector<8x128xf32>
    %163 = arith.addf %161, %162 : vector<8x128xf32>
    %164 = math.tanh %163 : vector<8x128xf32>
    %165 = arith.mulf %160, %164 : vector<8x128xf32>
    %166 = arith.truncf %165 : vector<8x128xf32> to vector<8x128xbf16>
    %167 = math.tanh %165 : vector<8x128xf32>
    %168 = arith.mulf %167, %10 : vector<8x128xf32>
    %cst_45 = arith.constant dense<0.000000e+00> : vector<8xf32>
    %169 = vector.multi_reduction <add>, %168, %cst_45 [1] : vector<8x128xf32> to vector<8xf32>
    %170 = vector.shape_cast %169 : vector<8xf32> to vector<8x1xf32>
    %171 = arith.addf %170, %15 : vector<8x1xf32>
    %cst_46 = arith.constant dense<0xFF800000> : vector<1xf32>
    %172 = vector.multi_reduction <maximumf>, %171, %cst_46 [0] : vector<8x1xf32> to vector<1xf32>
    %173 = vector.shape_cast %172 : vector<1xf32> to vector<1x1xf32>
    %174 = vector.broadcast %173 : vector<1x1xf32> to vector<8x1xf32>
    %175 = arith.subf %171, %174 : vector<8x1xf32>
    %176 = math.exp %175 : vector<8x1xf32>
    %cst_47 = arith.constant dense<0.000000e+00> : vector<1xf32>
    %177 = vector.multi_reduction <add>, %176, %cst_47 [0] : vector<8x1xf32> to vector<1xf32>
    %178 = vector.shape_cast %177 : vector<1xf32> to vector<1x1xf32>
    %179 = tpu.reciprocal %178 {approx = true} : vector<1x1xf32> -> vector<1x1xf32>
    %180 = vector.broadcast %179 : vector<1x1xf32> to vector<8x1xf32>
    %181 = arith.mulf %176, %180 : vector<8x1xf32>
    %182 = vector.broadcast %181 : vector<8x1xf32> to vector<8x128xf32>
    %183 = arith.mulf %182, %167 : vector<8x128xf32>
    %184 = arith.addf %105, %183 : vector<8x128xf32>
    %c2_i32 = arith.constant 2 : i32
    %c8_i32_48 = arith.constant 8 : i32
    %185 = arith.muli %c2_i32, %c8_i32_48 : i32
    %186 = tpu.assume_multiple %185, 8 : i32
    %187 = arith.index_cast %186 : i32 to index
    %c0_49 = arith.constant 0 : index
    %188 = vector.load %arg1[%187, %c0_49] : memref<32x512xf32, #tpu.memory_space<vmem>>, vector<8x512xf32>
    %cst_50 = arith.constant dense<0.000000e+00> : vector<8x512xf32>
    %189 = tpu.matmul %137, %3, %cst_50 {dimension_numbers = #tpu.dot_dimension_numbers<[1], [0], [0], [1], [0, 0, 1, 1], [], []>} : vector<8x128xbf16>, vector<128x512xbf16>, vector<8x512xf32> -> vector<8x512xf32>
    %190 = arith.addf %188, %189 : vector<8x512xf32>
    %191 = vector.extract_strided_slice %190 {offsets = [0, 0], sizes = [8, 128], strides = [1, 1]} : vector<8x512xf32> to vector<8x128xf32>
    %192 = arith.negf %191 : vector<8x128xf32>
    %193 = math.exp %192 : vector<8x128xf32>
    %cst_51 = arith.constant 1.000000e+00 : f32
    %194 = vector.broadcast %cst_51 : f32 to vector<8x128xf32>
    %195 = arith.addf %194, %193 : vector<8x128xf32>
    %196 = arith.divf %194, %195 : vector<8x128xf32>
    %197 = vector.extract_strided_slice %190 {offsets = [0, 128], sizes = [8, 128], strides = [1, 1]} : vector<8x512xf32> to vector<8x128xf32>
    %198 = arith.negf %197 : vector<8x128xf32>
    %199 = math.exp %198 : vector<8x128xf32>
    %cst_52 = arith.constant 1.000000e+00 : f32
    %200 = vector.broadcast %cst_52 : f32 to vector<8x128xf32>
    %201 = arith.addf %200, %199 : vector<8x128xf32>
    %202 = arith.divf %200, %201 : vector<8x128xf32>
    %203 = vector.extract_strided_slice %190 {offsets = [0, 256], sizes = [8, 128], strides = [1, 1]} : vector<8x512xf32> to vector<8x128xf32>
    %204 = math.tanh %203 : vector<8x128xf32>
    %205 = vector.extract_strided_slice %190 {offsets = [0, 384], sizes = [8, 128], strides = [1, 1]} : vector<8x512xf32> to vector<8x128xf32>
    %206 = arith.negf %205 : vector<8x128xf32>
    %207 = math.exp %206 : vector<8x128xf32>
    %cst_53 = arith.constant 1.000000e+00 : f32
    %208 = vector.broadcast %cst_53 : f32 to vector<8x128xf32>
    %209 = arith.addf %208, %207 : vector<8x128xf32>
    %210 = arith.divf %208, %209 : vector<8x128xf32>
    %211 = arith.mulf %202, %134 : vector<8x128xf32>
    %212 = arith.mulf %196, %204 : vector<8x128xf32>
    %213 = arith.addf %211, %212 : vector<8x128xf32>
    %214 = math.tanh %213 : vector<8x128xf32>
    %215 = arith.mulf %210, %214 : vector<8x128xf32>
    %216 = arith.truncf %215 : vector<8x128xf32> to vector<8x128xbf16>
    %217 = tpu.concatenate %216, %166 in 1 : vector<8x128xbf16>, vector<8x128xbf16> -> vector<8x256xbf16>
    %cst_54 = arith.constant dense<0.000000e+00> : vector<8x512xf32>
    %218 = tpu.matmul %217, %4, %cst_54 {dimension_numbers = #tpu.dot_dimension_numbers<[1], [0], [0], [1], [0, 0, 1, 1], [], []>} : vector<8x256xbf16>, vector<256x512xbf16>, vector<8x512xf32> -> vector<8x512xf32>
    %219 = arith.addf %218, %7 : vector<8x512xf32>
    %220 = vector.extract_strided_slice %219 {offsets = [0, 0], sizes = [8, 128], strides = [1, 1]} : vector<8x512xf32> to vector<8x128xf32>
    %221 = arith.negf %220 : vector<8x128xf32>
    %222 = math.exp %221 : vector<8x128xf32>
    %cst_55 = arith.constant 1.000000e+00 : f32
    %223 = vector.broadcast %cst_55 : f32 to vector<8x128xf32>
    %224 = arith.addf %223, %222 : vector<8x128xf32>
    %225 = arith.divf %223, %224 : vector<8x128xf32>
    %226 = vector.extract_strided_slice %219 {offsets = [0, 128], sizes = [8, 128], strides = [1, 1]} : vector<8x512xf32> to vector<8x128xf32>
    %227 = arith.negf %226 : vector<8x128xf32>
    %228 = math.exp %227 : vector<8x128xf32>
    %cst_56 = arith.constant 1.000000e+00 : f32
    %229 = vector.broadcast %cst_56 : f32 to vector<8x128xf32>
    %230 = arith.addf %229, %228 : vector<8x128xf32>
    %231 = arith.divf %229, %230 : vector<8x128xf32>
    %232 = vector.extract_strided_slice %219 {offsets = [0, 256], sizes = [8, 128], strides = [1, 1]} : vector<8x512xf32> to vector<8x128xf32>
    %233 = math.tanh %232 : vector<8x128xf32>
    %234 = vector.extract_strided_slice %219 {offsets = [0, 384], sizes = [8, 128], strides = [1, 1]} : vector<8x512xf32> to vector<8x128xf32>
    %235 = arith.negf %234 : vector<8x128xf32>
    %236 = math.exp %235 : vector<8x128xf32>
    %cst_57 = arith.constant 1.000000e+00 : f32
    %237 = vector.broadcast %cst_57 : f32 to vector<8x128xf32>
    %238 = arith.addf %237, %236 : vector<8x128xf32>
    %239 = arith.divf %237, %238 : vector<8x128xf32>
    %240 = arith.mulf %231, %163 : vector<8x128xf32>
    %241 = arith.mulf %225, %233 : vector<8x128xf32>
    %242 = arith.addf %240, %241 : vector<8x128xf32>
    %243 = math.tanh %242 : vector<8x128xf32>
    %244 = arith.mulf %239, %243 : vector<8x128xf32>
    %245 = arith.truncf %244 : vector<8x128xf32> to vector<8x128xbf16>
    %246 = math.tanh %244 : vector<8x128xf32>
    %247 = arith.mulf %246, %10 : vector<8x128xf32>
    %cst_58 = arith.constant dense<0.000000e+00> : vector<8xf32>
    %248 = vector.multi_reduction <add>, %247, %cst_58 [1] : vector<8x128xf32> to vector<8xf32>
    %249 = vector.shape_cast %248 : vector<8xf32> to vector<8x1xf32>
    %250 = arith.addf %249, %15 : vector<8x1xf32>
    %cst_59 = arith.constant dense<0xFF800000> : vector<1xf32>
    %251 = vector.multi_reduction <maximumf>, %250, %cst_59 [0] : vector<8x1xf32> to vector<1xf32>
    %252 = vector.shape_cast %251 : vector<1xf32> to vector<1x1xf32>
    %253 = vector.broadcast %252 : vector<1x1xf32> to vector<8x1xf32>
    %254 = arith.subf %250, %253 : vector<8x1xf32>
    %255 = math.exp %254 : vector<8x1xf32>
    %cst_60 = arith.constant dense<0.000000e+00> : vector<1xf32>
    %256 = vector.multi_reduction <add>, %255, %cst_60 [0] : vector<8x1xf32> to vector<1xf32>
    %257 = vector.shape_cast %256 : vector<1xf32> to vector<1x1xf32>
    %258 = tpu.reciprocal %257 {approx = true} : vector<1x1xf32> -> vector<1x1xf32>
    %259 = vector.broadcast %258 : vector<1x1xf32> to vector<8x1xf32>
    %260 = arith.mulf %255, %259 : vector<8x1xf32>
    %261 = vector.broadcast %260 : vector<8x1xf32> to vector<8x128xf32>
    %262 = arith.mulf %261, %246 : vector<8x128xf32>
    %263 = arith.addf %184, %262 : vector<8x128xf32>
    %c3_i32 = arith.constant 3 : i32
    %c8_i32_61 = arith.constant 8 : i32
    %264 = arith.muli %c3_i32, %c8_i32_61 : i32
    %265 = tpu.assume_multiple %264, 8 : i32
    %266 = arith.index_cast %265 : i32 to index
    %c0_62 = arith.constant 0 : index
    %267 = vector.load %arg1[%266, %c0_62] : memref<32x512xf32, #tpu.memory_space<vmem>>, vector<8x512xf32>
    %cst_63 = arith.constant dense<0.000000e+00> : vector<8x512xf32>
    %268 = tpu.matmul %216, %3, %cst_63 {dimension_numbers = #tpu.dot_dimension_numbers<[1], [0], [0], [1], [0, 0, 1, 1], [], []>} : vector<8x128xbf16>, vector<128x512xbf16>, vector<8x512xf32> -> vector<8x512xf32>
    %269 = arith.addf %267, %268 : vector<8x512xf32>
    %270 = vector.extract_strided_slice %269 {offsets = [0, 0], sizes = [8, 128], strides = [1, 1]} : vector<8x512xf32> to vector<8x128xf32>
    %271 = arith.negf %270 : vector<8x128xf32>
    %272 = math.exp %271 : vector<8x128xf32>
    %cst_64 = arith.constant 1.000000e+00 : f32
    %273 = vector.broadcast %cst_64 : f32 to vector<8x128xf32>
    %274 = arith.addf %273, %272 : vector<8x128xf32>
    %275 = arith.divf %273, %274 : vector<8x128xf32>
    %276 = vector.extract_strided_slice %269 {offsets = [0, 128], sizes = [8, 128], strides = [1, 1]} : vector<8x512xf32> to vector<8x128xf32>
    %277 = arith.negf %276 : vector<8x128xf32>
    %278 = math.exp %277 : vector<8x128xf32>
    %cst_65 = arith.constant 1.000000e+00 : f32
    %279 = vector.broadcast %cst_65 : f32 to vector<8x128xf32>
    %280 = arith.addf %279, %278 : vector<8x128xf32>
    %281 = arith.divf %279, %280 : vector<8x128xf32>
    %282 = vector.extract_strided_slice %269 {offsets = [0, 256], sizes = [8, 128], strides = [1, 1]} : vector<8x512xf32> to vector<8x128xf32>
    %283 = math.tanh %282 : vector<8x128xf32>
    %284 = vector.extract_strided_slice %269 {offsets = [0, 384], sizes = [8, 128], strides = [1, 1]} : vector<8x512xf32> to vector<8x128xf32>
    %285 = arith.negf %284 : vector<8x128xf32>
    %286 = math.exp %285 : vector<8x128xf32>
    %cst_66 = arith.constant 1.000000e+00 : f32
    %287 = vector.broadcast %cst_66 : f32 to vector<8x128xf32>
    %288 = arith.addf %287, %286 : vector<8x128xf32>
    %289 = arith.divf %287, %288 : vector<8x128xf32>
    %290 = arith.mulf %281, %213 : vector<8x128xf32>
    %291 = arith.mulf %275, %283 : vector<8x128xf32>
    %292 = arith.addf %290, %291 : vector<8x128xf32>
    %293 = math.tanh %292 : vector<8x128xf32>
    %294 = arith.mulf %289, %293 : vector<8x128xf32>
    %295 = arith.truncf %294 : vector<8x128xf32> to vector<8x128xbf16>
    %296 = tpu.concatenate %295, %245 in 1 : vector<8x128xbf16>, vector<8x128xbf16> -> vector<8x256xbf16>
    %cst_67 = arith.constant dense<0.000000e+00> : vector<8x512xf32>
    %297 = tpu.matmul %296, %4, %cst_67 {dimension_numbers = #tpu.dot_dimension_numbers<[1], [0], [0], [1], [0, 0, 1, 1], [], []>} : vector<8x256xbf16>, vector<256x512xbf16>, vector<8x512xf32> -> vector<8x512xf32>
    %298 = arith.addf %297, %7 : vector<8x512xf32>
    %299 = vector.extract_strided_slice %298 {offsets = [0, 0], sizes = [8, 128], strides = [1, 1]} : vector<8x512xf32> to vector<8x128xf32>
    %300 = arith.negf %299 : vector<8x128xf32>
    %301 = math.exp %300 : vector<8x128xf32>
    %cst_68 = arith.constant 1.000000e+00 : f32
    %302 = vector.broadcast %cst_68 : f32 to vector<8x128xf32>
    %303 = arith.addf %302, %301 : vector<8x128xf32>
    %304 = arith.divf %302, %303 : vector<8x128xf32>
    %305 = vector.extract_strided_slice %298 {offsets = [0, 128], sizes = [8, 128], strides = [1, 1]} : vector<8x512xf32> to vector<8x128xf32>
    %306 = arith.negf %305 : vector<8x128xf32>
    %307 = math.exp %306 : vector<8x128xf32>
    %cst_69 = arith.constant 1.000000e+00 : f32
    %308 = vector.broadcast %cst_69 : f32 to vector<8x128xf32>
    %309 = arith.addf %308, %307 : vector<8x128xf32>
    %310 = arith.divf %308, %309 : vector<8x128xf32>
    %311 = vector.extract_strided_slice %298 {offsets = [0, 256], sizes = [8, 128], strides = [1, 1]} : vector<8x512xf32> to vector<8x128xf32>
    %312 = math.tanh %311 : vector<8x128xf32>
    %313 = vector.extract_strided_slice %298 {offsets = [0, 384], sizes = [8, 128], strides = [1, 1]} : vector<8x512xf32> to vector<8x128xf32>
    %314 = arith.negf %313 : vector<8x128xf32>
    %315 = math.exp %314 : vector<8x128xf32>
    %cst_70 = arith.constant 1.000000e+00 : f32
    %316 = vector.broadcast %cst_70 : f32 to vector<8x128xf32>
    %317 = arith.addf %316, %315 : vector<8x128xf32>
    %318 = arith.divf %316, %317 : vector<8x128xf32>
    %319 = arith.mulf %310, %242 : vector<8x128xf32>
    %320 = arith.mulf %304, %312 : vector<8x128xf32>
    %321 = arith.addf %319, %320 : vector<8x128xf32>
    %322 = math.tanh %321 : vector<8x128xf32>
    %323 = arith.mulf %318, %322 : vector<8x128xf32>
    %324 = arith.truncf %323 : vector<8x128xf32> to vector<8x128xbf16>
    %325 = math.tanh %323 : vector<8x128xf32>
    %326 = arith.mulf %325, %10 : vector<8x128xf32>
    %cst_71 = arith.constant dense<0.000000e+00> : vector<8xf32>
    %327 = vector.multi_reduction <add>, %326, %cst_71 [1] : vector<8x128xf32> to vector<8xf32>
    %328 = vector.shape_cast %327 : vector<8xf32> to vector<8x1xf32>
    %329 = arith.addf %328, %15 : vector<8x1xf32>
    %cst_72 = arith.constant dense<0xFF800000> : vector<1xf32>
    %330 = vector.multi_reduction <maximumf>, %329, %cst_72 [0] : vector<8x1xf32> to vector<1xf32>
    %331 = vector.shape_cast %330 : vector<1xf32> to vector<1x1xf32>
    %332 = vector.broadcast %331 : vector<1x1xf32> to vector<8x1xf32>
    %333 = arith.subf %329, %332 : vector<8x1xf32>
    %334 = math.exp %333 : vector<8x1xf32>
    %cst_73 = arith.constant dense<0.000000e+00> : vector<1xf32>
    %335 = vector.multi_reduction <add>, %334, %cst_73 [0] : vector<8x1xf32> to vector<1xf32>
    %336 = vector.shape_cast %335 : vector<1xf32> to vector<1x1xf32>
    %337 = tpu.reciprocal %336 {approx = true} : vector<1x1xf32> -> vector<1x1xf32>
    %338 = vector.broadcast %337 : vector<1x1xf32> to vector<8x1xf32>
    %339 = arith.mulf %334, %338 : vector<8x1xf32>
    %340 = vector.broadcast %339 : vector<8x1xf32> to vector<8x128xf32>
    %341 = arith.mulf %340, %325 : vector<8x128xf32>
    %342 = arith.addf %263, %341 : vector<8x128xf32>
    %c4_i32 = arith.constant 4 : i32
    %343 = arith.extf %295 : vector<8x128xbf16> to vector<8x128xf32>
    %c0_74 = arith.constant 0 : index
    %c0_75 = arith.constant 0 : index
    %c0_76 = arith.constant 0 : index
    %344 = vector.load %arg14[%c0_74, %c0_75, %c0_76] : memref<4x8x128xf32, #tpu.memory_space<vmem>>, vector<1x8x128xf32>
    %345 = vector.shape_cast %344 : vector<1x8x128xf32> to vector<8x128xf32>
    %346 = vector.shape_cast %343 : vector<8x128xf32> to vector<1x8x128xf32>
    tpu.vector_store %arg14[%c0_74, %c0_75, %c0_76], %346 {strides = array<i32>} : memref<4x8x128xf32, #tpu.memory_space<vmem>>, vector<1x8x128xf32>,
    %c1_77 = arith.constant 1 : index
    %c0_78 = arith.constant 0 : index
    %c0_79 = arith.constant 0 : index
    %347 = vector.load %arg14[%c1_77, %c0_78, %c0_79] : memref<4x8x128xf32, #tpu.memory_space<vmem>>, vector<1x8x128xf32>
    %348 = vector.shape_cast %347 : vector<1x8x128xf32> to vector<8x128xf32>
    %349 = vector.shape_cast %292 : vector<8x128xf32> to vector<1x8x128xf32>
    tpu.vector_store %arg14[%c1_77, %c0_78, %c0_79], %349 {strides = array<i32>} : memref<4x8x128xf32, #tpu.memory_space<vmem>>, vector<1x8x128xf32>,
    %350 = arith.extf %324 : vector<8x128xbf16> to vector<8x128xf32>
    %c2_80 = arith.constant 2 : index
    %c0_81 = arith.constant 0 : index
    %c0_82 = arith.constant 0 : index
    %351 = vector.load %arg14[%c2_80, %c0_81, %c0_82] : memref<4x8x128xf32, #tpu.memory_space<vmem>>, vector<1x8x128xf32>
    %352 = vector.shape_cast %351 : vector<1x8x128xf32> to vector<8x128xf32>
    %353 = vector.shape_cast %350 : vector<8x128xf32> to vector<1x8x128xf32>
    tpu.vector_store %arg14[%c2_80, %c0_81, %c0_82], %353 {strides = array<i32>} : memref<4x8x128xf32, #tpu.memory_space<vmem>>, vector<1x8x128xf32>,
    %c3_83 = arith.constant 3 : index
    %c0_84 = arith.constant 0 : index
    %c0_85 = arith.constant 0 : index
    %354 = vector.load %arg14[%c3_83, %c0_84, %c0_85] : memref<4x8x128xf32, #tpu.memory_space<vmem>>, vector<1x8x128xf32>
    %355 = vector.shape_cast %354 : vector<1x8x128xf32> to vector<8x128xf32>
    %356 = vector.shape_cast %321 : vector<8x128xf32> to vector<1x8x128xf32>
    tpu.vector_store %arg14[%c3_83, %c0_84, %c0_85], %356 {strides = array<i32>} : memref<4x8x128xf32, #tpu.memory_space<vmem>>, vector<1x8x128xf32>,
    %c0_86 = arith.constant 0 : index
    %c0_87 = arith.constant 0 : index
    %357 = vector.load %arg15[%c0_86, %c0_87] : memref<8x128xf32, #tpu.memory_space<vmem>>, vector<8x128xf32>
    tpu.vector_store %arg15[%c0_86, %c0_87], %342 {strides = array<i32>} : memref<8x128xf32, #tpu.memory_space<vmem>>, vector<8x128xf32>,
    %c1_i32_88 = arith.constant 1 : i32
    %358 = arith.cmpi eq, %arg0, %c1_i32_88 : i32
    %359 = arith.extui %358 : i1 to i32
    %c0_i32_89 = arith.constant 0 : i32
    %360 = arith.cmpi ne, %359, %c0_i32_89 : i32
    scf.if %360 {
      %c0_90 = arith.constant 0 : index
      %c0_91 = arith.constant 0 : index
      %361 = vector.load %arg15[%c0_90, %c0_91] : memref<8x128xf32, #tpu.memory_space<vmem>>, vector<8x128xf32>
      %362 = arith.truncf %361 : vector<8x128xf32> to vector<8x128xbf16>
      %c0_92 = arith.constant 0 : index
      %c0_93 = arith.constant 0 : index
      %363 = vector.load %arg7[%c0_92, %c0_93] : memref<128x128xbf16, #tpu.memory_space<vmem>>, vector<128x128xbf16>
      %cst_94 = arith.constant dense<0.000000e+00> : vector<8x128xf32>
      %364 = tpu.matmul %362, %363, %cst_94 {dimension_numbers = #tpu.dot_dimension_numbers<[1], [0], [0], [1], [0, 0, 1, 1], [], []>} : vector<8x128xbf16>, vector<128x128xbf16>, vector<8x128xf32> -> vector<8x128xf32>
      %c0_95 = arith.constant 0 : index
      %c0_96 = arith.constant 0 : index
      %365 = vector.load %arg8[%c0_95, %c0_96] : memref<1x128xf32, #tpu.memory_space<vmem>>, vector<1x128xf32>
      %366 = vector.broadcast %365 : vector<1x128xf32> to vector<8x128xf32>
      %367 = arith.addf %364, %366 : vector<8x128xf32>
      %c0_97 = arith.constant 0 : index
      %c0_98 = arith.constant 0 : index
      %368 = vector.load %arg9[%c0_97, %c0_98] : memref<1x128xf32, #tpu.memory_space<vmem>>, vector<1x128xf32>
      %369 = vector.broadcast %368 : vector<1x128xf32> to vector<8x128xf32>
      %370 = arith.mulf %367, %369 : vector<8x128xf32>
      %c0_99 = arith.constant 0 : index
      %c0_100 = arith.constant 0 : index
      %371 = vector.load %arg10[%c0_99, %c0_100] : memref<1x128xf32, #tpu.memory_space<vmem>>, vector<1x128xf32>
      %372 = vector.broadcast %371 : vector<1x128xf32> to vector<8x128xf32>
      %373 = arith.addf %370, %372 : vector<8x128xf32>
      %cst_101 = arith.constant 0.000000e+00 : f32
      %374 = vector.broadcast %cst_101 : f32 to vector<8x128xf32>
      %375 = arith.maximumf %373, %374 : vector<8x128xf32>
      %376 = arith.truncf %375 : vector<8x128xf32> to vector<8x128xbf16>
      %c0_102 = arith.constant 0 : index
      %c0_103 = arith.constant 0 : index
      %377 = vector.load %arg11[%c0_102, %c0_103] : memref<128x128xbf16, #tpu.memory_space<vmem>>, vector<128x128xbf16>
      %cst_104 = arith.constant dense<0.000000e+00> : vector<8x128xf32>
      %378 = tpu.matmul %376, %377, %cst_104 {dimension_numbers = #tpu.dot_dimension_numbers<[1], [0], [0], [1], [0, 0, 1, 1], [], []>} : vector<8x128xbf16>, vector<128x128xbf16>, vector<8x128xf32> -> vector<8x128xf32>
      %c0_105 = arith.constant 0 : index
      %c0_106 = arith.constant 0 : index
      %379 = vector.load %arg12[%c0_105, %c0_106] : memref<1x128xf32, #tpu.memory_space<vmem>>, vector<1x128xf32>
      %380 = vector.broadcast %379 : vector<1x128xf32> to vector<8x128xf32>
      %381 = arith.addf %378, %380 : vector<8x128xf32>
      %c0_107 = arith.constant 0 : index
      %c0_108 = arith.constant 0 : index
      %382 = vector.load %arg13[%c0_107, %c0_108] : memref<8x128xf32, #tpu.memory_space<vmem>>, vector<8x128xf32>
      tpu.vector_store %arg13[%c0_107, %c0_108], %381 {strides = array<i32>} : memref<8x128xf32, #tpu.memory_space<vmem>>, vector<8x128xf32>,
    } else {
    }
    return
  }
  func.func @transform_0(%arg0: i32) -> (i32, i32) {
    %c0_i32 = arith.constant 0 : i32
    %c0_i32_0 = arith.constant 0 : i32
    return %arg0, %c0_i32 : i32, i32
  }
  func.func @transform_1(%arg0: i32) -> (i32, i32) {
    %c0_i32 = arith.constant 0 : i32
    %c0_i32_0 = arith.constant 0 : i32
    %c0_i32_1 = arith.constant 0 : i32
    return %c0_i32, %c0_i32_0 : i32, i32
  }
  func.func @transform_2(%arg0: i32) -> (i32, i32) {
    %c0_i32 = arith.constant 0 : i32
    %c0_i32_0 = arith.constant 0 : i32
    %c0_i32_1 = arith.constant 0 : i32
    return %c0_i32, %c0_i32_0 : i32, i32
  }
  func.func @transform_3(%arg0: i32) -> (i32, i32) {
    %c0_i32 = arith.constant 0 : i32
    %c0_i32_0 = arith.constant 0 : i32
    %c0_i32_1 = arith.constant 0 : i32
    return %c0_i32, %c0_i32_0 : i32, i32
  }
  func.func @transform_4(%arg0: i32) -> (i32, i32) {
    %c0_i32 = arith.constant 0 : i32
    %c0_i32_0 = arith.constant 0 : i32
    %c0_i32_1 = arith.constant 0 : i32
    return %c0_i32, %c0_i32_0 : i32, i32
  }
  func.func @transform_5(%arg0: i32) -> (i32, i32) {
    %c0_i32 = arith.constant 0 : i32
    %c0_i32_0 = arith.constant 0 : i32
    %c0_i32_1 = arith.constant 0 : i32
    return %c0_i32, %c0_i32_0 : i32, i32
  }
  func.func @transform_6(%arg0: i32) -> (i32, i32) {
    %c0_i32 = arith.constant 0 : i32
    %c0_i32_0 = arith.constant 0 : i32
    %c0_i32_1 = arith.constant 0 : i32
    return %c0_i32, %c0_i32_0 : i32, i32
  }
  func.func @transform_7(%arg0: i32) -> (i32, i32) {
    %c0_i32 = arith.constant 0 : i32
    %c0_i32_0 = arith.constant 0 : i32
    %c0_i32_1 = arith.constant 0 : i32
    return %c0_i32, %c0_i32_0 : i32, i32
  }
  func.func @transform_8(%arg0: i32) -> (i32, i32) {
    %c0_i32 = arith.constant 0 : i32
    %c0_i32_0 = arith.constant 0 : i32
    %c0_i32_1 = arith.constant 0 : i32
    return %c0_i32, %c0_i32_0 : i32, i32
  }
  func.func @transform_9(%arg0: i32) -> (i32, i32) {
    %c0_i32 = arith.constant 0 : i32
    %c0_i32_0 = arith.constant 0 : i32
    %c0_i32_1 = arith.constant 0 : i32
    return %c0_i32, %c0_i32_0 : i32, i32
  }
  func.func @transform_10(%arg0: i32) -> (i32, i32) {
    %c0_i32 = arith.constant 0 : i32
    %c0_i32_0 = arith.constant 0 : i32
    %c0_i32_1 = arith.constant 0 : i32
    return %c0_i32, %c0_i32_0 : i32, i32
  }
  func.func @transform_11(%arg0: i32) -> (i32, i32) {
    %c0_i32 = arith.constant 0 : i32
    %c0_i32_0 = arith.constant 0 : i32
    %c0_i32_1 = arith.constant 0 : i32
    return %c0_i32, %c0_i32_0 : i32, i32
  }
  func.func @transform_12(%arg0: i32) -> (i32, i32) {
    %c0_i32 = arith.constant 0 : i32
    %c0_i32_0 = arith.constant 0 : i32
    %c0_i32_1 = arith.constant 0 : i32
    return %c0_i32, %c0_i32_0 : i32, i32
  }
}

</mosaic_0001>

<llo_original>
// kernel: lstm_attention_forward.1
$region0: #{lstm_attention_forward.1}
  #allocation0 [shape = 'u32[]', space=smem, size = 0x4, offset = 0x4, fixed_abs, tag = 'smem constant byte address 0x4 - core index']
  #allocation1 [shape = 'u32[72,128]{1,0:T(1,128)}', space=vmem, size = 0x9000, scoped, tag = 'internal scratch']
  #allocation2 [shape = 'f32[4,8,128]{2,1,0:T(8,128)}', space=vmem, size = 0x4000, scoped, tag = 'scratch operand']
  #allocation3 [shape = 'f32[8,128]{1,0:T(8,128)}', space=vmem, size = 0x1000, scoped, tag = 'scratch operand']
  %s0 = inlined_call_operand.vmem [shape: f32[64,512], index: 0, kind: input, shape index: {}]
  %s1 = inlined_call_operand.vmem [shape: bf16[128,512], index: 1, kind: input, shape index: {}]
  %s2 = inlined_call_operand.vmem [shape: bf16[256,512], index: 2, kind: input, shape index: {}]
  %s3 = inlined_call_operand.vmem [shape: f32[1,512], index: 3, kind: input, shape index: {}]
  %s4 = inlined_call_operand.vmem [shape: f32[1,128], index: 4, kind: input, shape index: {}]
  %s5 = inlined_call_operand.vmem [shape: f32[8,1], index: 5, kind: input, shape index: {}]
  %s6 = inlined_call_operand.vmem [shape: bf16[128,128], index: 6, kind: input, shape index: {}]
  %s7 = inlined_call_operand.vmem [shape: f32[1,128], index: 7, kind: input, shape index: {}]
  %s8 = inlined_call_operand.vmem [shape: f32[1,128], index: 8, kind: input, shape index: {}]
  %s9 = inlined_call_operand.vmem [shape: f32[1,128], index: 9, kind: input, shape index: {}]
  %s10 = inlined_call_operand.vmem [shape: bf16[128,128], index: 10, kind: input, shape index: {}]
  %s11 = inlined_call_operand.vmem [shape: f32[1,128], index: 11, kind: input, shape index: {}]
  %s12 = inlined_call_operand.vmem [shape: f32[8,128], index: 12, kind: output, shape index: {}]
  %s13 = sld [smem:[#allocation0]]
  $region89: #{lstm_attention_forward.1} parent=0
    _
  %s15 = ssub.s32 1, %s13
  %s16 = scalar_select 0, %s15, %s13
  loop: start=0, step=1, limit=4
  $region2: #{lstm_attention_forward.1} parent=0 // loop_pre_header
    _
  $region3: #{lstm_attention_forward.1} parent=0 // loop_header
    %s18 = sphi 0, %s22
    %p19 = scmp.ge.s32.totalorder %s18, 4
    %s28 = sphi 0, %s30
    %s31 = sphi 0, %s28
    %s32 = sphi 0, %s31
    %s48 = sphi 0, %s32
    %s52 = sphi 0, %s52
    %s54 = sphi 0, %s52
    %s55 = sphi 0, %s54
    %s69 = sphi 0, %s55
    %s73 = sphi 0, %s73
    %s75 = sphi 0, %s73
    %s76 = sphi 0, %s75
    %s90 = sphi 0, %s76
    %s94 = sphi 0, %s94
    %s96 = sphi 0, %s94
    %s97 = sphi 0, %s96
    %s111 = sphi 0, %s97
    %s115 = sphi 0, %s115
    %s117 = sphi 0, %s115
    %s118 = sphi 0, %s117
    %s132 = sphi 0, %s118
    %s136 = sphi 0, %s136
    %s138 = sphi 0, %s136
    %s139 = sphi 0, %s138
    %s153 = sphi 0, %s139
    %s157 = sphi 0, %s157
    %s159 = sphi 0, %s157
    %s160 = sphi 0, %s159
    %s174 = sphi 0, %s160
    %s178 = sphi 0, %s178
    %s180 = sphi 0, %s178
    %s181 = sphi 0, %s180
    %s195 = sphi 0, %s181
    %s199 = sphi 0, %s199
    %s201 = sphi 0, %s199
    %s202 = sphi 0, %s201
    %s216 = sphi 0, %s202
    %s220 = sphi 0, %s220
    %s222 = sphi 0, %s220
    %s223 = sphi 0, %s222
    %s237 = sphi 0, %s223
    %s241 = sphi 0, %s241
    %s243 = sphi 0, %s241
    %s244 = sphi 0, %s243
    %s258 = sphi 0, %s244
    %s262 = sphi 0, %s262
    %s264 = sphi 0, %s262
    %s265 = sphi 0, %s264
    %s279 = sphi 0, %s265
    %s283 = sphi 0, %s283
    %s285 = sphi 0, %s283
    %s286 = sphi 0, %s285
    %s300 = sphi 0, %s286
  $region4: #{lstm_attention_forward.1} parent=0 // loop_header_branch
    %21 = sbr.rel (%p19) target = $region8
  $region5: #{lstm_attention_forward.1} parent=0 // loop_body
    %s23 = ssub.s32 %s18, 1
    %s24 = ssub.s32 %s18, 2
    %s25 = sadd.s32 %s18, 1
    %s26 = ssub.s32 %s18, %s25
    %p27 = scmp.eq.s32.totalorder %s26, 0
    %s29 = sadd.s32 %s28, 1
    %s30 = scalar_select %p27, %s28, %s29
    %p33 = pneg %p27
    %p34 = scmp.eq.s32.totalorder %s18, 1
    %p35 = por %p33, %p34
    %p36 = scmp.ne.s32.totalorder %s28, %s31
    %p37 = scmp.eq.s32.totalorder %s18, 0
    %p38 = por %p36, %p37
    %p39 = scmp.ne.s32.totalorder %s28, %s31
    %p40 = scmp.eq.s32.totalorder %s23, 1
    %p41 = por %p39, %p40
    %p42 = scmp.ne.s32.totalorder %s31, %s32
    %p43 = scmp.eq.s32.totalorder %s23, 0
    %p44 = por %p42, %p43
    %p45 = scmp.ne.s32.totalorder %s31, %s32
    %p46 = scmp.eq.s32.totalorder %s24, 1
    %p47 = por %p45, %p46
    %p49 = scmp.ne.s32.totalorder %s32, %s48
    %p50 = scmp.eq.s32.totalorder %s24, 0
    %p51 = por %p49, %p50
    %s53 = sadd.s32 %s52, 1
    %p56 = scmp.eq.s32.totalorder %s18, 1
    %p57 = scmp.ne.s32.totalorder %s52, %s54
    %p58 = scmp.eq.s32.totalorder %s18, 0
    %p59 = por %p57, %p58
    %p60 = scmp.ne.s32.totalorder %s52, %s54
    %p61 = scmp.eq.s32.totalorder %s23, 1
    %p62 = por %p60, %p61
    %p63 = scmp.ne.s32.totalorder %s54, %s55
    %p64 = scmp.eq.s32.totalorder %s23, 0
    %p65 = por %p63, %p64
    %p66 = scmp.ne.s32.totalorder %s54, %s55
    %p67 = scmp.eq.s32.totalorder %s24, 1
    %p68 = por %p66, %p67
    %p70 = scmp.ne.s32.totalorder %s55, %s69
    %p71 = scmp.eq.s32.totalorder %s24, 0
    %p72 = por %p70, %p71
    %s74 = sadd.s32 %s73, 1
    %p77 = scmp.eq.s32.totalorder %s18, 1
    %p78 = scmp.ne.s32.totalorder %s73, %s75
    %p79 = scmp.eq.s32.totalorder %s18, 0
    %p80 = por %p78, %p79
    %p81 = scmp.ne.s32.totalorder %s73, %s75
    %p82 = scmp.eq.s32.totalorder %s23, 1
    %p83 = por %p81, %p82
    %p84 = scmp.ne.s32.totalorder %s75, %s76
    %p85 = scmp.eq.s32.totalorder %s23, 0
    %p86 = por %p84, %p85
    %p87 = scmp.ne.s32.totalorder %s75, %s76
    %p88 = scmp.eq.s32.totalorder %s24, 1
    %p89 = por %p87, %p88
    %p91 = scmp.ne.s32.totalorder %s76, %s90
    %p92 = scmp.eq.s32.totalorder %s24, 0
    %p93 = por %p91, %p92
    %s95 = sadd.s32 %s94, 1
    %p98 = scmp.eq.s32.totalorder %s18, 1
    %p99 = scmp.ne.s32.totalorder %s94, %s96
    %p100 = scmp.eq.s32.totalorder %s18, 0
    %p101 = por %p99, %p100
    %p102 = scmp.ne.s32.totalorder %s94, %s96
    %p103 = scmp.eq.s32.totalorder %s23, 1
    %p104 = por %p102, %p103
    %p105 = scmp.ne.s32.totalorder %s96, %s97
    %p106 = scmp.eq.s32.totalorder %s23, 0
    %p107 = por %p105, %p106
    %p108 = scmp.ne.s32.totalorder %s96, %s97
    %p109 = scmp.eq.s32.totalorder %s24, 1
    %p110 = por %p108, %p109
    %p112 = scmp.ne.s32.totalorder %s97, %s111
    %p113 = scmp.eq.s32.totalorder %s24, 0
    %p114 = por %p112, %p113
    %s116 = sadd.s32 %s115, 1
    %p119 = scmp.eq.s32.totalorder %s18, 1
    %p120 = scmp.ne.s32.totalorder %s115, %s117
    %p121 = scmp.eq.s32.totalorder %s18, 0
    %p122 = por %p120, %p121
    %p123 = scmp.ne.s32.totalorder %s115, %s117
    %p124 = scmp.eq.s32.totalorder %s23, 1
    %p125 = por %p123, %p124
    %p126 = scmp.ne.s32.totalorder %s117, %s118
    %p127 = scmp.eq.s32.totalorder %s23, 0
    %p128 = por %p126, %p127
    %p129 = scmp.ne.s32.totalorder %s117, %s118
    %p130 = scmp.eq.s32.totalorder %s24, 1
    %p131 = por %p129, %p130
    %p133 = scmp.ne.s32.totalorder %s118, %s132
    %p134 = scmp.eq.s32.totalorder %s24, 0
    %p135 = por %p133, %p134
    %s137 = sadd.s32 %s136, 1
    %p140 = scmp.eq.s32.totalorder %s18, 1
    %p141 = scmp.ne.s32.totalorder %s136, %s138
    %p142 = scmp.eq.s32.totalorder %s18, 0
    %p143 = por %p141, %p142
    %p144 = scmp.ne.s32.totalorder %s136, %s138
    %p145 = scmp.eq.s32.totalorder %s23, 1
    %p146 = por %p144, %p145
    %p147 = scmp.ne.s32.totalorder %s138, %s139
    %p148 = scmp.eq.s32.totalorder %s23, 0
    %p149 = por %p147, %p148
    %p150 = scmp.ne.s32.totalorder %s138, %s139
    %p151 = scmp.eq.s32.totalorder %s24, 1
    %p152 = por %p150, %p151
    %p154 = scmp.ne.s32.totalorder %s139, %s153
    %p155 = scmp.eq.s32.totalorder %s24, 0
    %p156 = por %p154, %p155
    %s158 = sadd.s32 %s157, 1
    %p161 = scmp.eq.s32.totalorder %s18, 1
    %p162 = scmp.ne.s32.totalorder %s157, %s159
    %p163 = scmp.eq.s32.totalorder %s18, 0
    %p164 = por %p162, %p163
    %p165 = scmp.ne.s32.totalorder %s157, %s159
    %p166 = scmp.eq.s32.totalorder %s23, 1
    %p167 = por %p165, %p166
    %p168 = scmp.ne.s32.totalorder %s159, %s160
    %p169 = scmp.eq.s32.totalorder %s23, 0
    %p170 = por %p168, %p169
    %p171 = scmp.ne.s32.totalorder %s159, %s160
    %p172 = scmp.eq.s32.totalorder %s24, 1
    %p173 = por %p171, %p172
    %p175 = scmp.ne.s32.totalorder %s160, %s174
    %p176 = scmp.eq.s32.totalorder %s24, 0
    %p177 = por %p175, %p176
    %s179 = sadd.s32 %s178, 1
    %p182 = scmp.eq.s32.totalorder %s18, 1
    %p183 = scmp.ne.s32.totalorder %s178, %s180
    %p184 = scmp.eq.s32.totalorder %s18, 0
    %p185 = por %p183, %p184
    %p186 = scmp.ne.s32.totalorder %s178, %s180
    %p187 = scmp.eq.s32.totalorder %s23, 1
    %p188 = por %p186, %p187
    %p189 = scmp.ne.s32.totalorder %s180, %s181
    %p190 = scmp.eq.s32.totalorder %s23, 0
    %p191 = por %p189, %p190
    %p192 = scmp.ne.s32.totalorder %s180, %s181
    %p193 = scmp.eq.s32.totalorder %s24, 1
    %p194 = por %p192, %p193
    %p196 = scmp.ne.s32.totalorder %s181, %s195
    %p197 = scmp.eq.s32.totalorder %s24, 0
    %p198 = por %p196, %p197
    %s200 = sadd.s32 %s199, 1
    %p203 = scmp.eq.s32.totalorder %s18, 1
    %p204 = scmp.ne.s32.totalorder %s199, %s201
    %p205 = scmp.eq.s32.totalorder %s18, 0
    %p206 = por %p204, %p205
    %p207 = scmp.ne.s32.totalorder %s199, %s201
    %p208 = scmp.eq.s32.totalorder %s23, 1
    %p209 = por %p207, %p208
    %p210 = scmp.ne.s32.totalorder %s201, %s202
    %p211 = scmp.eq.s32.totalorder %s23, 0
    %p212 = por %p210, %p211
    %p213 = scmp.ne.s32.totalorder %s201, %s202
    %p214 = scmp.eq.s32.totalorder %s24, 1
    %p215 = por %p213, %p214
    %p217 = scmp.ne.s32.totalorder %s202, %s216
    %p218 = scmp.eq.s32.totalorder %s24, 0
    %p219 = por %p217, %p218
    %s221 = sadd.s32 %s220, 1
    %p224 = scmp.eq.s32.totalorder %s18, 1
    %p225 = scmp.ne.s32.totalorder %s220, %s222
    %p226 = scmp.eq.s32.totalorder %s18, 0
    %p227 = por %p225, %p226
    %p228 = scmp.ne.s32.totalorder %s220, %s222
    %p229 = scmp.eq.s32.totalorder %s23, 1
    %p230 = por %p228, %p229
    %p231 = scmp.ne.s32.totalorder %s222, %s223
    %p232 = scmp.eq.s32.totalorder %s23, 0
    %p233 = por %p231, %p232
    %p234 = scmp.ne.s32.totalorder %s222, %s223
    %p235 = scmp.eq.s32.totalorder %s24, 1
    %p236 = por %p234, %p235
    %p238 = scmp.ne.s32.totalorder %s223, %s237
    %p239 = scmp.eq.s32.totalorder %s24, 0
    %p240 = por %p238, %p239
    %s242 = sadd.s32 %s241, 1
    %p245 = scmp.eq.s32.totalorder %s18, 1
    %p246 = scmp.ne.s32.totalorder %s241, %s243
    %p247 = scmp.eq.s32.totalorder %s18, 0
    %p248 = por %p246, %p247
    %p249 = scmp.ne.s32.totalorder %s241, %s243
    %p250 = scmp.eq.s32.totalorder %s23, 1
    %p251 = por %p249, %p250
    %p252 = scmp.ne.s32.totalorder %s243, %s244
    %p253 = scmp.eq.s32.totalorder %s23, 0
    %p254 = por %p252, %p253
    %p255 = scmp.ne.s32.totalorder %s243, %s244
    %p256 = scmp.eq.s32.totalorder %s24, 1
    %p257 = por %p255, %p256
    %p259 = scmp.ne.s32.totalorder %s244, %s258
    %p260 = scmp.eq.s32.totalorder %s24, 0
    %p261 = por %p259, %p260
    %s263 = sadd.s32 %s262, 1
    %p266 = scmp.eq.s32.totalorder %s18, 1
    %p267 = scmp.ne.s32.totalorder %s262, %s264
    %p268 = scmp.eq.s32.totalorder %s18, 0
    %p269 = por %p267, %p268
    %p270 = scmp.ne.s32.totalorder %s262, %s264
    %p271 = scmp.eq.s32.totalorder %s23, 1
    %p272 = por %p270, %p271
    %p273 = scmp.ne.s32.totalorder %s264, %s265
    %p274 = scmp.eq.s32.totalorder %s23, 0
    %p275 = por %p273, %p274
    %p276 = scmp.ne.s32.totalorder %s264, %s265
    %p277 = scmp.eq.s32.totalorder %s24, 1
    %p278 = por %p276, %p277
    %p280 = scmp.ne.s32.totalorder %s265, %s279
    %p281 = scmp.eq.s32.totalorder %s24, 0
    %p282 = por %p280, %p281
    %s284 = sadd.s32 %s283, 1
    %p287 = scmp.eq.s32.totalorder %s18, 1
    %p288 = scmp.ne.s32.totalorder %s283, %s285
    %p289 = scmp.eq.s32.totalorder %s18, 0
    %p290 = por %p288, %p289
    %p291 = scmp.ne.s32.totalorder %s283, %s285
    %p292 = scmp.eq.s32.totalorder %s23, 1
    %p293 = por %p291, %p292
    %p294 = scmp.ne.s32.totalorder %s285, %s286
    %p295 = scmp.eq.s32.totalorder %s23, 0
    %p296 = por %p294, %p295
    %p297 = scmp.ne.s32.totalorder %s285, %s286
    %p298 = scmp.eq.s32.totalorder %s24, 1
    %p299 = por %p297, %p298
    %p301 = scmp.ne.s32.totalorder %s286, %s300
    %p302 = scmp.eq.s32.totalorder %s24, 0
    %p303 = por %p301, %p302
    %p304 = scmp.le.s32.totalorder 1, %s18
    %p305 = scmp.lt.s32.totalorder %s18, 3
    %p306 = pnand %p304, %p305
    %p307 = pneg %p306
    // Predicated region
    $region9: #{lstm_attention_forward.1} parent=5 // pred_check
      _
    $region10: #{lstm_attention_forward.1} parent=5 // pred_check_branch
      %309 = sbr.rel (%p306) target = $region12
    $region11: #{lstm_attention_forward.1} parent=5 // pred_region
      %s310 = ssub.s32 %s18, 1
      // Predicated region
      $region13: #{lstm_attention_forward.1} parent=11 // pred_check
        %p311 = pneg %p65
      $region14: #{lstm_attention_forward.1} parent=11 // pred_check_branch
        %313 = sbr.rel (%p311) target = $region16
      $region15: #{lstm_attention_forward.1} parent=11 // pred_region
        _
      $region16: #{lstm_attention_forward.1} parent=11 // pred_fallthru
        _
      // Predicated region
      $region17: #{lstm_attention_forward.1} parent=11 // pred_check
        %p314 = pneg %p86
      $region18: #{lstm_attention_forward.1} parent=11 // pred_check_branch
        %316 = sbr.rel (%p314) target = $region20
      $region19: #{lstm_attention_forward.1} parent=11 // pred_region
        _
      $region20: #{lstm_attention_forward.1} parent=11 // pred_fallthru
        _
      // Predicated region
      $region21: #{lstm_attention_forward.1} parent=11 // pred_check
        %p317 = pneg %p107
      $region22: #{lstm_attention_forward.1} parent=11 // pred_check_branch
        %319 = sbr.rel (%p317) target = $region24
      $region23: #{lstm_attention_forward.1} parent=11 // pred_region
        _
      $region24: #{lstm_attention_forward.1} parent=11 // pred_fallthru
        _
      // Predicated region
      $region25: #{lstm_attention_forward.1} parent=11 // pred_check
        %p320 = pneg %p128
      $region26: #{lstm_attention_forward.1} parent=11 // pred_check_branch
        %322 = sbr.rel (%p320) target = $region28
      $region27: #{lstm_attention_forward.1} parent=11 // pred_region
        _
      $region28: #{lstm_attention_forward.1} parent=11 // pred_fallthru
        _
      // Predicated region
      $region29: #{lstm_attention_forward.1} parent=11 // pred_check
        %p323 = pneg %p149
      $region30: #{lstm_attention_forward.1} parent=11 // pred_check_branch
        %325 = sbr.rel (%p323) target = $region32
      $region31: #{lstm_attention_forward.1} parent=11 // pred_region
        _
      $region32: #{lstm_attention_forward.1} parent=11 // pred_fallthru
        _
      // Predicated region
      $region33: #{lstm_attention_forward.1} parent=11 // pred_check
        %p326 = pneg %p170
      $region34: #{lstm_attention_forward.1} parent=11 // pred_check_branch
        %328 = sbr.rel (%p326) target = $region36
      $region35: #{lstm_attention_forward.1} parent=11 // pred_region
        _
      $region36: #{lstm_attention_forward.1} parent=11 // pred_fallthru
        _
      // Predicated region
      $region37: #{lstm_attention_forward.1} parent=11 // pred_check
        %p329 = pneg %p191
      $region38: #{lstm_attention_forward.1} parent=11 // pred_check_branch
        %331 = sbr.rel (%p329) target = $region40
      $region39: #{lstm_attention_forward.1} parent=11 // pred_region
        _
      $region40: #{lstm_attention_forward.1} parent=11 // pred_fallthru
        _
      // Predicated region
      $region41: #{lstm_attention_forward.1} parent=11 // pred_check
        %p332 = pneg %p212
      $region42: #{lstm_attention_forward.1} parent=11 // pred_check_branch
        %334 = sbr.rel (%p332) target = $region44
      $region43: #{lstm_attention_forward.1} parent=11 // pred_region
        _
      $region44: #{lstm_attention_forward.1} parent=11 // pred_fallthru
        _
      // Predicated region
      $region45: #{lstm_attention_forward.1} parent=11 // pred_check
        %p335 = pneg %p233
      $region46: #{lstm_attention_forward.1} parent=11 // pred_check_branch
        %337 = sbr.rel (%p335) target = $region48
      $region47: #{lstm_attention_forward.1} parent=11 // pred_region
        _
      $region48: #{lstm_attention_forward.1} parent=11 // pred_fallthru
        _
      // Predicated region
      $region49: #{lstm_attention_forward.1} parent=11 // pred_check
        %p338 = pneg %p254
      $region50: #{lstm_attention_forward.1} parent=11 // pred_check_branch
        %340 = sbr.rel (%p338) target = $region52
      $region51: #{lstm_attention_forward.1} parent=11 // pred_region
        _
      $region52: #{lstm_attention_forward.1} parent=11 // pred_fallthru
        _
      // Predicated region
      $region53: #{lstm_attention_forward.1} parent=11 // pred_check
        %p341 = pneg %p275
      $region54: #{lstm_attention_forward.1} parent=11 // pred_check_branch
        %343 = sbr.rel (%p341) target = $region56
      $region55: #{lstm_attention_forward.1} parent=11 // pred_region
        _
      $region56: #{lstm_attention_forward.1} parent=11 // pred_fallthru
        _
    $region12: #{lstm_attention_forward.1} parent=5 // pred_fallthru
      _
    %p344 = scmp.lt.s32.totalorder %s18, 2
    // Predicated region
    $region57: #{lstm_attention_forward.1} parent=5 // pred_check
      %p345 = pneg %p344
    $region58: #{lstm_attention_forward.1} parent=5 // pred_check_branch
      %347 = sbr.rel (%p345) target = $region60
    $region59: #{lstm_attention_forward.1} parent=5 // pred_region
      // Predicated region
      $region61: #{lstm_attention_forward.1} parent=59 // pred_check
        %p348 = pneg %p38
      $region62: #{lstm_attention_forward.1} parent=59 // pred_check_branch
        %350 = sbr.rel (%p348) target = $region64
      $region63: #{lstm_attention_forward.1} parent=59 // pred_region
        %s351 = smul.u32 4, %s18
        %p352 = scmp.lt.s32.totalorder %s351, 7
        %s353 = scalar_select %p352, %s351, 7
        %s354 = smul.addr %s353, 4
        %s355 = smul.addr %s354, 8
        %s356 = scalar_lea.vmem %s0, %s355
        %s357 = smul.u32 4, %s18
      $region64: #{lstm_attention_forward.1} parent=59 // pred_fallthru
        _
    $region60: #{lstm_attention_forward.1} parent=5 // pred_fallthru
      _
    %p358 = scmp.le.s32.totalorder 1, %s18
    %p359 = scmp.lt.s32.totalorder %s18, 3
    %p360 = pnand %p358, %p359
    %p361 = pneg %p360
    // Predicated region
    $region65: #{lstm_attention_forward.1} parent=5 // pred_check
      _
    $region66: #{lstm_attention_forward.1} parent=5 // pred_check_branch
      %363 = sbr.rel (%p360) target = $region68
    $region67: #{lstm_attention_forward.1} parent=5 // pred_region
      %s364 = ssub.s32 %s18, 1
      %s365 = smul.u32 4, %s23
      %p366 = scmp.lt.s32.totalorder %s365, 7
      %s367 = scalar_select %p366, %s365, 7
      %s368 = smul.addr %s367, 4
      %s369 = smul.addr %s368, 8
      %s370 = scalar_lea.vmem %s0, %s369
      %p371 = pneg %p44
      %p372 = pneg %p41
      %p373 = pneg %p65
      %p374 = pneg %p62
      %p375 = pneg %p86
      %p376 = pneg %p83
      %p377 = pneg %p107
      %p378 = pneg %p104
      %p379 = pneg %p128
      %p380 = pneg %p125
      %p381 = pneg %p149
      %p382 = pneg %p146
      %p383 = pneg %p170
      %p384 = pneg %p167
      %p385 = pneg %p191
      %p386 = pneg %p188
      %p387 = pneg %p212
      %p388 = pneg %p209
      %p389 = pneg %p233
      %p390 = pneg %p230
      %p391 = pneg %p254
      %p392 = pneg %p251
      %p393 = pneg %p275
      %p394 = pneg %p272
      %p395 = pneg %p296
      %p396 = pneg %p293
      %s397 = smul.u32 4, %s23
      %p398 = scmp.lt.s32.totalorder %s397, 7
      %s399 = scalar_select %p398, %s397, 7
      %s400 = smul.addr %s399, 4
      %s401 = smul.addr %s400, 8
      %s402 = scalar_lea.vmem %s0, %s401
      %s403 = smul.u32 4, %s23
      %p404 = scmp.eq.s32.totalorder %s23, 0
      // Predicated region
      $region69: #{lstm_attention_forward.1} parent=67 // pred_check
        %p405 = pneg %p404
      $region70: #{lstm_attention_forward.1} parent=67 // pred_check_branch
        %407 = sbr.rel (%p405) target = $region72
      $region71: #{lstm_attention_forward.1} parent=67 // pred_region
        %408 = vst [vmem:[#allocation2] sm:$0xff] 0.0
        %409 = vst [vmem:[#allocation2 + $0x8] sm:$0xff] 0.0
        %410 = vst [vmem:[#allocation2 + $0x10] sm:$0xff] 0.0
        %411 = vst [vmem:[#allocation2 + $0x18] sm:$0xff] 0.0
        %412 = vst [vmem:[#allocation3] sm:$0xff] 0.0
      $region72: #{lstm_attention_forward.1} parent=67 // pred_fallthru
        _
      %v413 = vld [vmem:[%s1] sm:$0xff]
      %v414 = vld [vmem:[%s1 + $0x8] sm:$0xff]
      %v415 = vld [vmem:[%s1 + $0x10] sm:$0xff]
      %v416 = vld [vmem:[%s1 + $0x18] sm:$0xff]
      %v417 = vld [vmem:[%s1 + $0x20] sm:$0xff]
      %v418 = vld [vmem:[%s1 + $0x28] sm:$0xff]
      %v419 = vld [vmem:[%s1 + $0x30] sm:$0xff]
      %v420 = vld [vmem:[%s1 + $0x38] sm:$0xff]
      %v421 = vld [vmem:[%s1 + $0x40] sm:$0xff]
      %v422 = vld [vmem:[%s1 + $0x48] sm:$0xff]
      %v423 = vld [vmem:[%s1 + $0x50] sm:$0xff]
      %v424 = vld [vmem:[%s1 + $0x58] sm:$0xff]
      %v425 = vld [vmem:[%s1 + $0x60] sm:$0xff]
      %v426 = vld [vmem:[%s1 + $0x68] sm:$0xff]
      %v427 = vld [vmem:[%s1 + $0x70] sm:$0xff]
      %v428 = vld [vmem:[%s1 + $0x78] sm:$0xff]
      %v429 = vld [vmem:[%s1 + $0x80] sm:$0xff]
      %v430 = vld [vmem:[%s1 + $0x88] sm:$0xff]
      %v431 = vld [vmem:[%s1 + $0x90] sm:$0xff]
      %v432 = vld [vmem:[%s1 + $0x98] sm:$0xff]
      %v433 = vld [vmem:[%s1 + $0xa0] sm:$0xff]
      %v434 = vld [vmem:[%s1 + $0xa8] sm:$0xff]
      %v435 = vld [vmem:[%s1 + $0xb0] sm:$0xff]
      %v436 = vld [vmem:[%s1 + $0xb8] sm:$0xff]
      %v437 = vld [vmem:[%s1 + $0xc0] sm:$0xff]
      %v438 = vld [vmem:[%s1 + $0xc8] sm:$0xff]
      %v439 = vld [vmem:[%s1 + $0xd0] sm:$0xff]
      %v440 = vld [vmem:[%s1 + $0xd8] sm:$0xff]
      %v441 = vld [vmem:[%s1 + $0xe0] sm:$0xff]
      %v442 = vld [vmem:[%s1 + $0xe8] sm:$0xff]
      %v443 = vld [vmem:[%s1 + $0xf0] sm:$0xff]
      %v444 = vld [vmem:[%s1 + $0xf8] sm:$0xff]
      %v445 = vld [vmem:[%s2] sm:$0xff]
      %v446 = vld [vmem:[%s2 + $0x8] sm:$0xff]
      %v447 = vld [vmem:[%s2 + $0x10] sm:$0xff]
      %v448 = vld [vmem:[%s2 + $0x18] sm:$0xff]
      %v449 = vld [vmem:[%s2 + $0x20] sm:$0xff]
      %v450 = vld [vmem:[%s2 + $0x28] sm:$0xff]
      %v451 = vld [vmem:[%s2 + $0x30] sm:$0xff]
      %v452 = vld [vmem:[%s2 + $0x38] sm:$0xff]
      %v453 = vld [vmem:[%s2 + $0x40] sm:$0xff]
      %v454 = vld [vmem:[%s2 + $0x48] sm:$0xff]
      %v455 = vld [vmem:[%s2 + $0x50] sm:$0xff]
      %v456 = vld [vmem:[%s2 + $0x58] sm:$0xff]
      %v457 = vld [vmem:[%s2 + $0x60] sm:$0xff]
      %v458 = vld [vmem:[%s2 + $0x68] sm:$0xff]
      %v459 = vld [vmem:[%s2 + $0x70] sm:$0xff]
      %v460 = vld [vmem:[%s2 + $0x78] sm:$0xff]
      %v461 = vld [vmem:[%s2 + $0x80] sm:$0xff]
      %v462 = vld [vmem:[%s2 + $0x88] sm:$0xff]
      %v463 = vld [vmem:[%s2 + $0x90] sm:$0xff]
      %v464 = vld [vmem:[%s2 + $0x98] sm:$0xff]
      %v465 = vld [vmem:[%s2 + $0xa0] sm:$0xff]
      %v466 = vld [vmem:[%s2 + $0xa8] sm:$0xff]
      %v467 = vld [vmem:[%s2 + $0xb0] sm:$0xff]
      %v468 = vld [vmem:[%s2 + $0xb8] sm:$0xff]
      %v469 = vld [vmem:[%s2 + $0xc0] sm:$0xff]
      %v470 = vld [vmem:[%s2 + $0xc8] sm:$0xff]
      %v471 = vld [vmem:[%s2 + $0xd0] sm:$0xff]
      %v472 = vld [vmem:[%s2 + $0xd8] sm:$0xff]
      %v473 = vld [vmem:[%s2 + $0xe0] sm:$0xff]
      %v474 = vld [vmem:[%s2 + $0xe8] sm:$0xff]
      %v475 = vld [vmem:[%s2 + $0xf0] sm:$0xff]
      %v476 = vld [vmem:[%s2 + $0xf8] sm:$0xff]
      %v477 = vld [vmem:[%s2 + $0x100] sm:$0xff]
      %v478 = vld [vmem:[%s2 + $0x108] sm:$0xff]
      %v479 = vld [vmem:[%s2 + $0x110] sm:$0xff]
      %v480 = vld [vmem:[%s2 + $0x118] sm:$0xff]
      %v481 = vld [vmem:[%s2 + $0x120] sm:$0xff]
      %v482 = vld [vmem:[%s2 + $0x128] sm:$0xff]
      %v483 = vld [vmem:[%s2 + $0x130] sm:$0xff]
      %v484 = vld [vmem:[%s2 + $0x138] sm:$0xff]
      %v485 = vld [vmem:[%s2 + $0x140] sm:$0xff]
      %v486 = vld [vmem:[%s2 + $0x148] sm:$0xff]
      %v487 = vld [vmem:[%s2 + $0x150] sm:$0xff]
      %v488 = vld [vmem:[%s2 + $0x158] sm:$0xff]
      %v489 = vld [vmem:[%s2 + $0x160] sm:$0xff]
      %v490 = vld [vmem:[%s2 + $0x168] sm:$0xff]
      %v491 = vld [vmem:[%s2 + $0x170] sm:$0xff]
      %v492 = vld [vmem:[%s2 + $0x178] sm:$0xff]
      %v493 = vld [vmem:[%s2 + $0x180] sm:$0xff]
      %v494 = vld [vmem:[%s2 + $0x188] sm:$0xff]
      %v495 = vld [vmem:[%s2 + $0x190] sm:$0xff]
      %v496 = vld [vmem:[%s2 + $0x198] sm:$0xff]
      %v497 = vld [vmem:[%s2 + $0x1a0] sm:$0xff]
      %v498 = vld [vmem:[%s2 + $0x1a8] sm:$0xff]
      %v499 = vld [vmem:[%s2 + $0x1b0] sm:$0xff]
      %v500 = vld [vmem:[%s2 + $0x1b8] sm:$0xff]
      %v501 = vld [vmem:[%s2 + $0x1c0] sm:$0xff]
      %v502 = vld [vmem:[%s2 + $0x1c8] sm:$0xff]
      %v503 = vld [vmem:[%s2 + $0x1d0] sm:$0xff]
      %v504 = vld [vmem:[%s2 + $0x1d8] sm:$0xff]
      %v505 = vld [vmem:[%s2 + $0x1e0] sm:$0xff]
      %v506 = vld [vmem:[%s2 + $0x1e8] sm:$0xff]
      %v507 = vld [vmem:[%s2 + $0x1f0] sm:$0xff]
      %v508 = vld [vmem:[%s2 + $0x1f8] sm:$0xff]
      %v509 = vld [vmem:[%s3] sm:$0xf]
      %v511 = vperm.slane %v509, 0
      %v512 = vperm.slane %v509, 1
      %v513 = vperm.slane %v509, 2
      %v514 = vperm.slane %v509, 3
      %v519 = vld [vmem:[%s4] sm:$0x1]
      %v521 = vperm.slane %v519, 0
      %v523 = vld [vmem:[%s5] sm:$0xff]
      %v524 = vsub.f32 1.0, %v523
      %v525 = vmul.f32 %v524, -1e+30
      %v526 = vld [vmem:[#allocation2] sm:$0xff]
      %v527 = vpack.c.bf16 %v526, %v526
      %s528 = scalar_lea.vmem [#allocation2], 8
      %v529 = vld [vmem:[%s528] sm:$0xff]
      %s530 = scalar_lea.vmem [#allocation2], 16
      %v531 = vld [vmem:[%s530] sm:$0xff]
      %v532 = vpack.c.bf16 %v531, %v531
      %s533 = scalar_lea.vmem [#allocation2], 24
      %v534 = vld [vmem:[%s533] sm:$0xff]
      %v535 = vld [vmem:[#allocation3] sm:$0xff]
      %s536 = smul.u32 0, 4
      %s537 = smul.addr %s536, 8
      %s538 = scalar_lea.vmem %s402, %s537
      %v539 = vld [vmem:[%s538] sm:$0xff]
      %v540 = vld [vmem:[%s538 + $0x8] sm:$0xff]
      %v541 = vld [vmem:[%s538 + $0x10] sm:$0xff]
      %v542 = vld [vmem:[%s538 + $0x18] sm:$0xff]
      %v575 = vunpack.c.l.b16 %v413
      %v576 = vunpack.c.h.b16 %v413
      %v577 = vunpack.c.l.b16 %v414
      %v578 = vunpack.c.h.b16 %v414
      %v579 = vunpack.c.l.b16 %v415
      %v580 = vunpack.c.h.b16 %v415
      %v581 = vunpack.c.l.b16 %v416
      %v582 = vunpack.c.h.b16 %v416
      %v583 = vunpack.c.l.b16 %v417
      %v584 = vunpack.c.h.b16 %v417
      %v585 = vunpack.c.l.b16 %v418
      %v586 = vunpack.c.h.b16 %v418
      %v587 = vunpack.c.l.b16 %v419
      %v588 = vunpack.c.h.b16 %v419
      %v589 = vunpack.c.l.b16 %v420
      %v590 = vunpack.c.h.b16 %v420
      %v591 = vunpack.c.l.b16 %v421
      %v592 = vunpack.c.h.b16 %v421
      %v593 = vunpack.c.l.b16 %v422
      %v594 = vunpack.c.h.b16 %v422
      %v595 = vunpack.c.l.b16 %v423
      %v596 = vunpack.c.h.b16 %v423
      %v597 = vunpack.c.l.b16 %v424
      %v598 = vunpack.c.h.b16 %v424
      %v599 = vunpack.c.l.b16 %v425
      %v600 = vunpack.c.h.b16 %v425
      %v601 = vunpack.c.l.b16 %v426
      %v602 = vunpack.c.h.b16 %v426
      %v603 = vunpack.c.l.b16 %v427
      %v604 = vunpack.c.h.b16 %v427
      %v605 = vunpack.c.l.b16 %v428
      %v606 = vunpack.c.h.b16 %v428
      %v607 = vunpack.c.l.b16 %v429
      %v608 = vunpack.c.h.b16 %v429
      %v609 = vunpack.c.l.b16 %v430
      %v610 = vunpack.c.h.b16 %v430
      %v611 = vunpack.c.l.b16 %v431
      %v612 = vunpack.c.h.b16 %v431
      %v613 = vunpack.c.l.b16 %v432
      %v614 = vunpack.c.h.b16 %v432
      %v615 = vunpack.c.l.b16 %v433
      %v616 = vunpack.c.h.b16 %v433
      %v617 = vunpack.c.l.b16 %v434
      %v618 = vunpack.c.h.b16 %v434
      %v619 = vunpack.c.l.b16 %v435
      %v620 = vunpack.c.h.b16 %v435
      %v621 = vunpack.c.l.b16 %v436
      %v622 = vunpack.c.h.b16 %v436
      %v623 = vunpack.c.l.b16 %v437
      %v624 = vunpack.c.h.b16 %v437
      %v625 = vunpack.c.l.b16 %v438
      %v626 = vunpack.c.h.b16 %v438
      %v627 = vunpack.c.l.b16 %v439
      %v628 = vunpack.c.h.b16 %v439
      %v629 = vunpack.c.l.b16 %v440
      %v630 = vunpack.c.h.b16 %v440
      %v631 = vunpack.c.l.b16 %v441
      %v632 = vunpack.c.h.b16 %v441
      %v633 = vunpack.c.l.b16 %v442
      %v634 = vunpack.c.h.b16 %v442
      %v635 = vunpack.c.l.b16 %v443
      %v636 = vunpack.c.h.b16 %v443
      %v637 = vunpack.c.l.b16 %v444
      %v638 = vunpack.c.h.b16 %v444
      %v639 = vpack.c.b16 %v579, %v575
      %v640 = vpack.c.b16 %v580, %v576
      %v641 = vpack.c.b16 %v581, %v577
      %v642 = vpack.c.b16 %v582, %v578
      %v643 = vpack.c.b16 %v587, %v583
      %v644 = vpack.c.b16 %v588, %v584
      %v645 = vpack.c.b16 %v589, %v585
      %v646 = vpack.c.b16 %v590, %v586
      %v647 = vpack.c.b16 %v595, %v591
      %v648 = vpack.c.b16 %v596, %v592
      %v649 = vpack.c.b16 %v597, %v593
      %v650 = vpack.c.b16 %v598, %v594
      %v651 = vpack.c.b16 %v603, %v599
      %v652 = vpack.c.b16 %v604, %v600
      %v653 = vpack.c.b16 %v605, %v601
      %v654 = vpack.c.b16 %v606, %v602
      %v655 = vpack.c.b16 %v611, %v607
      %v656 = vpack.c.b16 %v612, %v608
      %v657 = vpack.c.b16 %v613, %v609
      %v658 = vpack.c.b16 %v614, %v610
      %v659 = vpack.c.b16 %v619, %v615
      %v660 = vpack.c.b16 %v620, %v616
      %v661 = vpack.c.b16 %v621, %v617
      %v662 = vpack.c.b16 %v622, %v618
      %v663 = vpack.c.b16 %v627, %v623
      %v664 = vpack.c.b16 %v628, %v624
      %v665 = vpack.c.b16 %v629, %v625
      %v666 = vpack.c.b16 %v630, %v626
      %v667 = vpack.c.b16 %v635, %v631
      %v668 = vpack.c.b16 %v636, %v632
      %v669 = vpack.c.b16 %v637, %v633
      %v670 = vpack.c.b16 %v638, %v634
      %703 = vmatpush.bf16.msra.mxu0 %v667
      %704 = vmatpush.bf16.msra.mxu0 %v663
      %705 = vmatpush.bf16.msra.mxu0 %v659
      %706 = vmatpush.bf16.msra.mxu0 %v655
      %707 = vmatpush.bf16.msra.mxu0 %v651
      %708 = vmatpush.bf16.msra.mxu0 %v647
      %709 = vmatpush.bf16.msra.mxu0 %v643
      %710 = vmatpush.bf16.msra.mxu0 %v639
      %711 = vmatmul.bf16.gmra.mxu0 %v527
      %v712 = vpop.f32.mrf.mxu0
      %v713 = vadd.f32 0.0, %v712
      %v714 = vpop.f32.mrf.mxu0
      %715 = vdwg.mxu0
      %716 = vmatpush.bf16.msra.mxu0 %v668
      %717 = vmatpush.bf16.msra.mxu0 %v664
      %718 = vmatpush.bf16.msra.mxu0 %v660
      %719 = vmatpush.bf16.msra.mxu0 %v656
      %720 = vmatpush.bf16.msra.mxu0 %v652
      %721 = vmatpush.bf16.msra.mxu0 %v648
      %722 = vmatpush.bf16.msra.mxu0 %v644
      %723 = vmatpush.bf16.msra.mxu0 %v640
      %724 = vmatmul.bf16.gmra.mxu0 %v527
      %v725 = vpop.f32.mrf.mxu0
      %v726 = vadd.f32 0.0, %v725
      %v727 = vpop.f32.mrf.mxu0
      %728 = vdwg.mxu0
      %729 = vmatpush.bf16.msra.mxu0 %v669
      %730 = vmatpush.bf16.msra.mxu0 %v665
      %731 = vmatpush.bf16.msra.mxu0 %v661
      %732 = vmatpush.bf16.msra.mxu0 %v657
      %733 = vmatpush.bf16.msra.mxu0 %v653
      %734 = vmatpush.bf16.msra.mxu0 %v649
      %735 = vmatpush.bf16.msra.mxu0 %v645
      %736 = vmatpush.bf16.msra.mxu0 %v641
      %737 = vmatmul.bf16.gmra.mxu0 %v527
      %v738 = vpop.f32.mrf.mxu0
      %v739 = vadd.f32 0.0, %v738
      %v740 = vpop.f32.mrf.mxu0
      %741 = vdwg.mxu0
      %742 = vmatpush.bf16.msra.mxu0 %v670
      %743 = vmatpush.bf16.msra.mxu0 %v666
      %744 = vmatpush.bf16.msra.mxu0 %v662
      %745 = vmatpush.bf16.msra.mxu0 %v658
      %746 = vmatpush.bf16.msra.mxu0 %v654
      %747 = vmatpush.bf16.msra.mxu0 %v650
      %748 = vmatpush.bf16.msra.mxu0 %v646
      %749 = vmatpush.bf16.msra.mxu0 %v642
      %750 = vmatmul.bf16.gmra.mxu0 %v527
      %v751 = vpop.f32.mrf.mxu0
      %v752 = vadd.f32 0.0, %v751
      %v753 = vpop.f32.mrf.mxu0
      %754 = vdwg.mxu0
      %v755 = vadd.f32 %v539, %v713
      %v756 = vadd.f32 %v540, %v726
      %v757 = vadd.f32 %v541, %v739
      %v758 = vadd.f32 %v542, %v752
      %v759 = vxor.u32 %v755, 2147483648
      %v760 = vmul.f32 %v759, 1.442695
      %v761 = vpow.pop %v760
      %v762 = vadd.f32 %v761, 1.0
      %v763 = vrcp.pop %v762
      %v764 = vmul.f32 %v762, %v763
      %v765 = vsub.f32 1.0, %v764
      %v766 = vmul.f32 %v763, %v765
      %v767 = vadd.f32 %v763, %v766
      %vm768 = vweird.f32 %v762
      %vm769 = vweird.f32 %v763
      %vm770 = vmor %vm768, %vm769
      %v771 = vsel %vm770, %v763, %v767
      %v772 = vand.u32 2147483647, %v762
      %vm773 = vcmp.eq.f32.partialorder %v772, 8.507059e+37
      %v774 = vand.u32 %v762, 2147483648
      %v775 = vor.u32 1.1754944e-38, %v774
      %v776 = vsel %vm773, %v775, %v771
      %v777 = vmul.f32 1.0, %v776
      %v778 = vxor.u32 %v756, 2147483648
      %v779 = vmul.f32 %v778, 1.442695
      %v780 = vpow.pop %v779
      %v781 = vadd.f32 %v780, 1.0
      %v782 = vrcp.pop %v781
      %v783 = vmul.f32 %v781, %v782
      %v784 = vsub.f32 1.0, %v783
      %v785 = vmul.f32 %v782, %v784
      %v786 = vadd.f32 %v782, %v785
      %vm787 = vweird.f32 %v781
      %vm788 = vweird.f32 %v782
      %vm789 = vmor %vm787, %vm788
      %v790 = vsel %vm789, %v782, %v786
      %v791 = vand.u32 2147483647, %v781
      %vm792 = vcmp.eq.f32.partialorder %v791, 8.507059e+37
      %v793 = vand.u32 %v781, 2147483648
      %v794 = vor.u32 1.1754944e-38, %v793
      %v795 = vsel %vm792, %v794, %v790
      %v796 = vmul.f32 1.0, %v795
      %v797 = vtanh.pop %v757
      %v798 = vxor.u32 %v758, 2147483648
      %v799 = vmul.f32 %v798, 1.442695
      %v800 = vpow.pop %v799
      %v801 = vadd.f32 %v800, 1.0
      %v802 = vrcp.pop %v801
      %v803 = vmul.f32 %v801, %v802
      %v804 = vsub.f32 1.0, %v803
      %v805 = vmul.f32 %v802, %v804
      %v806 = vadd.f32 %v802, %v805
      %vm807 = vweird.f32 %v801
      %vm808 = vweird.f32 %v802
      %vm809 = vmor %vm807, %vm808
      %v810 = vsel %vm809, %v802, %v806
      %v811 = vand.u32 2147483647, %v801
      %vm812 = vcmp.eq.f32.partialorder %v811, 8.507059e+37
      %v813 = vand.u32 %v801, 2147483648
      %v814 = vor.u32 1.1754944e-38, %v813
      %v815 = vsel %vm812, %v814, %v810
      %v816 = vmul.f32 1.0, %v815
      %v817 = vmul.f32 %v796, %v529
      %v818 = vmul.f32 %v777, %v797
      %v819 = vadd.f32 %v817, %v818
      %v820 = vtanh.pop %v819
      %v821 = vmul.f32 %v816, %v820
      %v822 = vpack.c.bf16 %v821, %v821
      %v887 = vunpack.c.l.b16 %v445
      %v888 = vunpack.c.h.b16 %v445
      %v889 = vunpack.c.l.b16 %v446
      %v890 = vunpack.c.h.b16 %v446
      %v891 = vunpack.c.l.b16 %v447
      %v892 = vunpack.c.h.b16 %v447
      %v893 = vunpack.c.l.b16 %v448
      %v894 = vunpack.c.h.b16 %v448
      %v895 = vunpack.c.l.b16 %v449
      %v896 = vunpack.c.h.b16 %v449
      %v897 = vunpack.c.l.b16 %v450
      %v898 = vunpack.c.h.b16 %v450
      %v899 = vunpack.c.l.b16 %v451
      %v900 = vunpack.c.h.b16 %v451
      %v901 = vunpack.c.l.b16 %v452
      %v902 = vunpack.c.h.b16 %v452
      %v903 = vunpack.c.l.b16 %v453
      %v904 = vunpack.c.h.b16 %v453
      %v905 = vunpack.c.l.b16 %v454
      %v906 = vunpack.c.h.b16 %v454
      %v907 = vunpack.c.l.b16 %v455
      %v908 = vunpack.c.h.b16 %v455
      %v909 = vunpack.c.l.b16 %v456
      %v910 = vunpack.c.h.b16 %v456
      %v911 = vunpack.c.l.b16 %v457
      %v912 = vunpack.c.h.b16 %v457
      %v913 = vunpack.c.l.b16 %v458
      %v914 = vunpack.c.h.b16 %v458
      %v915 = vunpack.c.l.b16 %v459
      %v916 = vunpack.c.h.b16 %v459
      %v917 = vunpack.c.l.b16 %v460
      %v918 = vunpack.c.h.b16 %v460
      %v919 = vunpack.c.l.b16 %v461
      %v920 = vunpack.c.h.b16 %v461
      %v921 = vunpack.c.l.b16 %v462
      %v922 = vunpack.c.h.b16 %v462
      %v923 = vunpack.c.l.b16 %v463
      %v924 = vunpack.c.h.b16 %v463
      %v925 = vunpack.c.l.b16 %v464
      %v926 = vunpack.c.h.b16 %v464
      %v927 = vunpack.c.l.b16 %v465
      %v928 = vunpack.c.h.b16 %v465
      %v929 = vunpack.c.l.b16 %v466
      %v930 = vunpack.c.h.b16 %v466
      %v931 = vunpack.c.l.b16 %v467
      %v932 = vunpack.c.h.b16 %v467
      %v933 = vunpack.c.l.b16 %v468
      %v934 = vunpack.c.h.b16 %v468
      %v935 = vunpack.c.l.b16 %v469
      %v936 = vunpack.c.h.b16 %v469
      %v937 = vunpack.c.l.b16 %v470
      %v938 = vunpack.c.h.b16 %v470
      %v939 = vunpack.c.l.b16 %v471
      %v940 = vunpack.c.h.b16 %v471
      %v941 = vunpack.c.l.b16 %v472
      %v942 = vunpack.c.h.b16 %v472
      %v943 = vunpack.c.l.b16 %v473
      %v944 = vunpack.c.h.b16 %v473
      %v945 = vunpack.c.l.b16 %v474
      %v946 = vunpack.c.h.b16 %v474
      %v947 = vunpack.c.l.b16 %v475
      %v948 = vunpack.c.h.b16 %v475
      %v949 = vunpack.c.l.b16 %v476
      %v950 = vunpack.c.h.b16 %v476
      %v951 = vunpack.c.l.b16 %v477
      %v952 = vunpack.c.h.b16 %v477
      %v953 = vunpack.c.l.b16 %v478
      %v954 = vunpack.c.h.b16 %v478
      %v955 = vunpack.c.l.b16 %v479
      %v956 = vunpack.c.h.b16 %v479
      %v957 = vunpack.c.l.b16 %v480
      %v958 = vunpack.c.h.b16 %v480
      %v959 = vunpack.c.l.b16 %v481
      %v960 = vunpack.c.h.b16 %v481
      %v961 = vunpack.c.l.b16 %v482
      %v962 = vunpack.c.h.b16 %v482
      %v963 = vunpack.c.l.b16 %v483
      %v964 = vunpack.c.h.b16 %v483
      %v965 = vunpack.c.l.b16 %v484
      %v966 = vunpack.c.h.b16 %v484
      %v967 = vunpack.c.l.b16 %v485
      %v968 = vunpack.c.h.b16 %v485
      %v969 = vunpack.c.l.b16 %v486
      %v970 = vunpack.c.h.b16 %v486
      %v971 = vunpack.c.l.b16 %v487
      %v972 = vunpack.c.h.b16 %v487
      %v973 = vunpack.c.l.b16 %v488
      %v974 = vunpack.c.h.b16 %v488
      %v975 = vunpack.c.l.b16 %v489
      %v976 = vunpack.c.h.b16 %v489
      %v977 = vunpack.c.l.b16 %v490
      %v978 = vunpack.c.h.b16 %v490
      %v979 = vunpack.c.l.b16 %v491
      %v980 = vunpack.c.h.b16 %v491
      %v981 = vunpack.c.l.b16 %v492
      %v982 = vunpack.c.h.b16 %v492
      %v983 = vunpack.c.l.b16 %v493
      %v984 = vunpack.c.h.b16 %v493
      %v985 = vunpack.c.l.b16 %v494
      %v986 = vunpack.c.h.b16 %v494
      %v987 = vunpack.c.l.b16 %v495
      %v988 = vunpack.c.h.b16 %v495
      %v989 = vunpack.c.l.b16 %v496
      %v990 = vunpack.c.h.b16 %v496
      %v991 = vunpack.c.l.b16 %v497
      %v992 = vunpack.c.h.b16 %v497
      %v993 = vunpack.c.l.b16 %v498
      %v994 = vunpack.c.h.b16 %v498
      %v995 = vunpack.c.l.b16 %v499
      %v996 = vunpack.c.h.b16 %v499
      %v997 = vunpack.c.l.b16 %v500
      %v998 = vunpack.c.h.b16 %v500
      %v999 = vunpack.c.l.b16 %v501
      %v1000 = vunpack.c.h.b16 %v501
      %v1001 = vunpack.c.l.b16 %v502
      %v1002 = vunpack.c.h.b16 %v502
      %v1003 = vunpack.c.l.b16 %v503
      %v1004 = vunpack.c.h.b16 %v503
      %v1005 = vunpack.c.l.b16 %v504
      %v1006 = vunpack.c.h.b16 %v504
      %v1007 = vunpack.c.l.b16 %v505
      %v1008 = vunpack.c.h.b16 %v505
      %v1009 = vunpack.c.l.b16 %v506
      %v1010 = vunpack.c.h.b16 %v506
      %v1011 = vunpack.c.l.b16 %v507
      %v1012 = vunpack.c.h.b16 %v507
      %v1013 = vunpack.c.l.b16 %v508
      %v1014 = vunpack.c.h.b16 %v508
      %v1015 = vpack.c.b16 %v891, %v887
      %v1016 = vpack.c.b16 %v892, %v888
      %v1017 = vpack.c.b16 %v893, %v889
      %v1018 = vpack.c.b16 %v894, %v890
      %v1019 = vpack.c.b16 %v899, %v895
      %v1020 = vpack.c.b16 %v900, %v896
      %v1021 = vpack.c.b16 %v901, %v897
      %v1022 = vpack.c.b16 %v902, %v898
      %v1023 = vpack.c.b16 %v907, %v903
      %v1024 = vpack.c.b16 %v908, %v904
      %v1025 = vpack.c.b16 %v909, %v905
      %v1026 = vpack.c.b16 %v910, %v906
      %v1027 = vpack.c.b16 %v915, %v911
      %v1028 = vpack.c.b16 %v916, %v912
      %v1029 = vpack.c.b16 %v917, %v913
      %v1030 = vpack.c.b16 %v918, %v914
      %v1031 = vpack.c.b16 %v923, %v919
      %v1032 = vpack.c.b16 %v924, %v920
      %v1033 = vpack.c.b16 %v925, %v921
      %v1034 = vpack.c.b16 %v926, %v922
      %v1035 = vpack.c.b16 %v931, %v927
      %v1036 = vpack.c.b16 %v932, %v928
      %v1037 = vpack.c.b16 %v933, %v929
      %v1038 = vpack.c.b16 %v934, %v930
      %v1039 = vpack.c.b16 %v939, %v935
      %v1040 = vpack.c.b16 %v940, %v936
      %v1041 = vpack.c.b16 %v941, %v937
      %v1042 = vpack.c.b16 %v942, %v938
      %v1043 = vpack.c.b16 %v947, %v943
      %v1044 = vpack.c.b16 %v948, %v944
      %v1045 = vpack.c.b16 %v949, %v945
      %v1046 = vpack.c.b16 %v950, %v946
      %v1047 = vpack.c.b16 %v955, %v951
      %v1048 = vpack.c.b16 %v956, %v952
      %v1049 = vpack.c.b16 %v957, %v953
      %v1050 = vpack.c.b16 %v958, %v954
      %v1051 = vpack.c.b16 %v963, %v959
      %v1052 = vpack.c.b16 %v964, %v960
      %v1053 = vpack.c.b16 %v965, %v961
      %v1054 = vpack.c.b16 %v966, %v962
      %v1055 = vpack.c.b16 %v971, %v967
      %v1056 = vpack.c.b16 %v972, %v968
      %v1057 = vpack.c.b16 %v973, %v969
      %v1058 = vpack.c.b16 %v974, %v970
      %v1059 = vpack.c.b16 %v979, %v975
      %v1060 = vpack.c.b16 %v980, %v976
      %v1061 = vpack.c.b16 %v981, %v977
      %v1062 = vpack.c.b16 %v982, %v978
      %v1063 = vpack.c.b16 %v987, %v983
      %v1064 = vpack.c.b16 %v988, %v984
      %v1065 = vpack.c.b16 %v989, %v985
      %v1066 = vpack.c.b16 %v990, %v986
      %v1067 = vpack.c.b16 %v995, %v991
      %v1068 = vpack.c.b16 %v996, %v992
      %v1069 = vpack.c.b16 %v997, %v993
      %v1070 = vpack.c.b16 %v998, %v994
      %v1071 = vpack.c.b16 %v1003, %v999
      %v1072 = vpack.c.b16 %v1004, %v1000
      %v1073 = vpack.c.b16 %v1005, %v1001
      %v1074 = vpack.c.b16 %v1006, %v1002
      %v1075 = vpack.c.b16 %v1011, %v1007
      %v1076 = vpack.c.b16 %v1012, %v1008
      %v1077 = vpack.c.b16 %v1013, %v1009
      %v1078 = vpack.c.b16 %v1014, %v1010
      %1143 = vmatpush.bf16.msra.mxu0 %v1043
      %1144 = vmatpush.bf16.msra.mxu0 %v1039
      %1145 = vmatpush.bf16.msra.mxu0 %v1035
      %1146 = vmatpush.bf16.msra.mxu0 %v1031
      %1147 = vmatpush.bf16.msra.mxu0 %v1027
      %1148 = vmatpush.bf16.msra.mxu0 %v1023
      %1149 = vmatpush.bf16.msra.mxu0 %v1019
      %1150 = vmatpush.bf16.msra.mxu0 %v1015
      %1151 = vmatmul.bf16.gmra.mxu0 %v822
      %v1152 = vpop.f32.mrf.mxu0
      %v1153 = vadd.f32 %v511, %v1152
      %v1154 = vpop.f32.mrf.mxu0
      %1155 = vdwg.mxu0
      %1156 = vmatpush.bf16.msra.mxu0 %v1075
      %1157 = vmatpush.bf16.msra.mxu0 %v1071
      %1158 = vmatpush.bf16.msra.mxu0 %v1067
      %1159 = vmatpush.bf16.msra.mxu0 %v1063
      %1160 = vmatpush.bf16.msra.mxu0 %v1059
      %1161 = vmatpush.bf16.msra.mxu0 %v1055
      %1162 = vmatpush.bf16.msra.mxu0 %v1051
      %1163 = vmatpush.bf16.msra.mxu0 %v1047
      %1164 = vmatmul.bf16.gmra.mxu0 %v532
      %v1165 = vpop.f32.mrf.mxu0
      %v1166 = vadd.f32 %v1153, %v1165
      %v1167 = vpop.f32.mrf.mxu0
      %1168 = vdwg.mxu0
      %1169 = vmatpush.bf16.msra.mxu0 %v1044
      %1170 = vmatpush.bf16.msra.mxu0 %v1040
      %1171 = vmatpush.bf16.msra.mxu0 %v1036
      %1172 = vmatpush.bf16.msra.mxu0 %v1032
      %1173 = vmatpush.bf16.msra.mxu0 %v1028
      %1174 = vmatpush.bf16.msra.mxu0 %v1024
      %1175 = vmatpush.bf16.msra.mxu0 %v1020
      %1176 = vmatpush.bf16.msra.mxu0 %v1016
      %1177 = vmatmul.bf16.gmra.mxu0 %v822
      %v1178 = vpop.f32.mrf.mxu0
      %v1179 = vadd.f32 %v512, %v1178
      %v1180 = vpop.f32.mrf.mxu0
      %1181 = vdwg.mxu0
      %1182 = vmatpush.bf16.msra.mxu0 %v1076
      %1183 = vmatpush.bf16.msra.mxu0 %v1072
      %1184 = vmatpush.bf16.msra.mxu0 %v1068
      %1185 = vmatpush.bf16.msra.mxu0 %v1064
      %1186 = vmatpush.bf16.msra.mxu0 %v1060
      %1187 = vmatpush.bf16.msra.mxu0 %v1056
      %1188 = vmatpush.bf16.msra.mxu0 %v1052
      %1189 = vmatpush.bf16.msra.mxu0 %v1048
      %1190 = vmatmul.bf16.gmra.mxu0 %v532
      %v1191 = vpop.f32.mrf.mxu0
      %v1192 = vadd.f32 %v1179, %v1191
      %v1193 = vpop.f32.mrf.mxu0
      %1194 = vdwg.mxu0
      %1195 = vmatpush.bf16.msra.mxu0 %v1045
      %1196 = vmatpush.bf16.msra.mxu0 %v1041
      %1197 = vmatpush.bf16.msra.mxu0 %v1037
      %1198 = vmatpush.bf16.msra.mxu0 %v1033
      %1199 = vmatpush.bf16.msra.mxu0 %v1029
      %1200 = vmatpush.bf16.msra.mxu0 %v1025
      %1201 = vmatpush.bf16.msra.mxu0 %v1021
      %1202 = vmatpush.bf16.msra.mxu0 %v1017
      %1203 = vmatmul.bf16.gmra.mxu0 %v822
      %v1204 = vpop.f32.mrf.mxu0
      %v1205 = vadd.f32 %v513, %v1204
      %v1206 = vpop.f32.mrf.mxu0
      %1207 = vdwg.mxu0
      %1208 = vmatpush.bf16.msra.mxu0 %v1077
      %1209 = vmatpush.bf16.msra.mxu0 %v1073
      %1210 = vmatpush.bf16.msra.mxu0 %v1069
      %1211 = vmatpush.bf16.msra.mxu0 %v1065
      %1212 = vmatpush.bf16.msra.mxu0 %v1061
      %1213 = vmatpush.bf16.msra.mxu0 %v1057
      %1214 = vmatpush.bf16.msra.mxu0 %v1053
      %1215 = vmatpush.bf16.msra.mxu0 %v1049
      %1216 = vmatmul.bf16.gmra.mxu0 %v532
      %v1217 = vpop.f32.mrf.mxu0
      %v1218 = vadd.f32 %v1205, %v1217
      %v1219 = vpop.f32.mrf.mxu0
      %1220 = vdwg.mxu0
      %1221 = vmatpush.bf16.msra.mxu0 %v1046
      %1222 = vmatpush.bf16.msra.mxu0 %v1042
      %1223 = vmatpush.bf16.msra.mxu0 %v1038
      %1224 = vmatpush.bf16.msra.mxu0 %v1034
      %1225 = vmatpush.bf16.msra.mxu0 %v1030
      %1226 = vmatpush.bf16.msra.mxu0 %v1026
      %1227 = vmatpush.bf16.msra.mxu0 %v1022
      %1228 = vmatpush.bf16.msra.mxu0 %v1018
      %1229 = vmatmul.bf16.gmra.mxu0 %v822
      %v1230 = vpop.f32.mrf.mxu0
      %v1231 = vadd.f32 %v514, %v1230
      %v1232 = vpop.f32.mrf.mxu0
      %1233 = vdwg.mxu0
      %1234 = vmatpush.bf16.msra.mxu0 %v1078
      %1235 = vmatpush.bf16.msra.mxu0 %v1074
      %1236 = vmatpush.bf16.msra.mxu0 %v1070
      %1237 = vmatpush.bf16.msra.mxu0 %v1066
      %1238 = vmatpush.bf16.msra.mxu0 %v1062
      %1239 = vmatpush.bf16.msra.mxu0 %v1058
      %1240 = vmatpush.bf16.msra.mxu0 %v1054
      %1241 = vmatpush.bf16.msra.mxu0 %v1050
      %1242 = vmatmul.bf16.gmra.mxu0 %v532
      %v1243 = vpop.f32.mrf.mxu0
      %v1244 = vadd.f32 %v1231, %v1243
      %v1245 = vpop.f32.mrf.mxu0
      %1246 = vdwg.mxu0
      %v1247 = vxor.u32 %v1166, 2147483648
      %v1248 = vmul.f32 %v1247, 1.442695
      %v1249 = vpow.pop %v1248
      %v1250 = vadd.f32 %v1249, 1.0
      %v1251 = vrcp.pop %v1250
      %v1252 = vmul.f32 %v1250, %v1251
      %v1253 = vsub.f32 1.0, %v1252
      %v1254 = vmul.f32 %v1251, %v1253
      %v1255 = vadd.f32 %v1251, %v1254
      %vm1256 = vweird.f32 %v1250
      %vm1257 = vweird.f32 %v1251
      %vm1258 = vmor %vm1256, %vm1257
      %v1259 = vsel %vm1258, %v1251, %v1255
      %v1260 = vand.u32 2147483647, %v1250
      %vm1261 = vcmp.eq.f32.partialorder %v1260, 8.507059e+37
      %v1262 = vand.u32 %v1250, 2147483648
      %v1263 = vor.u32 1.1754944e-38, %v1262
      %v1264 = vsel %vm1261, %v1263, %v1259
      %v1265 = vmul.f32 1.0, %v1264
      %v1266 = vxor.u32 %v1192, 2147483648
      %v1267 = vmul.f32 %v1266, 1.442695
      %v1268 = vpow.pop %v1267
      %v1269 = vadd.f32 %v1268, 1.0
      %v1270 = vrcp.pop %v1269
      %v1271 = vmul.f32 %v1269, %v1270
      %v1272 = vsub.f32 1.0, %v1271
      %v1273 = vmul.f32 %v1270, %v1272
      %v1274 = vadd.f32 %v1270, %v1273
      %vm1275 = vweird.f32 %v1269
      %vm1276 = vweird.f32 %v1270
      %vm1277 = vmor %vm1275, %vm1276
      %v1278 = vsel %vm1277, %v1270, %v1274
      %v1279 = vand.u32 2147483647, %v1269
      %vm1280 = vcmp.eq.f32.partialorder %v1279, 8.507059e+37
      %v1281 = vand.u32 %v1269, 2147483648
      %v1282 = vor.u32 1.1754944e-38, %v1281
      %v1283 = vsel %vm1280, %v1282, %v1278
      %v1284 = vmul.f32 1.0, %v1283
      %v1285 = vtanh.pop %v1218
      %v1286 = vxor.u32 %v1244, 2147483648
      %v1287 = vmul.f32 %v1286, 1.442695
      %v1288 = vpow.pop %v1287
      %v1289 = vadd.f32 %v1288, 1.0
      %v1290 = vrcp.pop %v1289
      %v1291 = vmul.f32 %v1289, %v1290
      %v1292 = vsub.f32 1.0, %v1291
      %v1293 = vmul.f32 %v1290, %v1292
      %v1294 = vadd.f32 %v1290, %v1293
      %vm1295 = vweird.f32 %v1289
      %vm1296 = vweird.f32 %v1290
      %vm1297 = vmor %vm1295, %vm1296
      %v1298 = vsel %vm1297, %v1290, %v1294
      %v1299 = vand.u32 2147483647, %v1289
      %vm1300 = vcmp.eq.f32.partialorder %v1299, 8.507059e+37
      %v1301 = vand.u32 %v1289, 2147483648
      %v1302 = vor.u32 1.1754944e-38, %v1301
      %v1303 = vsel %vm1300, %v1302, %v1298
      %v1304 = vmul.f32 1.0, %v1303
      %v1305 = vmul.f32 %v1284, %v534
      %v1306 = vmul.f32 %v1265, %v1285
      %v1307 = vadd.f32 %v1305, %v1306
      %v1308 = vtanh.pop %v1307
      %v1309 = vmul.f32 %v1304, %v1308
      %v1310 = vpack.c.bf16 %v1309, %v1309
      %v1311 = vtanh.pop %v1309
      %v1312 = vmul.f32 %v1311, %v521
      %1313 = vadd.xlane.f32.xlu0 %v1312
      %v1314 = vpop.xlane.xlu0 %1313
      %v1315 = vadd.f32 %v1314, %v525
      %vm1316 = vcmask 7168
      %v1317 = vsel %vm1316, %v1315, -inf
      %v1318 = vrot.slane %v1317, 4
      %v1319 = vmax.f32 %v1317, %v1318
      %v1320 = vrot.slane %v1319, 2
      %v1321 = vmax.f32 %v1319, %v1320
      %v1322 = vrot.slane %v1321, 1
      %v1323 = vmax.f32 %v1321, %v1322
      %v1324 = vsub.f32 %v1315, %v1323
      %v1325 = vmul.f32 %v1324, 1.442695
      %v1326 = vpow.pop %v1325
      %v1327 = vsel %vm1316, %v1326, 0.0
      %v1328 = vrot.slane %v1327, 4
      %v1329 = vadd.f32 %v1327, %v1328
      %v1330 = vrot.slane %v1329, 2
      %v1331 = vadd.f32 %v1329, %v1330
      %v1332 = vrot.slane %v1331, 1
      %v1333 = vadd.f32 %v1331, %v1332
      %v1334 = vrcp.pop %v1333
      %v1335 = vmul.f32 %v1326, %v1334
      %1337 = vset.pattern.permute.xlu0 0
      %1338 = vperm.xlu0 %1337, %v1335
      %v1339 = vpop.permute.xlu0 %1338
      %v1341 = vmul.f32 %v1339, %v1311
      %v1342 = vadd.f32 %v535, %v1341
      %s1343 = smul.u32 1, 4
      %s1344 = smul.addr %s1343, 8
      %s1345 = scalar_lea.vmem %s402, %s1344
      %v1346 = vld [vmem:[%s1345] sm:$0xff]
      %v1347 = vld [vmem:[%s1345 + $0x8] sm:$0xff]
      %v1348 = vld [vmem:[%s1345 + $0x10] sm:$0xff]
      %v1349 = vld [vmem:[%s1345 + $0x18] sm:$0xff]
      %1350 = vmatpush.bf16.msra.mxu0 %v667
      %1351 = vmatpush.bf16.msra.mxu0 %v663
      %1352 = vmatpush.bf16.msra.mxu0 %v659
      %1353 = vmatpush.bf16.msra.mxu0 %v655
      %1354 = vmatpush.bf16.msra.mxu0 %v651
      %1355 = vmatpush.bf16.msra.mxu0 %v647
      %1356 = vmatpush.bf16.msra.mxu0 %v643
      %1357 = vmatpush.bf16.msra.mxu0 %v639
      %1358 = vmatmul.bf16.gmra.mxu0 %v822
      %v1359 = vpop.f32.mrf.mxu0
      %v1360 = vadd.f32 0.0, %v1359
      %v1361 = vpop.f32.mrf.mxu0
      %1362 = vdwg.mxu0
      %1363 = vmatpush.bf16.msra.mxu0 %v668
      %1364 = vmatpush.bf16.msra.mxu0 %v664
      %1365 = vmatpush.bf16.msra.mxu0 %v660
      %1366 = vmatpush.bf16.msra.mxu0 %v656
      %1367 = vmatpush.bf16.msra.mxu0 %v652
      %1368 = vmatpush.bf16.msra.mxu0 %v648
      %1369 = vmatpush.bf16.msra.mxu0 %v644
      %1370 = vmatpush.bf16.msra.mxu0 %v640
      %1371 = vmatmul.bf16.gmra.mxu0 %v822
      %v1372 = vpop.f32.mrf.mxu0
      %v1373 = vadd.f32 0.0, %v1372
      %v1374 = vpop.f32.mrf.mxu0
      %1375 = vdwg.mxu0
      %1376 = vmatpush.bf16.msra.mxu0 %v669
      %1377 = vmatpush.bf16.msra.mxu0 %v665
      %1378 = vmatpush.bf16.msra.mxu0 %v661
      %1379 = vmatpush.bf16.msra.mxu0 %v657
      %1380 = vmatpush.bf16.msra.mxu0 %v653
      %1381 = vmatpush.bf16.msra.mxu0 %v649
      %1382 = vmatpush.bf16.msra.mxu0 %v645
      %1383 = vmatpush.bf16.msra.mxu0 %v641
      %1384 = vmatmul.bf16.gmra.mxu0 %v822
      %v1385 = vpop.f32.mrf.mxu0
      %v1386 = vadd.f32 0.0, %v1385
      %v1387 = vpop.f32.mrf.mxu0
      %1388 = vdwg.mxu0
      %1389 = vmatpush.bf16.msra.mxu0 %v670
      %1390 = vmatpush.bf16.msra.mxu0 %v666
      %1391 = vmatpush.bf16.msra.mxu0 %v662
      %1392 = vmatpush.bf16.msra.mxu0 %v658
      %1393 = vmatpush.bf16.msra.mxu0 %v654
      %1394 = vmatpush.bf16.msra.mxu0 %v650
      %1395 = vmatpush.bf16.msra.mxu0 %v646
      %1396 = vmatpush.bf16.msra.mxu0 %v642
      %1397 = vmatmul.bf16.gmra.mxu0 %v822
      %v1398 = vpop.f32.mrf.mxu0
      %v1399 = vadd.f32 0.0, %v1398
      %v1400 = vpop.f32.mrf.mxu0
      %1401 = vdwg.mxu0
      %v1402 = vadd.f32 %v1346, %v1360
      %v1403 = vadd.f32 %v1347, %v1373
      %v1404 = vadd.f32 %v1348, %v1386
      %v1405 = vadd.f32 %v1349, %v1399
      %v1406 = vxor.u32 %v1402, 2147483648
      %v1407 = vmul.f32 %v1406, 1.442695
      %v1408 = vpow.pop %v1407
      %v1409 = vadd.f32 %v1408, 1.0
      %v1410 = vrcp.pop %v1409
      %v1411 = vmul.f32 %v1409, %v1410
      %v1412 = vsub.f32 1.0, %v1411
      %v1413 = vmul.f32 %v1410, %v1412
      %v1414 = vadd.f32 %v1410, %v1413
      %vm1415 = vweird.f32 %v1409
      %vm1416 = vweird.f32 %v1410
      %vm1417 = vmor %vm1415, %vm1416
      %v1418 = vsel %vm1417, %v1410, %v1414
      %v1419 = vand.u32 2147483647, %v1409
      %vm1420 = vcmp.eq.f32.partialorder %v1419, 8.507059e+37
      %v1421 = vand.u32 %v1409, 2147483648
      %v1422 = vor.u32 1.1754944e-38, %v1421
      %v1423 = vsel %vm1420, %v1422, %v1418
      %v1424 = vmul.f32 1.0, %v1423
      %v1425 = vxor.u32 %v1403, 2147483648
      %v1426 = vmul.f32 %v1425, 1.442695
      %v1427 = vpow.pop %v1426
      %v1428 = vadd.f32 %v1427, 1.0
      %v1429 = vrcp.pop %v1428
      %v1430 = vmul.f32 %v1428, %v1429
      %v1431 = vsub.f32 1.0, %v1430
      %v1432 = vmul.f32 %v1429, %v1431
      %v1433 = vadd.f32 %v1429, %v1432
      %vm1434 = vweird.f32 %v1428
      %vm1435 = vweird.f32 %v1429
      %vm1436 = vmor %vm1434, %vm1435
      %v1437 = vsel %vm1436, %v1429, %v1433
      %v1438 = vand.u32 2147483647, %v1428
      %vm1439 = vcmp.eq.f32.partialorder %v1438, 8.507059e+37
      %v1440 = vand.u32 %v1428, 2147483648
      %v1441 = vor.u32 1.1754944e-38, %v1440
      %v1442 = vsel %vm1439, %v1441, %v1437
      %v1443 = vmul.f32 1.0, %v1442
      %v1444 = vtanh.pop %v1404
      %v1445 = vxor.u32 %v1405, 2147483648
      %v1446 = vmul.f32 %v1445, 1.442695
      %v1447 = vpow.pop %v1446
      %v1448 = vadd.f32 %v1447, 1.0
      %v1449 = vrcp.pop %v1448
      %v1450 = vmul.f32 %v1448, %v1449
      %v1451 = vsub.f32 1.0, %v1450
      %v1452 = vmul.f32 %v1449, %v1451
      %v1453 = vadd.f32 %v1449, %v1452
      %vm1454 = vweird.f32 %v1448
      %vm1455 = vweird.f32 %v1449
      %vm1456 = vmor %vm1454, %vm1455
      %v1457 = vsel %vm1456, %v1449, %v1453
      %v1458 = vand.u32 2147483647, %v1448
      %vm1459 = vcmp.eq.f32.partialorder %v1458, 8.507059e+37
      %v1460 = vand.u32 %v1448, 2147483648
      %v1461 = vor.u32 1.1754944e-38, %v1460
      %v1462 = vsel %vm1459, %v1461, %v1457
      %v1463 = vmul.f32 1.0, %v1462
      %v1464 = vmul.f32 %v1443, %v819
      %v1465 = vmul.f32 %v1424, %v1444
      %v1466 = vadd.f32 %v1464, %v1465
      %v1467 = vtanh.pop %v1466
      %v1468 = vmul.f32 %v1463, %v1467
      %v1469 = vpack.c.bf16 %v1468, %v1468
      %1470 = vmatpush.bf16.msra.mxu0 %v1043
      %1471 = vmatpush.bf16.msra.mxu0 %v1039
      %1472 = vmatpush.bf16.msra.mxu0 %v1035
      %1473 = vmatpush.bf16.msra.mxu0 %v1031
      %1474 = vmatpush.bf16.msra.mxu0 %v1027
      %1475 = vmatpush.bf16.msra.mxu0 %v1023
      %1476 = vmatpush.bf16.msra.mxu0 %v1019
      %1477 = vmatpush.bf16.msra.mxu0 %v1015
      %1478 = vmatmul.bf16.gmra.mxu0 %v1469
      %v1479 = vpop.f32.mrf.mxu0
      %v1480 = vadd.f32 %v511, %v1479
      %v1481 = vpop.f32.mrf.mxu0
      %1482 = vdwg.mxu0
      %1483 = vmatpush.bf16.msra.mxu0 %v1075
      %1484 = vmatpush.bf16.msra.mxu0 %v1071
      %1485 = vmatpush.bf16.msra.mxu0 %v1067
      %1486 = vmatpush.bf16.msra.mxu0 %v1063
      %1487 = vmatpush.bf16.msra.mxu0 %v1059
      %1488 = vmatpush.bf16.msra.mxu0 %v1055
      %1489 = vmatpush.bf16.msra.mxu0 %v1051
      %1490 = vmatpush.bf16.msra.mxu0 %v1047
      %1491 = vmatmul.bf16.gmra.mxu0 %v1310
      %v1492 = vpop.f32.mrf.mxu0
      %v1493 = vadd.f32 %v1480, %v1492
      %v1494 = vpop.f32.mrf.mxu0
      %1495 = vdwg.mxu0
      %1496 = vmatpush.bf16.msra.mxu0 %v1044
      %1497 = vmatpush.bf16.msra.mxu0 %v1040
      %1498 = vmatpush.bf16.msra.mxu0 %v1036
      %1499 = vmatpush.bf16.msra.mxu0 %v1032
      %1500 = vmatpush.bf16.msra.mxu0 %v1028
      %1501 = vmatpush.bf16.msra.mxu0 %v1024
      %1502 = vmatpush.bf16.msra.mxu0 %v1020
      %1503 = vmatpush.bf16.msra.mxu0 %v1016
      %1504 = vmatmul.bf16.gmra.mxu0 %v1469
      %v1505 = vpop.f32.mrf.mxu0
      %v1506 = vadd.f32 %v512, %v1505
      %v1507 = vpop.f32.mrf.mxu0
      %1508 = vdwg.mxu0
      %1509 = vmatpush.bf16.msra.mxu0 %v1076
      %1510 = vmatpush.bf16.msra.mxu0 %v1072
      %1511 = vmatpush.bf16.msra.mxu0 %v1068
      %1512 = vmatpush.bf16.msra.mxu0 %v1064
      %1513 = vmatpush.bf16.msra.mxu0 %v1060
      %1514 = vmatpush.bf16.msra.mxu0 %v1056
      %1515 = vmatpush.bf16.msra.mxu0 %v1052
      %1516 = vmatpush.bf16.msra.mxu0 %v1048
      %1517 = vmatmul.bf16.gmra.mxu0 %v1310
      %v1518 = vpop.f32.mrf.mxu0
      %v1519 = vadd.f32 %v1506, %v1518
      %v1520 = vpop.f32.mrf.mxu0
      %1521 = vdwg.mxu0
      %1522 = vmatpush.bf16.msra.mxu0 %v1045
      %1523 = vmatpush.bf16.msra.mxu0 %v1041
      %1524 = vmatpush.bf16.msra.mxu0 %v1037
      %1525 = vmatpush.bf16.msra.mxu0 %v1033
      %1526 = vmatpush.bf16.msra.mxu0 %v1029
      %1527 = vmatpush.bf16.msra.mxu0 %v1025
      %1528 = vmatpush.bf16.msra.mxu0 %v1021
      %1529 = vmatpush.bf16.msra.mxu0 %v1017
      %1530 = vmatmul.bf16.gmra.mxu0 %v1469
      %v1531 = vpop.f32.mrf.mxu0
      %v1532 = vadd.f32 %v513, %v1531
      %v1533 = vpop.f32.mrf.mxu0
      %1534 = vdwg.mxu0
      %1535 = vmatpush.bf16.msra.mxu0 %v1077
      %1536 = vmatpush.bf16.msra.mxu0 %v1073
      %1537 = vmatpush.bf16.msra.mxu0 %v1069
      %1538 = vmatpush.bf16.msra.mxu0 %v1065
      %1539 = vmatpush.bf16.msra.mxu0 %v1061
      %1540 = vmatpush.bf16.msra.mxu0 %v1057
      %1541 = vmatpush.bf16.msra.mxu0 %v1053
      %1542 = vmatpush.bf16.msra.mxu0 %v1049
      %1543 = vmatmul.bf16.gmra.mxu0 %v1310
      %v1544 = vpop.f32.mrf.mxu0
      %v1545 = vadd.f32 %v1532, %v1544
      %v1546 = vpop.f32.mrf.mxu0
      %1547 = vdwg.mxu0
      %1548 = vmatpush.bf16.msra.mxu0 %v1046
      %1549 = vmatpush.bf16.msra.mxu0 %v1042
      %1550 = vmatpush.bf16.msra.mxu0 %v1038
      %1551 = vmatpush.bf16.msra.mxu0 %v1034
      %1552 = vmatpush.bf16.msra.mxu0 %v1030
      %1553 = vmatpush.bf16.msra.mxu0 %v1026
      %1554 = vmatpush.bf16.msra.mxu0 %v1022
      %1555 = vmatpush.bf16.msra.mxu0 %v1018
      %1556 = vmatmul.bf16.gmra.mxu0 %v1469
      %v1557 = vpop.f32.mrf.mxu0
      %v1558 = vadd.f32 %v514, %v1557
      %v1559 = vpop.f32.mrf.mxu0
      %1560 = vdwg.mxu0
      %1561 = vmatpush.bf16.msra.mxu0 %v1078
      %1562 = vmatpush.bf16.msra.mxu0 %v1074
      %1563 = vmatpush.bf16.msra.mxu0 %v1070
      %1564 = vmatpush.bf16.msra.mxu0 %v1066
      %1565 = vmatpush.bf16.msra.mxu0 %v1062
      %1566 = vmatpush.bf16.msra.mxu0 %v1058
      %1567 = vmatpush.bf16.msra.mxu0 %v1054
      %1568 = vmatpush.bf16.msra.mxu0 %v1050
      %1569 = vmatmul.bf16.gmra.mxu0 %v1310
      %v1570 = vpop.f32.mrf.mxu0
      %v1571 = vadd.f32 %v1558, %v1570
      %v1572 = vpop.f32.mrf.mxu0
      %1573 = vdwg.mxu0
      %v1574 = vxor.u32 %v1493, 2147483648
      %v1575 = vmul.f32 %v1574, 1.442695
      %v1576 = vpow.pop %v1575
      %v1577 = vadd.f32 %v1576, 1.0
      %v1578 = vrcp.pop %v1577
      %v1579 = vmul.f32 %v1577, %v1578
      %v1580 = vsub.f32 1.0, %v1579
      %v1581 = vmul.f32 %v1578, %v1580
      %v1582 = vadd.f32 %v1578, %v1581
      %vm1583 = vweird.f32 %v1577
      %vm1584 = vweird.f32 %v1578
      %vm1585 = vmor %vm1583, %vm1584
      %v1586 = vsel %vm1585, %v1578, %v1582
      %v1587 = vand.u32 2147483647, %v1577
      %vm1588 = vcmp.eq.f32.partialorder %v1587, 8.507059e+37
      %v1589 = vand.u32 %v1577, 2147483648
      %v1590 = vor.u32 1.1754944e-38, %v1589
      %v1591 = vsel %vm1588, %v1590, %v1586
      %v1592 = vmul.f32 1.0, %v1591
      %v1593 = vxor.u32 %v1519, 2147483648
      %v1594 = vmul.f32 %v1593, 1.442695
      %v1595 = vpow.pop %v1594
      %v1596 = vadd.f32 %v1595, 1.0
      %v1597 = vrcp.pop %v1596
      %v1598 = vmul.f32 %v1596, %v1597
      %v1599 = vsub.f32 1.0, %v1598
      %v1600 = vmul.f32 %v1597, %v1599
      %v1601 = vadd.f32 %v1597, %v1600
      %vm1602 = vweird.f32 %v1596
      %vm1603 = vweird.f32 %v1597
      %vm1604 = vmor %vm1602, %vm1603
      %v1605 = vsel %vm1604, %v1597, %v1601
      %v1606 = vand.u32 2147483647, %v1596
      %vm1607 = vcmp.eq.f32.partialorder %v1606, 8.507059e+37
      %v1608 = vand.u32 %v1596, 2147483648
      %v1609 = vor.u32 1.1754944e-38, %v1608
      %v1610 = vsel %vm1607, %v1609, %v1605
      %v1611 = vmul.f32 1.0, %v1610
      %v1612 = vtanh.pop %v1545
      %v1613 = vxor.u32 %v1571, 2147483648
      %v1614 = vmul.f32 %v1613, 1.442695
      %v1615 = vpow.pop %v1614
      %v1616 = vadd.f32 %v1615, 1.0
      %v1617 = vrcp.pop %v1616
      %v1618 = vmul.f32 %v1616, %v1617
      %v1619 = vsub.f32 1.0, %v1618
      %v1620 = vmul.f32 %v1617, %v1619
      %v1621 = vadd.f32 %v1617, %v1620
      %vm1622 = vweird.f32 %v1616
      %vm1623 = vweird.f32 %v1617
      %vm1624 = vmor %vm1622, %vm1623
      %v1625 = vsel %vm1624, %v1617, %v1621
      %v1626 = vand.u32 2147483647, %v1616
      %vm1627 = vcmp.eq.f32.partialorder %v1626, 8.507059e+37
      %v1628 = vand.u32 %v1616, 2147483648
      %v1629 = vor.u32 1.1754944e-38, %v1628
      %v1630 = vsel %vm1627, %v1629, %v1625
      %v1631 = vmul.f32 1.0, %v1630
      %v1632 = vmul.f32 %v1611, %v1307
      %v1633 = vmul.f32 %v1592, %v1612
      %v1634 = vadd.f32 %v1632, %v1633
      %v1635 = vtanh.pop %v1634
      %v1636 = vmul.f32 %v1631, %v1635
      %v1637 = vpack.c.bf16 %v1636, %v1636
      %v1638 = vtanh.pop %v1636
      %v1639 = vmul.f32 %v1638, %v521
      %1640 = vadd.xlane.f32.xlu0 %v1639
      %v1641 = vpop.xlane.xlu0 %1640
      %v1642 = vadd.f32 %v1641, %v525
      %v1643 = vsel %vm1316, %v1642, -inf
      %v1644 = vrot.slane %v1643, 4
      %v1645 = vmax.f32 %v1643, %v1644
      %v1646 = vrot.slane %v1645, 2
      %v1647 = vmax.f32 %v1645, %v1646
      %v1648 = vrot.slane %v1647, 1
      %v1649 = vmax.f32 %v1647, %v1648
      %v1650 = vsub.f32 %v1642, %v1649
      %v1651 = vmul.f32 %v1650, 1.442695
      %v1652 = vpow.pop %v1651
      %v1653 = vsel %vm1316, %v1652, 0.0
      %v1654 = vrot.slane %v1653, 4
      %v1655 = vadd.f32 %v1653, %v1654
      %v1656 = vrot.slane %v1655, 2
      %v1657 = vadd.f32 %v1655, %v1656
      %v1658 = vrot.slane %v1657, 1
      %v1659 = vadd.f32 %v1657, %v1658
      %v1660 = vrcp.pop %v1659
      %v1661 = vmul.f32 %v1652, %v1660
      %1663 = vset.pattern.permute.xlu0 0
      %1664 = vperm.xlu0 %1663, %v1661
      %v1665 = vpop.permute.xlu0 %1664
      %v1667 = vmul.f32 %v1665, %v1638
      %v1668 = vadd.f32 %v1342, %v1667
      %s1669 = smul.u32 2, 4
      %s1670 = smul.addr %s1669, 8
      %s1671 = scalar_lea.vmem %s402, %s1670
      %v1672 = vld [vmem:[%s1671] sm:$0xff]
      %v1673 = vld [vmem:[%s1671 + $0x8] sm:$0xff]
      %v1674 = vld [vmem:[%s1671 + $0x10] sm:$0xff]
      %v1675 = vld [vmem:[%s1671 + $0x18] sm:$0xff]
      %1676 = vmatpush.bf16.msra.mxu0 %v667
      %1677 = vmatpush.bf16.msra.mxu0 %v663
      %1678 = vmatpush.bf16.msra.mxu0 %v659
      %1679 = vmatpush.bf16.msra.mxu0 %v655
      %1680 = vmatpush.bf16.msra.mxu0 %v651
      %1681 = vmatpush.bf16.msra.mxu0 %v647
      %1682 = vmatpush.bf16.msra.mxu0 %v643
      %1683 = vmatpush.bf16.msra.mxu0 %v639
      %1684 = vmatmul.bf16.gmra.mxu0 %v1469
      %v1685 = vpop.f32.mrf.mxu0
      %v1686 = vadd.f32 0.0, %v1685
      %v1687 = vpop.f32.mrf.mxu0
      %1688 = vdwg.mxu0
      %1689 = vmatpush.bf16.msra.mxu0 %v668
      %1690 = vmatpush.bf16.msra.mxu0 %v664
      %1691 = vmatpush.bf16.msra.mxu0 %v660
      %1692 = vmatpush.bf16.msra.mxu0 %v656
      %1693 = vmatpush.bf16.msra.mxu0 %v652
      %1694 = vmatpush.bf16.msra.mxu0 %v648
      %1695 = vmatpush.bf16.msra.mxu0 %v644
      %1696 = vmatpush.bf16.msra.mxu0 %v640
      %1697 = vmatmul.bf16.gmra.mxu0 %v1469
      %v1698 = vpop.f32.mrf.mxu0
      %v1699 = vadd.f32 0.0, %v1698
      %v1700 = vpop.f32.mrf.mxu0
      %1701 = vdwg.mxu0
      %1702 = vmatpush.bf16.msra.mxu0 %v669
      %1703 = vmatpush.bf16.msra.mxu0 %v665
      %1704 = vmatpush.bf16.msra.mxu0 %v661
      %1705 = vmatpush.bf16.msra.mxu0 %v657
      %1706 = vmatpush.bf16.msra.mxu0 %v653
      %1707 = vmatpush.bf16.msra.mxu0 %v649
      %1708 = vmatpush.bf16.msra.mxu0 %v645
      %1709 = vmatpush.bf16.msra.mxu0 %v641
      %1710 = vmatmul.bf16.gmra.mxu0 %v1469
      %v1711 = vpop.f32.mrf.mxu0
      %v1712 = vadd.f32 0.0, %v1711
      %v1713 = vpop.f32.mrf.mxu0
      %1714 = vdwg.mxu0
      %1715 = vmatpush.bf16.msra.mxu0 %v670
      %1716 = vmatpush.bf16.msra.mxu0 %v666
      %1717 = vmatpush.bf16.msra.mxu0 %v662
      %1718 = vmatpush.bf16.msra.mxu0 %v658
      %1719 = vmatpush.bf16.msra.mxu0 %v654
      %1720 = vmatpush.bf16.msra.mxu0 %v650
      %1721 = vmatpush.bf16.msra.mxu0 %v646
      %1722 = vmatpush.bf16.msra.mxu0 %v642
      %1723 = vmatmul.bf16.gmra.mxu0 %v1469
      %v1724 = vpop.f32.mrf.mxu0
      %v1725 = vadd.f32 0.0, %v1724
      %v1726 = vpop.f32.mrf.mxu0
      %1727 = vdwg.mxu0
      %v1728 = vadd.f32 %v1672, %v1686
      %v1729 = vadd.f32 %v1673, %v1699
      %v1730 = vadd.f32 %v1674, %v1712
      %v1731 = vadd.f32 %v1675, %v1725
      %v1732 = vxor.u32 %v1728, 2147483648
      %v1733 = vmul.f32 %v1732, 1.442695
      %v1734 = vpow.pop %v1733
      %v1735 = vadd.f32 %v1734, 1.0
      %v1736 = vrcp.pop %v1735
      %v1737 = vmul.f32 %v1735, %v1736
      %v1738 = vsub.f32 1.0, %v1737
      %v1739 = vmul.f32 %v1736, %v1738
      %v1740 = vadd.f32 %v1736, %v1739
      %vm1741 = vweird.f32 %v1735
      %vm1742 = vweird.f32 %v1736
      %vm1743 = vmor %vm1741, %vm1742
      %v1744 = vsel %vm1743, %v1736, %v1740
      %v1745 = vand.u32 2147483647, %v1735
      %vm1746 = vcmp.eq.f32.partialorder %v1745, 8.507059e+37
      %v1747 = vand.u32 %v1735, 2147483648
      %v1748 = vor.u32 1.1754944e-38, %v1747
      %v1749 = vsel %vm1746, %v1748, %v1744
      %v1750 = vmul.f32 1.0, %v1749
      %v1751 = vxor.u32 %v1729, 2147483648
      %v1752 = vmul.f32 %v1751, 1.442695
      %v1753 = vpow.pop %v1752
      %v1754 = vadd.f32 %v1753, 1.0
      %v1755 = vrcp.pop %v1754
      %v1756 = vmul.f32 %v1754, %v1755
      %v1757 = vsub.f32 1.0, %v1756
      %v1758 = vmul.f32 %v1755, %v1757
      %v1759 = vadd.f32 %v1755, %v1758
      %vm1760 = vweird.f32 %v1754
      %vm1761 = vweird.f32 %v1755
      %vm1762 = vmor %vm1760, %vm1761
      %v1763 = vsel %vm1762, %v1755, %v1759
      %v1764 = vand.u32 2147483647, %v1754
      %vm1765 = vcmp.eq.f32.partialorder %v1764, 8.507059e+37
      %v1766 = vand.u32 %v1754, 2147483648
      %v1767 = vor.u32 1.1754944e-38, %v1766
      %v1768 = vsel %vm1765, %v1767, %v1763
      %v1769 = vmul.f32 1.0, %v1768
      %v1770 = vtanh.pop %v1730
      %v1771 = vxor.u32 %v1731, 2147483648
      %v1772 = vmul.f32 %v1771, 1.442695
      %v1773 = vpow.pop %v1772
      %v1774 = vadd.f32 %v1773, 1.0
      %v1775 = vrcp.pop %v1774
      %v1776 = vmul.f32 %v1774, %v1775
      %v1777 = vsub.f32 1.0, %v1776
      %v1778 = vmul.f32 %v1775, %v1777
      %v1779 = vadd.f32 %v1775, %v1778
      %vm1780 = vweird.f32 %v1774
      %vm1781 = vweird.f32 %v1775
      %vm1782 = vmor %vm1780, %vm1781
      %v1783 = vsel %vm1782, %v1775, %v1779
      %v1784 = vand.u32 2147483647, %v1774
      %vm1785 = vcmp.eq.f32.partialorder %v1784, 8.507059e+37
      %v1786 = vand.u32 %v1774, 2147483648
      %v1787 = vor.u32 1.1754944e-38, %v1786
      %v1788 = vsel %vm1785, %v1787, %v1783
      %v1789 = vmul.f32 1.0, %v1788
      %v1790 = vmul.f32 %v1769, %v1466
      %v1791 = vmul.f32 %v1750, %v1770
      %v1792 = vadd.f32 %v1790, %v1791
      %v1793 = vtanh.pop %v1792
      %v1794 = vmul.f32 %v1789, %v1793
      %v1795 = vpack.c.bf16 %v1794, %v1794
      %1796 = vmatpush.bf16.msra.mxu0 %v1043
      %1797 = vmatpush.bf16.msra.mxu0 %v1039
      %1798 = vmatpush.bf16.msra.mxu0 %v1035
      %1799 = vmatpush.bf16.msra.mxu0 %v1031
      %1800 = vmatpush.bf16.msra.mxu0 %v1027
      %1801 = vmatpush.bf16.msra.mxu0 %v1023
      %1802 = vmatpush.bf16.msra.mxu0 %v1019
      %1803 = vmatpush.bf16.msra.mxu0 %v1015
      %1804 = vmatmul.bf16.gmra.mxu0 %v1795
      %v1805 = vpop.f32.mrf.mxu0
      %v1806 = vadd.f32 %v511, %v1805
      %v1807 = vpop.f32.mrf.mxu0
      %1808 = vdwg.mxu0
      %1809 = vmatpush.bf16.msra.mxu0 %v1075
      %1810 = vmatpush.bf16.msra.mxu0 %v1071
      %1811 = vmatpush.bf16.msra.mxu0 %v1067
      %1812 = vmatpush.bf16.msra.mxu0 %v1063
      %1813 = vmatpush.bf16.msra.mxu0 %v1059
      %1814 = vmatpush.bf16.msra.mxu0 %v1055
      %1815 = vmatpush.bf16.msra.mxu0 %v1051
      %1816 = vmatpush.bf16.msra.mxu0 %v1047
      %1817 = vmatmul.bf16.gmra.mxu0 %v1637
      %v1818 = vpop.f32.mrf.mxu0
      %v1819 = vadd.f32 %v1806, %v1818
      %v1820 = vpop.f32.mrf.mxu0
      %1821 = vdwg.mxu0
      %1822 = vmatpush.bf16.msra.mxu0 %v1044
      %1823 = vmatpush.bf16.msra.mxu0 %v1040
      %1824 = vmatpush.bf16.msra.mxu0 %v1036
      %1825 = vmatpush.bf16.msra.mxu0 %v1032
      %1826 = vmatpush.bf16.msra.mxu0 %v1028
      %1827 = vmatpush.bf16.msra.mxu0 %v1024
      %1828 = vmatpush.bf16.msra.mxu0 %v1020
      %1829 = vmatpush.bf16.msra.mxu0 %v1016
      %1830 = vmatmul.bf16.gmra.mxu0 %v1795
      %v1831 = vpop.f32.mrf.mxu0
      %v1832 = vadd.f32 %v512, %v1831
      %v1833 = vpop.f32.mrf.mxu0
      %1834 = vdwg.mxu0
      %1835 = vmatpush.bf16.msra.mxu0 %v1076
      %1836 = vmatpush.bf16.msra.mxu0 %v1072
      %1837 = vmatpush.bf16.msra.mxu0 %v1068
      %1838 = vmatpush.bf16.msra.mxu0 %v1064
      %1839 = vmatpush.bf16.msra.mxu0 %v1060
      %1840 = vmatpush.bf16.msra.mxu0 %v1056
      %1841 = vmatpush.bf16.msra.mxu0 %v1052
      %1842 = vmatpush.bf16.msra.mxu0 %v1048
      %1843 = vmatmul.bf16.gmra.mxu0 %v1637
      %v1844 = vpop.f32.mrf.mxu0
      %v1845 = vadd.f32 %v1832, %v1844
      %v1846 = vpop.f32.mrf.mxu0
      %1847 = vdwg.mxu0
      %1848 = vmatpush.bf16.msra.mxu0 %v1045
      %1849 = vmatpush.bf16.msra.mxu0 %v1041
      %1850 = vmatpush.bf16.msra.mxu0 %v1037
      %1851 = vmatpush.bf16.msra.mxu0 %v1033
      %1852 = vmatpush.bf16.msra.mxu0 %v1029
      %1853 = vmatpush.bf16.msra.mxu0 %v1025
      %1854 = vmatpush.bf16.msra.mxu0 %v1021
      %1855 = vmatpush.bf16.msra.mxu0 %v1017
      %1856 = vmatmul.bf16.gmra.mxu0 %v1795
      %v1857 = vpop.f32.mrf.mxu0
      %v1858 = vadd.f32 %v513, %v1857
      %v1859 = vpop.f32.mrf.mxu0
      %1860 = vdwg.mxu0
      %1861 = vmatpush.bf16.msra.mxu0 %v1077
      %1862 = vmatpush.bf16.msra.mxu0 %v1073
      %1863 = vmatpush.bf16.msra.mxu0 %v1069
      %1864 = vmatpush.bf16.msra.mxu0 %v1065
      %1865 = vmatpush.bf16.msra.mxu0 %v1061
      %1866 = vmatpush.bf16.msra.mxu0 %v1057
      %1867 = vmatpush.bf16.msra.mxu0 %v1053
      %1868 = vmatpush.bf16.msra.mxu0 %v1049
      %1869 = vmatmul.bf16.gmra.mxu0 %v1637
      %v1870 = vpop.f32.mrf.mxu0
      %v1871 = vadd.f32 %v1858, %v1870
      %v1872 = vpop.f32.mrf.mxu0
      %1873 = vdwg.mxu0
      %1874 = vmatpush.bf16.msra.mxu0 %v1046
      %1875 = vmatpush.bf16.msra.mxu0 %v1042
      %1876 = vmatpush.bf16.msra.mxu0 %v1038
      %1877 = vmatpush.bf16.msra.mxu0 %v1034
      %1878 = vmatpush.bf16.msra.mxu0 %v1030
      %1879 = vmatpush.bf16.msra.mxu0 %v1026
      %1880 = vmatpush.bf16.msra.mxu0 %v1022
      %1881 = vmatpush.bf16.msra.mxu0 %v1018
      %1882 = vmatmul.bf16.gmra.mxu0 %v1795
      %v1883 = vpop.f32.mrf.mxu0
      %v1884 = vadd.f32 %v514, %v1883
      %v1885 = vpop.f32.mrf.mxu0
      %1886 = vdwg.mxu0
      %1887 = vmatpush.bf16.msra.mxu0 %v1078
      %1888 = vmatpush.bf16.msra.mxu0 %v1074
      %1889 = vmatpush.bf16.msra.mxu0 %v1070
      %1890 = vmatpush.bf16.msra.mxu0 %v1066
      %1891 = vmatpush.bf16.msra.mxu0 %v1062
      %1892 = vmatpush.bf16.msra.mxu0 %v1058
      %1893 = vmatpush.bf16.msra.mxu0 %v1054
      %1894 = vmatpush.bf16.msra.mxu0 %v1050
      %1895 = vmatmul.bf16.gmra.mxu0 %v1637
      %v1896 = vpop.f32.mrf.mxu0
      %v1897 = vadd.f32 %v1884, %v1896
      %v1898 = vpop.f32.mrf.mxu0
      %1899 = vdwg.mxu0
      %v1900 = vxor.u32 %v1819, 2147483648
      %v1901 = vmul.f32 %v1900, 1.442695
      %v1902 = vpow.pop %v1901
      %v1903 = vadd.f32 %v1902, 1.0
      %v1904 = vrcp.pop %v1903
      %v1905 = vmul.f32 %v1903, %v1904
      %v1906 = vsub.f32 1.0, %v1905
      %v1907 = vmul.f32 %v1904, %v1906
      %v1908 = vadd.f32 %v1904, %v1907
      %vm1909 = vweird.f32 %v1903
      %vm1910 = vweird.f32 %v1904
      %vm1911 = vmor %vm1909, %vm1910
      %v1912 = vsel %vm1911, %v1904, %v1908
      %v1913 = vand.u32 2147483647, %v1903
      %vm1914 = vcmp.eq.f32.partialorder %v1913, 8.507059e+37
      %v1915 = vand.u32 %v1903, 2147483648
      %v1916 = vor.u32 1.1754944e-38, %v1915
      %v1917 = vsel %vm1914, %v1916, %v1912
      %v1918 = vmul.f32 1.0, %v1917
      %v1919 = vxor.u32 %v1845, 2147483648
      %v1920 = vmul.f32 %v1919, 1.442695
      %v1921 = vpow.pop %v1920
      %v1922 = vadd.f32 %v1921, 1.0
      %v1923 = vrcp.pop %v1922
      %v1924 = vmul.f32 %v1922, %v1923
      %v1925 = vsub.f32 1.0, %v1924
      %v1926 = vmul.f32 %v1923, %v1925
      %v1927 = vadd.f32 %v1923, %v1926
      %vm1928 = vweird.f32 %v1922
      %vm1929 = vweird.f32 %v1923
      %vm1930 = vmor %vm1928, %vm1929
      %v1931 = vsel %vm1930, %v1923, %v1927
      %v1932 = vand.u32 2147483647, %v1922
      %vm1933 = vcmp.eq.f32.partialorder %v1932, 8.507059e+37
      %v1934 = vand.u32 %v1922, 2147483648
      %v1935 = vor.u32 1.1754944e-38, %v1934
      %v1936 = vsel %vm1933, %v1935, %v1931
      %v1937 = vmul.f32 1.0, %v1936
      %v1938 = vtanh.pop %v1871
      %v1939 = vxor.u32 %v1897, 2147483648
      %v1940 = vmul.f32 %v1939, 1.442695
      %v1941 = vpow.pop %v1940
      %v1942 = vadd.f32 %v1941, 1.0
      %v1943 = vrcp.pop %v1942
      %v1944 = vmul.f32 %v1942, %v1943
      %v1945 = vsub.f32 1.0, %v1944
      %v1946 = vmul.f32 %v1943, %v1945
      %v1947 = vadd.f32 %v1943, %v1946
      %vm1948 = vweird.f32 %v1942
      %vm1949 = vweird.f32 %v1943
      %vm1950 = vmor %vm1948, %vm1949
      %v1951 = vsel %vm1950, %v1943, %v1947
      %v1952 = vand.u32 2147483647, %v1942
      %vm1953 = vcmp.eq.f32.partialorder %v1952, 8.507059e+37
      %v1954 = vand.u32 %v1942, 2147483648
      %v1955 = vor.u32 1.1754944e-38, %v1954
      %v1956 = vsel %vm1953, %v1955, %v1951
      %v1957 = vmul.f32 1.0, %v1956
      %v1958 = vmul.f32 %v1937, %v1634
      %v1959 = vmul.f32 %v1918, %v1938
      %v1960 = vadd.f32 %v1958, %v1959
      %v1961 = vtanh.pop %v1960
      %v1962 = vmul.f32 %v1957, %v1961
      %v1963 = vpack.c.bf16 %v1962, %v1962
      %v1964 = vtanh.pop %v1962
      %v1965 = vmul.f32 %v1964, %v521
      %1966 = vadd.xlane.f32.xlu0 %v1965
      %v1967 = vpop.xlane.xlu0 %1966
      %v1968 = vadd.f32 %v1967, %v525
      %v1969 = vsel %vm1316, %v1968, -inf
      %v1970 = vrot.slane %v1969, 4
      %v1971 = vmax.f32 %v1969, %v1970
      %v1972 = vrot.slane %v1971, 2
      %v1973 = vmax.f32 %v1971, %v1972
      %v1974 = vrot.slane %v1973, 1
      %v1975 = vmax.f32 %v1973, %v1974
      %v1976 = vsub.f32 %v1968, %v1975
      %v1977 = vmul.f32 %v1976, 1.442695
      %v1978 = vpow.pop %v1977
      %v1979 = vsel %vm1316, %v1978, 0.0
      %v1980 = vrot.slane %v1979, 4
      %v1981 = vadd.f32 %v1979, %v1980
      %v1982 = vrot.slane %v1981, 2
      %v1983 = vadd.f32 %v1981, %v1982
      %v1984 = vrot.slane %v1983, 1
      %v1985 = vadd.f32 %v1983, %v1984
      %v1986 = vrcp.pop %v1985
      %v1987 = vmul.f32 %v1978, %v1986
      %1989 = vset.pattern.permute.xlu0 0
      %1990 = vperm.xlu0 %1989, %v1987
      %v1991 = vpop.permute.xlu0 %1990
      %v1993 = vmul.f32 %v1991, %v1964
      %v1994 = vadd.f32 %v1668, %v1993
      %s1995 = smul.u32 3, 4
      %s1996 = smul.addr %s1995, 8
      %s1997 = scalar_lea.vmem %s402, %s1996
      %v1998 = vld [vmem:[%s1997] sm:$0xff]
      %v1999 = vld [vmem:[%s1997 + $0x8] sm:$0xff]
      %v2000 = vld [vmem:[%s1997 + $0x10] sm:$0xff]
      %v2001 = vld [vmem:[%s1997 + $0x18] sm:$0xff]
      %2002 = vmatpush.bf16.msra.mxu0 %v667
      %2003 = vmatpush.bf16.msra.mxu0 %v663
      %2004 = vmatpush.bf16.msra.mxu0 %v659
      %2005 = vmatpush.bf16.msra.mxu0 %v655
      %2006 = vmatpush.bf16.msra.mxu0 %v651
      %2007 = vmatpush.bf16.msra.mxu0 %v647
      %2008 = vmatpush.bf16.msra.mxu0 %v643
      %2009 = vmatpush.bf16.msra.mxu0 %v639
      %2010 = vmatmul.bf16.gmra.mxu0 %v1795
      %v2011 = vpop.f32.mrf.mxu0
      %v2012 = vadd.f32 0.0, %v2011
      %v2013 = vpop.f32.mrf.mxu0
      %2014 = vdwg.mxu0
      %2015 = vmatpush.bf16.msra.mxu0 %v668
      %2016 = vmatpush.bf16.msra.mxu0 %v664
      %2017 = vmatpush.bf16.msra.mxu0 %v660
      %2018 = vmatpush.bf16.msra.mxu0 %v656
      %2019 = vmatpush.bf16.msra.mxu0 %v652
      %2020 = vmatpush.bf16.msra.mxu0 %v648
      %2021 = vmatpush.bf16.msra.mxu0 %v644
      %2022 = vmatpush.bf16.msra.mxu0 %v640
      %2023 = vmatmul.bf16.gmra.mxu0 %v1795
      %v2024 = vpop.f32.mrf.mxu0
      %v2025 = vadd.f32 0.0, %v2024
      %v2026 = vpop.f32.mrf.mxu0
      %2027 = vdwg.mxu0
      %2028 = vmatpush.bf16.msra.mxu0 %v669
      %2029 = vmatpush.bf16.msra.mxu0 %v665
      %2030 = vmatpush.bf16.msra.mxu0 %v661
      %2031 = vmatpush.bf16.msra.mxu0 %v657
      %2032 = vmatpush.bf16.msra.mxu0 %v653
      %2033 = vmatpush.bf16.msra.mxu0 %v649
      %2034 = vmatpush.bf16.msra.mxu0 %v645
      %2035 = vmatpush.bf16.msra.mxu0 %v641
      %2036 = vmatmul.bf16.gmra.mxu0 %v1795
      %v2037 = vpop.f32.mrf.mxu0
      %v2038 = vadd.f32 0.0, %v2037
      %v2039 = vpop.f32.mrf.mxu0
      %2040 = vdwg.mxu0
      %2041 = vmatpush.bf16.msra.mxu0 %v670
      %2042 = vmatpush.bf16.msra.mxu0 %v666
      %2043 = vmatpush.bf16.msra.mxu0 %v662
      %2044 = vmatpush.bf16.msra.mxu0 %v658
      %2045 = vmatpush.bf16.msra.mxu0 %v654
      %2046 = vmatpush.bf16.msra.mxu0 %v650
      %2047 = vmatpush.bf16.msra.mxu0 %v646
      %2048 = vmatpush.bf16.msra.mxu0 %v642
      %2049 = vmatmul.bf16.gmra.mxu0 %v1795
      %v2050 = vpop.f32.mrf.mxu0
      %v2051 = vadd.f32 0.0, %v2050
      %v2052 = vpop.f32.mrf.mxu0
      %2053 = vdwg.mxu0
      %v2054 = vadd.f32 %v1998, %v2012
      %v2055 = vadd.f32 %v1999, %v2025
      %v2056 = vadd.f32 %v2000, %v2038
      %v2057 = vadd.f32 %v2001, %v2051
      %v2058 = vxor.u32 %v2054, 2147483648
      %v2059 = vmul.f32 %v2058, 1.442695
      %v2060 = vpow.pop %v2059
      %v2061 = vadd.f32 %v2060, 1.0
      %v2062 = vrcp.pop %v2061
      %v2063 = vmul.f32 %v2061, %v2062
      %v2064 = vsub.f32 1.0, %v2063
      %v2065 = vmul.f32 %v2062, %v2064
      %v2066 = vadd.f32 %v2062, %v2065
      %vm2067 = vweird.f32 %v2061
      %vm2068 = vweird.f32 %v2062
      %vm2069 = vmor %vm2067, %vm2068
      %v2070 = vsel %vm2069, %v2062, %v2066
      %v2071 = vand.u32 2147483647, %v2061
      %vm2072 = vcmp.eq.f32.partialorder %v2071, 8.507059e+37
      %v2073 = vand.u32 %v2061, 2147483648
      %v2074 = vor.u32 1.1754944e-38, %v2073
      %v2075 = vsel %vm2072, %v2074, %v2070
      %v2076 = vmul.f32 1.0, %v2075
      %v2077 = vxor.u32 %v2055, 2147483648
      %v2078 = vmul.f32 %v2077, 1.442695
      %v2079 = vpow.pop %v2078
      %v2080 = vadd.f32 %v2079, 1.0
      %v2081 = vrcp.pop %v2080
      %v2082 = vmul.f32 %v2080, %v2081
      %v2083 = vsub.f32 1.0, %v2082
      %v2084 = vmul.f32 %v2081, %v2083
      %v2085 = vadd.f32 %v2081, %v2084
      %vm2086 = vweird.f32 %v2080
      %vm2087 = vweird.f32 %v2081
      %vm2088 = vmor %vm2086, %vm2087
      %v2089 = vsel %vm2088, %v2081, %v2085
      %v2090 = vand.u32 2147483647, %v2080
      %vm2091 = vcmp.eq.f32.partialorder %v2090, 8.507059e+37
      %v2092 = vand.u32 %v2080, 2147483648
      %v2093 = vor.u32 1.1754944e-38, %v2092
      %v2094 = vsel %vm2091, %v2093, %v2089
      %v2095 = vmul.f32 1.0, %v2094
      %v2096 = vtanh.pop %v2056
      %v2097 = vxor.u32 %v2057, 2147483648
      %v2098 = vmul.f32 %v2097, 1.442695
      %v2099 = vpow.pop %v2098
      %v2100 = vadd.f32 %v2099, 1.0
      %v2101 = vrcp.pop %v2100
      %v2102 = vmul.f32 %v2100, %v2101
      %v2103 = vsub.f32 1.0, %v2102
      %v2104 = vmul.f32 %v2101, %v2103
      %v2105 = vadd.f32 %v2101, %v2104
      %vm2106 = vweird.f32 %v2100
      %vm2107 = vweird.f32 %v2101
      %vm2108 = vmor %vm2106, %vm2107
      %v2109 = vsel %vm2108, %v2101, %v2105
      %v2110 = vand.u32 2147483647, %v2100
      %vm2111 = vcmp.eq.f32.partialorder %v2110, 8.507059e+37
      %v2112 = vand.u32 %v2100, 2147483648
      %v2113 = vor.u32 1.1754944e-38, %v2112
      %v2114 = vsel %vm2111, %v2113, %v2109
      %v2115 = vmul.f32 1.0, %v2114
      %v2116 = vmul.f32 %v2095, %v1792
      %v2117 = vmul.f32 %v2076, %v2096
      %v2118 = vadd.f32 %v2116, %v2117
      %v2119 = vtanh.pop %v2118
      %v2120 = vmul.f32 %v2115, %v2119
      %v2121 = vpack.c.bf16 %v2120, %v2120
      %2122 = vmatpush.bf16.msra.mxu0 %v1043
      %2123 = vmatpush.bf16.msra.mxu0 %v1039
      %2124 = vmatpush.bf16.msra.mxu0 %v1035
      %2125 = vmatpush.bf16.msra.mxu0 %v1031
      %2126 = vmatpush.bf16.msra.mxu0 %v1027
      %2127 = vmatpush.bf16.msra.mxu0 %v1023
      %2128 = vmatpush.bf16.msra.mxu0 %v1019
      %2129 = vmatpush.bf16.msra.mxu0 %v1015
      %2130 = vmatmul.bf16.gmra.mxu0 %v2121
      %v2131 = vpop.f32.mrf.mxu0
      %v2132 = vadd.f32 %v511, %v2131
      %v2133 = vpop.f32.mrf.mxu0
      %2134 = vdwg.mxu0
      %2135 = vmatpush.bf16.msra.mxu0 %v1075
      %2136 = vmatpush.bf16.msra.mxu0 %v1071
      %2137 = vmatpush.bf16.msra.mxu0 %v1067
      %2138 = vmatpush.bf16.msra.mxu0 %v1063
      %2139 = vmatpush.bf16.msra.mxu0 %v1059
      %2140 = vmatpush.bf16.msra.mxu0 %v1055
      %2141 = vmatpush.bf16.msra.mxu0 %v1051
      %2142 = vmatpush.bf16.msra.mxu0 %v1047
      %2143 = vmatmul.bf16.gmra.mxu0 %v1963
      %v2144 = vpop.f32.mrf.mxu0
      %v2145 = vadd.f32 %v2132, %v2144
      %v2146 = vpop.f32.mrf.mxu0
      %2147 = vdwg.mxu0
      %2148 = vmatpush.bf16.msra.mxu0 %v1044
      %2149 = vmatpush.bf16.msra.mxu0 %v1040
      %2150 = vmatpush.bf16.msra.mxu0 %v1036
      %2151 = vmatpush.bf16.msra.mxu0 %v1032
      %2152 = vmatpush.bf16.msra.mxu0 %v1028
      %2153 = vmatpush.bf16.msra.mxu0 %v1024
      %2154 = vmatpush.bf16.msra.mxu0 %v1020
      %2155 = vmatpush.bf16.msra.mxu0 %v1016
      %2156 = vmatmul.bf16.gmra.mxu0 %v2121
      %v2157 = vpop.f32.mrf.mxu0
      %v2158 = vadd.f32 %v512, %v2157
      %v2159 = vpop.f32.mrf.mxu0
      %2160 = vdwg.mxu0
      %2161 = vmatpush.bf16.msra.mxu0 %v1076
      %2162 = vmatpush.bf16.msra.mxu0 %v1072
      %2163 = vmatpush.bf16.msra.mxu0 %v1068
      %2164 = vmatpush.bf16.msra.mxu0 %v1064
      %2165 = vmatpush.bf16.msra.mxu0 %v1060
      %2166 = vmatpush.bf16.msra.mxu0 %v1056
      %2167 = vmatpush.bf16.msra.mxu0 %v1052
      %2168 = vmatpush.bf16.msra.mxu0 %v1048
      %2169 = vmatmul.bf16.gmra.mxu0 %v1963
      %v2170 = vpop.f32.mrf.mxu0
      %v2171 = vadd.f32 %v2158, %v2170
      %v2172 = vpop.f32.mrf.mxu0
      %2173 = vdwg.mxu0
      %2174 = vmatpush.bf16.msra.mxu0 %v1045
      %2175 = vmatpush.bf16.msra.mxu0 %v1041
      %2176 = vmatpush.bf16.msra.mxu0 %v1037
      %2177 = vmatpush.bf16.msra.mxu0 %v1033
      %2178 = vmatpush.bf16.msra.mxu0 %v1029
      %2179 = vmatpush.bf16.msra.mxu0 %v1025
      %2180 = vmatpush.bf16.msra.mxu0 %v1021
      %2181 = vmatpush.bf16.msra.mxu0 %v1017
      %2182 = vmatmul.bf16.gmra.mxu0 %v2121
      %v2183 = vpop.f32.mrf.mxu0
      %v2184 = vadd.f32 %v513, %v2183
      %v2185 = vpop.f32.mrf.mxu0
      %2186 = vdwg.mxu0
      %2187 = vmatpush.bf16.msra.mxu0 %v1077
      %2188 = vmatpush.bf16.msra.mxu0 %v1073
      %2189 = vmatpush.bf16.msra.mxu0 %v1069
      %2190 = vmatpush.bf16.msra.mxu0 %v1065
      %2191 = vmatpush.bf16.msra.mxu0 %v1061
      %2192 = vmatpush.bf16.msra.mxu0 %v1057
      %2193 = vmatpush.bf16.msra.mxu0 %v1053
      %2194 = vmatpush.bf16.msra.mxu0 %v1049
      %2195 = vmatmul.bf16.gmra.mxu0 %v1963
      %v2196 = vpop.f32.mrf.mxu0
      %v2197 = vadd.f32 %v2184, %v2196
      %v2198 = vpop.f32.mrf.mxu0
      %2199 = vdwg.mxu0
      %2200 = vmatpush.bf16.msra.mxu0 %v1046
      %2201 = vmatpush.bf16.msra.mxu0 %v1042
      %2202 = vmatpush.bf16.msra.mxu0 %v1038
      %2203 = vmatpush.bf16.msra.mxu0 %v1034
      %2204 = vmatpush.bf16.msra.mxu0 %v1030
      %2205 = vmatpush.bf16.msra.mxu0 %v1026
      %2206 = vmatpush.bf16.msra.mxu0 %v1022
      %2207 = vmatpush.bf16.msra.mxu0 %v1018
      %2208 = vmatmul.bf16.gmra.mxu0 %v2121
      %v2209 = vpop.f32.mrf.mxu0
      %v2210 = vadd.f32 %v514, %v2209
      %v2211 = vpop.f32.mrf.mxu0
      %2212 = vdwg.mxu0
      %2213 = vmatpush.bf16.msra.mxu0 %v1078
      %2214 = vmatpush.bf16.msra.mxu0 %v1074
      %2215 = vmatpush.bf16.msra.mxu0 %v1070
      %2216 = vmatpush.bf16.msra.mxu0 %v1066
      %2217 = vmatpush.bf16.msra.mxu0 %v1062
      %2218 = vmatpush.bf16.msra.mxu0 %v1058
      %2219 = vmatpush.bf16.msra.mxu0 %v1054
      %2220 = vmatpush.bf16.msra.mxu0 %v1050
      %2221 = vmatmul.bf16.gmra.mxu0 %v1963
      %v2222 = vpop.f32.mrf.mxu0
      %v2223 = vadd.f32 %v2210, %v2222
      %v2224 = vpop.f32.mrf.mxu0
      %2225 = vdwg.mxu0
      %v2226 = vxor.u32 %v2145, 2147483648
      %v2227 = vmul.f32 %v2226, 1.442695
      %v2228 = vpow.pop %v2227
      %v2229 = vadd.f32 %v2228, 1.0
      %v2230 = vrcp.pop %v2229
      %v2231 = vmul.f32 %v2229, %v2230
      %v2232 = vsub.f32 1.0, %v2231
      %v2233 = vmul.f32 %v2230, %v2232
      %v2234 = vadd.f32 %v2230, %v2233
      %vm2235 = vweird.f32 %v2229
      %vm2236 = vweird.f32 %v2230
      %vm2237 = vmor %vm2235, %vm2236
      %v2238 = vsel %vm2237, %v2230, %v2234
      %v2239 = vand.u32 2147483647, %v2229
      %vm2240 = vcmp.eq.f32.partialorder %v2239, 8.507059e+37
      %v2241 = vand.u32 %v2229, 2147483648
      %v2242 = vor.u32 1.1754944e-38, %v2241
      %v2243 = vsel %vm2240, %v2242, %v2238
      %v2244 = vmul.f32 1.0, %v2243
      %v2245 = vxor.u32 %v2171, 2147483648
      %v2246 = vmul.f32 %v2245, 1.442695
      %v2247 = vpow.pop %v2246
      %v2248 = vadd.f32 %v2247, 1.0
      %v2249 = vrcp.pop %v2248
      %v2250 = vmul.f32 %v2248, %v2249
      %v2251 = vsub.f32 1.0, %v2250
      %v2252 = vmul.f32 %v2249, %v2251
      %v2253 = vadd.f32 %v2249, %v2252
      %vm2254 = vweird.f32 %v2248
      %vm2255 = vweird.f32 %v2249
      %vm2256 = vmor %vm2254, %vm2255
      %v2257 = vsel %vm2256, %v2249, %v2253
      %v2258 = vand.u32 2147483647, %v2248
      %vm2259 = vcmp.eq.f32.partialorder %v2258, 8.507059e+37
      %v2260 = vand.u32 %v2248, 2147483648
      %v2261 = vor.u32 1.1754944e-38, %v2260
      %v2262 = vsel %vm2259, %v2261, %v2257
      %v2263 = vmul.f32 1.0, %v2262
      %v2264 = vtanh.pop %v2197
      %v2265 = vxor.u32 %v2223, 2147483648
      %v2266 = vmul.f32 %v2265, 1.442695
      %v2267 = vpow.pop %v2266
      %v2268 = vadd.f32 %v2267, 1.0
      %v2269 = vrcp.pop %v2268
      %v2270 = vmul.f32 %v2268, %v2269
      %v2271 = vsub.f32 1.0, %v2270
      %v2272 = vmul.f32 %v2269, %v2271
      %v2273 = vadd.f32 %v2269, %v2272
      %vm2274 = vweird.f32 %v2268
      %vm2275 = vweird.f32 %v2269
      %vm2276 = vmor %vm2274, %vm2275
      %v2277 = vsel %vm2276, %v2269, %v2273
      %v2278 = vand.u32 2147483647, %v2268
      %vm2279 = vcmp.eq.f32.partialorder %v2278, 8.507059e+37
      %v2280 = vand.u32 %v2268, 2147483648
      %v2281 = vor.u32 1.1754944e-38, %v2280
      %v2282 = vsel %vm2279, %v2281, %v2277
      %v2283 = vmul.f32 1.0, %v2282
      %v2284 = vmul.f32 %v2263, %v1960
      %v2285 = vmul.f32 %v2244, %v2264
      %v2286 = vadd.f32 %v2284, %v2285
      %v2287 = vtanh.pop %v2286
      %v2288 = vmul.f32 %v2283, %v2287
      %v2289 = vpack.c.bf16 %v2288, %v2288
      %v2290 = vtanh.pop %v2288
      %v2291 = vmul.f32 %v2290, %v521
      %2292 = vadd.xlane.f32.xlu0 %v2291
      %v2293 = vpop.xlane.xlu0 %2292
      %v2294 = vadd.f32 %v2293, %v525
      %v2295 = vsel %vm1316, %v2294, -inf
      %v2296 = vrot.slane %v2295, 4
      %v2297 = vmax.f32 %v2295, %v2296
      %v2298 = vrot.slane %v2297, 2
      %v2299 = vmax.f32 %v2297, %v2298
      %v2300 = vrot.slane %v2299, 1
      %v2301 = vmax.f32 %v2299, %v2300
      %v2302 = vsub.f32 %v2294, %v2301
      %v2303 = vmul.f32 %v2302, 1.442695
      %v2304 = vpow.pop %v2303
      %v2305 = vsel %vm1316, %v2304, 0.0
      %v2306 = vrot.slane %v2305, 4
      %v2307 = vadd.f32 %v2305, %v2306
      %v2308 = vrot.slane %v2307, 2
      %v2309 = vadd.f32 %v2307, %v2308
      %v2310 = vrot.slane %v2309, 1
      %v2311 = vadd.f32 %v2309, %v2310
      %v2312 = vrcp.pop %v2311
      %v2313 = vmul.f32 %v2304, %v2312
      %2315 = vset.pattern.permute.xlu0 0
      %2316 = vperm.xlu0 %2315, %v2313
      %v2317 = vpop.permute.xlu0 %2316
      %v2319 = vmul.f32 %v2317, %v2290
      %v2320 = vadd.f32 %v1994, %v2319
      %v2321 = vunpack.c.l.bf16 %v2121
      %2322 = vst [vmem:[#allocation2] sm:$0xff] %v2321
      %2323 = vst [vmem:[%s528] sm:$0xff] %v2118
      %v2324 = vunpack.c.l.bf16 %v2289
      %2325 = vst [vmem:[%s530] sm:$0xff] %v2324
      %2326 = vst [vmem:[%s533] sm:$0xff] %v2286
      %2327 = vst [vmem:[#allocation3] sm:$0xff] %v2320
      %p2328 = scmp.eq.s32.totalorder %s23, 1
      // Predicated region
      $region73: #{lstm_attention_forward.1} parent=67 // pred_check
        %p2329 = pneg %p2328
      $region74: #{lstm_attention_forward.1} parent=67 // pred_check_branch
        %2331 = sbr.rel (%p2329) target = $region76
      $region75: #{lstm_attention_forward.1} parent=67 // pred_region
        %v2332 = vld [vmem:[#allocation3] sm:$0xff]
        %v2333 = vpack.c.bf16 %v2332, %v2332
        %v2334 = vld [vmem:[%s6] sm:$0xf]
        %v2335 = vld [vmem:[%s6 + $0x4] sm:$0xf]
        %v2336 = vld [vmem:[%s6 + $0x8] sm:$0xf]
        %v2337 = vld [vmem:[%s6 + $0xc] sm:$0xf]
        %v2338 = vld [vmem:[%s6 + $0x10] sm:$0xf]
        %v2339 = vld [vmem:[%s6 + $0x14] sm:$0xf]
        %v2340 = vld [vmem:[%s6 + $0x18] sm:$0xf]
        %v2341 = vld [vmem:[%s6 + $0x1c] sm:$0xf]
        %v2342 = vld [vmem:[%s6 + $0x20] sm:$0xf]
        %v2343 = vld [vmem:[%s6 + $0x24] sm:$0xf]
        %v2344 = vld [vmem:[%s6 + $0x28] sm:$0xf]
        %v2345 = vld [vmem:[%s6 + $0x2c] sm:$0xf]
        %v2346 = vld [vmem:[%s6 + $0x30] sm:$0xf]
        %v2347 = vld [vmem:[%s6 + $0x34] sm:$0xf]
        %v2348 = vld [vmem:[%s6 + $0x38] sm:$0xf]
        %v2349 = vld [vmem:[%s6 + $0x3c] sm:$0xf]
        %v2350 = vld [vmem:[%s7] sm:$0x1]
        %v2352 = vperm.slane %v2350, 0
        %v2370 = vunpack.c.l.b16 %v2334
        %v2371 = vunpack.c.l.b16 %v2335
        %v2372 = vunpack.c.l.b16 %v2336
        %v2373 = vunpack.c.l.b16 %v2337
        %v2374 = vunpack.c.l.b16 %v2338
        %v2375 = vunpack.c.l.b16 %v2339
        %v2376 = vunpack.c.l.b16 %v2340
        %v2377 = vunpack.c.l.b16 %v2341
        %v2378 = vunpack.c.l.b16 %v2342
        %v2379 = vunpack.c.l.b16 %v2343
        %v2380 = vunpack.c.l.b16 %v2344
        %v2381 = vunpack.c.l.b16 %v2345
        %v2382 = vunpack.c.l.b16 %v2346
        %v2383 = vunpack.c.l.b16 %v2347
        %v2384 = vunpack.c.l.b16 %v2348
        %v2385 = vunpack.c.l.b16 %v2349
        %v2386 = vpack.c.b16 %v2371, %v2370
        %v2387 = vpack.c.b16 %v2373, %v2372
        %v2388 = vpack.c.b16 %v2375, %v2374
        %v2389 = vpack.c.b16 %v2377, %v2376
        %v2390 = vpack.c.b16 %v2379, %v2378
        %v2391 = vpack.c.b16 %v2381, %v2380
        %v2392 = vpack.c.b16 %v2383, %v2382
        %v2393 = vpack.c.b16 %v2385, %v2384
        %2402 = vmatpush.bf16.msra.mxu0 %v2393
        %2403 = vmatpush.bf16.msra.mxu0 %v2392
        %2404 = vmatpush.bf16.msra.mxu0 %v2391
        %2405 = vmatpush.bf16.msra.mxu0 %v2390
        %2406 = vmatpush.bf16.msra.mxu0 %v2389
        %2407 = vmatpush.bf16.msra.mxu0 %v2388
        %2408 = vmatpush.bf16.msra.mxu0 %v2387
        %2409 = vmatpush.bf16.msra.mxu0 %v2386
        %2410 = vmatmul.bf16.gmra.mxu0 %v2333
        %v2411 = vpop.f32.mrf.mxu0
        %v2412 = vadd.f32 %v2352, %v2411
        %v2413 = vpop.f32.mrf.mxu0
        %2414 = vdwg.mxu0
        %v2415 = vld [vmem:[%s8] sm:$0x1]
        %v2417 = vperm.slane %v2415, 0
        %v2419 = vmul.f32 %v2412, %v2417
        %v2420 = vld [vmem:[%s9] sm:$0x1]
        %v2422 = vperm.slane %v2420, 0
        %v2424 = vadd.f32 %v2419, %v2422
        %v2425 = vmax.f32 %v2424, 0.0
        %v2426 = vpack.c.bf16 %v2425, %v2425
        %v2427 = vld [vmem:[%s10] sm:$0xf]
        %v2428 = vld [vmem:[%s10 + $0x4] sm:$0xf]
        %v2429 = vld [vmem:[%s10 + $0x8] sm:$0xf]
        %v2430 = vld [vmem:[%s10 + $0xc] sm:$0xf]
        %v2431 = vld [vmem:[%s10 + $0x10] sm:$0xf]
        %v2432 = vld [vmem:[%s10 + $0x14] sm:$0xf]
        %v2433 = vld [vmem:[%s10 + $0x18] sm:$0xf]
        %v2434 = vld [vmem:[%s10 + $0x1c] sm:$0xf]
        %v2435 = vld [vmem:[%s10 + $0x20] sm:$0xf]
        %v2436 = vld [vmem:[%s10 + $0x24] sm:$0xf]
        %v2437 = vld [vmem:[%s10 + $0x28] sm:$0xf]
        %v2438 = vld [vmem:[%s10 + $0x2c] sm:$0xf]
        %v2439 = vld [vmem:[%s10 + $0x30] sm:$0xf]
        %v2440 = vld [vmem:[%s10 + $0x34] sm:$0xf]
        %v2441 = vld [vmem:[%s10 + $0x38] sm:$0xf]
        %v2442 = vld [vmem:[%s10 + $0x3c] sm:$0xf]
        %v2443 = vld [vmem:[%s11] sm:$0x1]
        %v2445 = vperm.slane %v2443, 0
        %v2463 = vunpack.c.l.b16 %v2427
        %v2464 = vunpack.c.l.b16 %v2428
        %v2465 = vunpack.c.l.b16 %v2429
        %v2466 = vunpack.c.l.b16 %v2430
        %v2467 = vunpack.c.l.b16 %v2431
        %v2468 = vunpack.c.l.b16 %v2432
        %v2469 = vunpack.c.l.b16 %v2433
        %v2470 = vunpack.c.l.b16 %v2434
        %v2471 = vunpack.c.l.b16 %v2435
        %v2472 = vunpack.c.l.b16 %v2436
        %v2473 = vunpack.c.l.b16 %v2437
        %v2474 = vunpack.c.l.b16 %v2438
        %v2475 = vunpack.c.l.b16 %v2439
        %v2476 = vunpack.c.l.b16 %v2440
        %v2477 = vunpack.c.l.b16 %v2441
        %v2478 = vunpack.c.l.b16 %v2442
        %v2479 = vpack.c.b16 %v2464, %v2463
        %v2480 = vpack.c.b16 %v2466, %v2465
        %v2481 = vpack.c.b16 %v2468, %v2467
        %v2482 = vpack.c.b16 %v2470, %v2469
        %v2483 = vpack.c.b16 %v2472, %v2471
        %v2484 = vpack.c.b16 %v2474, %v2473
        %v2485 = vpack.c.b16 %v2476, %v2475
        %v2486 = vpack.c.b16 %v2478, %v2477
        %2495 = vmatpush.bf16.msra.mxu0 %v2486
        %2496 = vmatpush.bf16.msra.mxu0 %v2485
        %2497 = vmatpush.bf16.msra.mxu0 %v2484
        %2498 = vmatpush.bf16.msra.mxu0 %v2483
        %2499 = vmatpush.bf16.msra.mxu0 %v2482
        %2500 = vmatpush.bf16.msra.mxu0 %v2481
        %2501 = vmatpush.bf16.msra.mxu0 %v2480
        %2502 = vmatpush.bf16.msra.mxu0 %v2479
        %2503 = vmatmul.bf16.gmra.mxu0 %v2426
        %v2504 = vpop.f32.mrf.mxu0
        %v2505 = vadd.f32 %v2445, %v2504
        %v2506 = vpop.f32.mrf.mxu0
        %2507 = vdwg.mxu0
        %2508 = vst [vmem:[%s12] sm:$0xff] %v2505
      $region76: #{lstm_attention_forward.1} parent=67 // pred_fallthru
        _
      // Predicated region
      $region77: #{lstm_attention_forward.1} parent=67 // pred_check
        %p2509 = pneg %p293
      $region78: #{lstm_attention_forward.1} parent=67 // pred_check_branch
        %2511 = sbr.rel (%p2509) target = $region80
      $region79: #{lstm_attention_forward.1} parent=67 // pred_region
        _
      $region80: #{lstm_attention_forward.1} parent=67 // pred_fallthru
        _
      // Predicated region
      $region81: #{lstm_attention_forward.1} parent=67 // pred_check
        %p2512 = pneg %p293
      $region82: #{lstm_attention_forward.1} parent=67 // pred_check_branch
        %2514 = sbr.rel (%p2512) target = $region84
      $region83: #{lstm_attention_forward.1} parent=67 // pred_region
        _
      $region84: #{lstm_attention_forward.1} parent=67 // pred_fallthru
        _
    $region68: #{lstm_attention_forward.1} parent=5 // pred_fallthru
      _
    %p2515 = scmp.le.s32.totalorder 2, %s18
    // Predicated region
    $region85: #{lstm_attention_forward.1} parent=5 // pred_check
      %p2516 = pneg %p2515
    $region86: #{lstm_attention_forward.1} parent=5 // pred_check_branch
      %2518 = sbr.rel (%p2516) target = $region88
    $region87: #{lstm_attention_forward.1} parent=5 // pred_region
      %s2519 = ssub.s32 %s18, 2
    $region88: #{lstm_attention_forward.1} parent=5 // pred_fallthru
      _
  $region6: #{lstm_attention_forward.1} parent=0 // loop_footer
    %s22 = sadd.s32 1, %s18
  $region7: #{lstm_attention_forward.1} parent=0 // loop_footer_branch
    %17 = sbr.rel target = $region3
  $region8: #{lstm_attention_forward.1} parent=0 // loop_exit
    _

</llo_original>
